<compile_context>
chip_gen: v5e
topology: v5e:2x2
jax: 0.10.0
libtpu: 0.0.40
codegen_flags: <defaults>
</compile_context>

<pallas_src>
import functools
import math

import jax
import jax.numpy as jnp
from jax.experimental import pallas as pl
from jax.experimental.pallas import tpu as pltpu


def _round_up(x, m):
    return (x + m - 1) // m * m


# ----------------------------------------------------------------------------
# Kernel 1: RoI max pooling (channels-last, windowed two-pass reduction)
# ----------------------------------------------------------------------------
def _roi_pool_kernel(bidx_ref, hs_ref, he_ref, ws_ref, we_ref,
                     x_ref, out_ref, pool_scratch, *, S, BH):
    """Pools one RoI per grid step.

    x_ref        : (H, W, C) feature map of this RoI's image (batch dim squeezed,
                   selected by the scalar-prefetched batch index in the index_map).
    out_ref      : (SS_pad, C) pooled values, bin index = ph * S + pw; pad bins zero.
    pool_scratch : (SS_pad, C) f32 VMEM accumulator -> single bulk store at the end.
    """
    r = pl.program_id(0)
    H, W, C = x_ref.shape
    SS = S * S
    SS_pad = out_ref.shape[0]
    base = r * S

    win_rows = jax.lax.broadcasted_iota(jnp.int32, (BH, 1, 1), 0)
    col_ids = jax.lax.broadcasted_iota(jnp.int32, (W, 1), 0)

    for ph in range(S):
        hs = hs_ref[base + ph]
        he = he_ref[base + ph]
        # Static-size dynamic window over H (bins never span more than BH rows
        # for in-image RoIs); only the window rows are masked/reduced.
        h0 = jnp.clip(hs, 0, H - BH)
        win = x_ref[pl.ds(h0, BH), :, :].astype(jnp.float32)       # (BH, W, C)
        hmask = ((win_rows + h0) >= hs) & ((win_rows + h0) < he)   # (BH, 1, 1)
        strip = jnp.max(jnp.where(hmask, win, -jnp.inf), axis=0)   # (W, C)
        h_empty = he <= hs
        for pw in range(S):
            ws = ws_ref[base + pw]
            we = we_ref[base + pw]
            wmask = (col_ids >= ws) & (col_ids < we)               # (W, 1)
            m = jnp.max(jnp.where(wmask, strip, -jnp.inf),
                        axis=0, keepdims=True)                     # (1, C)
            empty = jnp.logical_or(h_empty, we <= ws)
            m = jnp.where(empty, jnp.zeros_like(m), m)
            pool_scratch[pl.ds(ph * S + pw, 1), :] = m

    if SS_pad > SS:   # zero the sublane-padding bins every step (scratch persists)
        pool_scratch[pl.ds(SS, SS_pad - SS), :] = jnp.zeros(
            (SS_pad - SS, C), jnp.float32)
    out_ref[...] = pool_scratch[...].astype(out_ref.dtype)


def roi_max_pool(x_nhwc, batch_idx, hstart, hend, wstart, wend, S, SS_pad, BH):
    """x_nhwc: (N, H, W, C). Bin arrays are flat (R*S,) int32.

    Returns (R, SS_pad, C) bf16 pooled values (pad bins are zero)."""
    N, H, W, C = x_nhwc.shape
    R = batch_idx.shape[0]
    grid_spec = pltpu.PrefetchScalarGridSpec(
        num_scalar_prefetch=5,
        grid=(R,),
        in_specs=[
            pl.BlockSpec((None, H, W, C),
                         lambda r, bidx, hs, he, ws, we: (bidx[r], 0, 0, 0)),
        ],
        out_specs=pl.BlockSpec((None, SS_pad, C),
                               lambda r, bidx, hs, he, ws, we: (r, 0, 0)),
        scratch_shapes=[pltpu.VMEM((SS_pad, C), jnp.float32)],
    )
    return pl.pallas_call(
        functools.partial(_roi_pool_kernel, S=S, BH=BH),
        grid_spec=grid_spec,
        out_shape=jax.ShapeDtypeStruct((R, SS_pad, C), jnp.bfloat16),
        compiler_params=pltpu.CompilerParams(dimension_semantics=("parallel",)),
    )(batch_idx, hstart, hend, wstart, wend, x_nhwc)


# ----------------------------------------------------------------------------
# Kernel 2: K-tiled linear (+bias, optional relu).  The activation block is
#           full-K and stays VMEM-resident across the (j, k) sweep; only the
#           bf16 weight tiles stream from HBM.
# ----------------------------------------------------------------------------
def _linear_kernel(x_ref, w_ref, b_ref, o_ref, acc_ref, *, tk, apply_relu):
    k = pl.program_id(2)

    @pl.when(k == 0)
    def _():
        acc_ref[...] = jnp.zeros_like(acc_ref)

    start = pl.multiple_of(k * tk, tk)
    xk = x_ref[:, pl.ds(start, tk)]                    # bf16, tile-aligned slice
    acc_ref[...] += jnp.dot(xk, w_ref[...], preferred_element_type=jnp.float32)

    @pl.when(k == pl.num_programs(2) - 1)
    def _():
        out = acc_ref[...] + b_ref[...]
        if apply_relu:
            out = jnp.maximum(out, 0.0)
        o_ref[...] = out.astype(o_ref.dtype)


def make_linear_layer(w, b, *, relu, out_dtype, tn=512, tk=1024):
    """Pre-pads weight/bias ONCE (construction time) to the tile grid."""
    K, N = w.shape
    tn = min(tn, _round_up(N, 128))
    tk = min(tk, _round_up(K, 128))
    Kp, Np = _round_up(K, tk), _round_up(N, tn)
    wp = jnp.pad(w.astype(jnp.bfloat16), ((0, Kp - K), (0, Np - N)))
    bp = jnp.pad(b.astype(jnp.float32).reshape(1, -1), ((0, 0), (0, Np - N)))
    return dict(w=wp, b=bp, K=K, N=N, Kp=Kp, Np=Np, tn=tn, tk=tk,
                relu=relu, out_dtype=out_dtype)


def apply_linear(x, layer):
    """y = x @ w + b (optionally relu).  x: (M, K) bf16; weights pre-padded."""
    M, K = x.shape
    assert K == layer["K"], (K, layer["K"])
    Kp, Np, tn, tk = layer["Kp"], layer["Np"], layer["tn"], layer["tk"]
    tm = min(128, _round_up(M, 8))
    Mp = _round_up(M, tm)
    xp = jnp.pad(x, ((0, Mp - M), (0, Kp - K)))

    out = pl.pallas_call(
        functools.partial(_linear_kernel, tk=tk, apply_relu=layer["relu"]),
        grid_spec=pltpu.PrefetchScalarGridSpec(
            num_scalar_prefetch=0,
            grid=(Mp // tm, Np // tn, Kp // tk),
            in_specs=[pl.BlockSpec((tm, Kp), lambda i, j, k: (i, 0)),
                      pl.BlockSpec((tk, tn), lambda i, j, k: (k, j)),
                      pl.BlockSpec((1, tn), lambda i, j, k: (0, j))],
            out_specs=pl.BlockSpec((tm, tn), lambda i, j, k: (i, j)),
            scratch_shapes=[pltpu.VMEM((tm, tn), jnp.float32)]),
        out_shape=jax.ShapeDtypeStruct((Mp, Np), layer["out_dtype"]),
        compiler_params=pltpu.CompilerParams(
            dimension_semantics=("parallel", "parallel", "arbitrary"),
            vmem_limit_bytes=48 * 1024 * 1024),
    )(xp, layer["w"], layer["b"])
    return out[:M, :layer["N"]]


# ----------------------------------------------------------------------------
# Glue: RoI bin boundaries (scalar index math, stays in plain JAX)
# ----------------------------------------------------------------------------
def _roi_bins(rois, spatial_scale, S, H, W):
    """Standard RoIPooling2D bin boundaries.  RoI corners are clamped to the
    feature-map extent (Faster R-CNN proposals are always in-image), which
    also bounds every bin to at most ceil((H+1)/S)+1 rows / cols."""
    ymin, xmin, ymax, xmax = rois[:, 0], rois[:, 1], rois[:, 2], rois[:, 3]
    sh = jnp.clip(jnp.round(ymin * spatial_scale).astype(jnp.int32), 0, H)
    sw = jnp.clip(jnp.round(xmin * spatial_scale).astype(jnp.int32), 0, W)
    eh = jnp.clip(jnp.round(ymax * spatial_scale).astype(jnp.int32), 0, H)
    ew = jnp.clip(jnp.round(xmax * spatial_scale).astype(jnp.int32), 0, W)
    roi_h = jnp.maximum(eh - sh + 1, 1).astype(jnp.float32)
    roi_w = jnp.maximum(ew - sw + 1, 1).astype(jnp.float32)
    bin_h = roi_h / float(S)
    bin_w = roi_w / float(S)
    p = jnp.arange(S, dtype=jnp.float32)
    hstart = jnp.clip(jnp.floor(p[None] * bin_h[:, None]).astype(jnp.int32)
                      + sh[:, None], 0, H)
    hend = jnp.clip(jnp.ceil((p[None] + 1.0) * bin_h[:, None]).astype(jnp.int32)
                    + sh[:, None], 0, H)
    wstart = jnp.clip(jnp.floor(p[None] * bin_w[:, None]).astype(jnp.int32)
                      + sw[:, None], 0, W)
    wend = jnp.clip(jnp.ceil((p[None] + 1.0) * bin_w[:, None]).astype(jnp.int32)
                    + sw[:, None], 0, W)
    return hstart, hend, wstart, wend


def _window_bound(dim, S):
    """Static upper bound on a bin's extent along a feature axis of size dim."""
    return max(1, min(dim, math.ceil((dim + 1) / S) + 1))


# ----------------------------------------------------------------------------
# Module
# ----------------------------------------------------------------------------
class VGG16RoIHeadPallas:
    def __init__(self, n_class, roi_size, spatial_scale, in_channels, fc_dim, key):
        self.n_class = n_class
        self.roi_size = roi_size
        self.spatial_scale = spatial_scale
        S = roi_size
        SS = S * S
        self.ss_pad = _round_up(SS, 8)
        in_dim = in_channels * SS

        k1, k2, k3, k4 = jax.random.split(key, 4)
        # classifier: two Linear layers ported from VGG16 (synthetic init here).
        # PyTorch Linear weight is (out, in) -> stored transposed as (in, out).
        w1 = 0.01 * jax.random.normal(k1, (fc_dim, in_dim), jnp.float32)
        w2 = 0.01 * jax.random.normal(k2, (fc_dim, fc_dim), jnp.float32)
        # normal_init(self.cls_loc, 0, 0.001); normal_init(self.score, 0, 0.01)
        wl = 0.001 * jax.random.normal(k3, (n_class * 4, fc_dim), jnp.float32)
        ws = 0.01 * jax.random.normal(k4, (n_class, fc_dim), jnp.float32)

        # Canonical (PyTorch-ordered) parameters, weights stored bf16 (used by
        # the pure-JAX reference and as the source of truth).
        self.params = {
            "w1": w1.T.astype(jnp.bfloat16), "b1": jnp.zeros((fc_dim,), jnp.float32),
            "w2": w2.T.astype(jnp.bfloat16), "b2": jnp.zeros((fc_dim,), jnp.float32),
            "wl": wl.T.astype(jnp.bfloat16), "bl": jnp.zeros((n_class * 4,), jnp.float32),
            "ws": ws.T.astype(jnp.bfloat16), "bs": jnp.zeros((n_class,), jnp.float32),
        }

        # Kernel-side layouts, all built ONCE here:
        #  * w1 rows permuted from C-major (c*S*S + bin) to bin-major (bin*C + c)
        #    to match the lane-dense (R, SS_pad, C) pooled layout, with zero rows
        #    for the sublane-padding bins.
        #  * cls_loc and score fused into one (fc_dim, 5*n_class) projection.
        #  * everything pre-padded to the matmul tile grid.
        w1_perm = (self.params["w1"]
                   .reshape(in_channels, SS, fc_dim)
                   .transpose(1, 0, 2))                         # (SS, C, fc_dim)
        w1_perm = jnp.pad(w1_perm, ((0, self.ss_pad - SS), (0, 0), (0, 0)))
        w1_perm = w1_perm.reshape(self.ss_pad * in_channels, fc_dim)
        w_out = jnp.concatenate([self.params["wl"], self.params["ws"]], axis=1)
        b_out = jnp.concatenate([self.params["bl"], self.params["bs"]], axis=0)

        self.fc1 = make_linear_layer(w1_perm, self.params["b1"],
                                     relu=True, out_dtype=jnp.bfloat16)
        self.fc2 = make_linear_layer(self.params["w2"], self.params["b2"],
                                     relu=True, out_dtype=jnp.bfloat16)
        self.fc_out = make_linear_layer(w_out, b_out,
                                        relu=False, out_dtype=jnp.float32)

    def __call__(self, x, rois, roi_indices):
        N, C, H, W = x.shape
        S = self.roi_size
        rois = rois.astype(jnp.float32)
        batch_idx = roi_indices.astype(jnp.int32)
        hstart, hend, wstart, wend = _roi_bins(rois, self.spatial_scale, S, H, W)

        # Sort RoIs by image index so consecutive grid steps map to the same
        # feature-map block and Pallas reuses the resident tile (no re-DMA).
        order = jnp.argsort(batch_idx)
        inv = jnp.argsort(order)
        bidx_s = batch_idx[order]
        hs = hstart[order].reshape(-1)   # flat 1-D SMEM prefetch arrays
        he = hend[order].reshape(-1)
        ws = wstart[order].reshape(-1)
        we = wend[order].reshape(-1)

        # Channels-last so C rides the 128-lane axis inside the kernel.
        x_nhwc = jnp.transpose(x, (0, 2, 3, 1))
        BH = _window_bound(H, S)

        pool_s = roi_max_pool(x_nhwc, bidx_s, hs, he, ws, we,
                              S, self.ss_pad, BH)                # (R, SS_pad, C) bf16
        pool_flat = pool_s.reshape(pool_s.shape[0], -1)          # bin-major + pad bins

        # FC head runs in sorted order; the permutation commutes with row-wise
        # layers, so only the tiny final output is un-permuted.
        h = apply_linear(pool_flat, self.fc1)
        h = apply_linear(h, self.fc2)
        out_s = apply_linear(h, self.fc_out)
        out = out_s[inv]

        n_loc = self.n_class * 4
        roi_cls_locs = out[:, :n_loc]
        roi_scores = out[:, n_loc:n_loc + self.n_class]
        return roi_cls_locs, roi_scores


# ----------------------------------------------------------------------------
# Pure-JAX reference (PyTorch-ordered, mirrors the bf16 rounding points)
# ----------------------------------------------------------------------------
def _reference_forward(head, x, rois, roi_indices):
    N, C, H, W = x.shape
    S = head.roi_size
    hstart, hend, wstart, wend = _roi_bins(rois.astype(jnp.float32),
                                           head.spatial_scale, S, H, W)
    row = jnp.arange(H)[:, None]
    col = jnp.arange(W)[None, :]

    def one_roi(b, hs, he, ws, we):
        feat = x[b]
        bins = []
        for ph in range(S):
            for pw in range(S):
                mask = (row >= hs[ph]) & (row < he[ph]) & \
                       (col >= ws[pw]) & (col < we[pw])
                m = jnp.max(jnp.where(mask[None], feat, -jnp.inf), axis=(1, 2))
                m = jnp.where((he[ph] <= hs[ph]) | (we[pw] <= ws[pw]), 0.0, m)
                bins.append(m)
        return jnp.stack(bins, axis=1)  # (C, S*S)

    pool = jax.vmap(one_roi)(roi_indices.astype(jnp.int32),
                             hstart, hend, wstart, wend)
    pool_flat = pool.reshape(pool.shape[0], -1)   # C-major (PyTorch .view)

    p = head.params

    def lin(a, w_bf16, b, relu):
        y = jnp.dot(a.astype(jnp.bfloat16).astype(jnp.float32),
                    w_bf16.astype(jnp.float32)) + b
        return jnp.maximum(y, 0.0) if relu else y

    h = lin(pool_flat, p["w1"], p["b1"], True)
    h = lin(h, p["w2"], p["b2"], True)
    return lin(h, p["wl"], p["bl"], False), lin(h, p["ws"], p["bs"], False)


# ----------------------------------------------------------------------------
if __name__ == "__main__":
    key = jax.random.PRNGKey(0)
    kx, kb, ky, kx0, kh, kw, kp = jax.random.split(key, 7)

    # Small, module-consistent shapes.
    N, C, H, W = 2, 8, 16, 16          # feature map (NCHW)
    S = 7                              # roi_size
    spatial_scale = 0.5                # image coords are 2x the feature map
    R = 8                              # total number of RoIs
    n_class = 8
    fc_dim = 128                       # stands in for the 4096-wide VGG fc layers

    x = jax.random.normal(kx, (N, C, H, W), jnp.float32)
    roi_indices = jax.random.randint(kb, (R,), 0, N, dtype=jnp.int32)

    img_h, img_w = H / spatial_scale, W / spatial_scale
    y1 = jax.random.uniform(ky, (R,), minval=0.0, maxval=img_h * 0.6)
    x1 = jax.random.uniform(kx0, (R,), minval=0.0, maxval=img_w * 0.6)
    hgt = jax.random.uniform(kh, (R,), minval=4.0, maxval=img_h * 0.4)
    wid = jax.random.uniform(kw, (R,), minval=4.0, maxval=img_w * 0.4)
    rois = jnp.stack([y1, x1,
                      jnp.clip(y1 + hgt, 0.0, img_h - 1.0),
                      jnp.clip(x1 + wid, 0.0, img_w - 1.0)], axis=1)  # (R, 4) yxyx

    head = VGG16RoIHeadPallas(n_class, S, spatial_scale, C, fc_dim, kp)

    roi_cls_locs, roi_scores = head(x, rois, roi_indices)
    jax.block_until_ready((roi_cls_locs, roi_scores))

    assert roi_cls_locs.shape == (R, n_class * 4)
    assert roi_scores.shape == (R, n_class)

    ref_locs, ref_scores = _reference_forward(head, x, rois, roi_indices)
    assert bool(jnp.allclose(roi_cls_locs, ref_locs, atol=1e-4, rtol=1e-3))
    assert bool(jnp.allclose(roi_scores, ref_scores, atol=1e-4, rtol=1e-3))

    # TODO(synk): dropout layers of the VGG16 classifier are identity at
    # inference time and are intentionally omitted.
    print("KERNEL_OK")
</pallas_src>

<mosaic_0001>
module attributes {stable_mosaic.version = 11 : i64} {
  func.func @_roi_pool_kernel(%arg0: i32, %arg1: memref<8xi32, #tpu.memory_space<smem>>, %arg2: memref<56xi32, #tpu.memory_space<smem>>, %arg3: memref<56xi32, #tpu.memory_space<smem>>, %arg4: memref<56xi32, #tpu.memory_space<smem>>, %arg5: memref<56xi32, #tpu.memory_space<smem>>, %arg6: memref<1x16x16x8xf32, #tpu.memory_space<vmem>>, %arg7: memref<1x56x8xbf16, #tpu.memory_space<vmem>>, %arg8: memref<56x8xf32, #tpu.memory_space<vmem>>) attributes {dimension_semantics = [#tpu.dimension_semantics<parallel>], iteration_bounds = array<i64: 8>, scalar_prefetch = 5 : i64, scratch_operands = 1 : i64, tpu.core_type = #tpu.core_type<tc>, window_params = [{transform_indices = @transform_0, window_bounds = array<i64: 1, 16, 16, 8>}, {transform_indices = @transform_1, window_bounds = array<i64: 1, 56, 8>}]} {
    %c7_i32 = arith.constant 7 : i32
    %0 = arith.muli %arg0, %c7_i32 : i32
    %1 = tpu.iota {dimensions = array<i32: 0>} : vector<4x1x1xi32>
    %2 = tpu.iota {dimensions = array<i32: 0>} : vector<16x1xi32>
    %c0_i32 = arith.constant 0 : i32
    %3 = arith.addi %0, %c0_i32 : i32
    %4 = arith.index_cast %3 : i32 to index
    %5 = memref.load %arg2[%4] : memref<56xi32, #tpu.memory_space<smem>>
    %c0_i32_0 = arith.constant 0 : i32
    %6 = arith.addi %0, %c0_i32_0 : i32
    %7 = arith.index_cast %6 : i32 to index
    %8 = memref.load %arg3[%7] : memref<56xi32, #tpu.memory_space<smem>>
    %c0_i32_1 = arith.constant 0 : i32
    %c12_i32 = arith.constant 12 : i32
    %9 = arith.maxsi %c0_i32_1, %5 : i32
    %10 = arith.minsi %c12_i32, %9 : i32
    %c0 = arith.constant 0 : index
    %11 = arith.index_cast %10 : i32 to index
    %c0_2 = arith.constant 0 : index
    %c0_3 = arith.constant 0 : index
    %12 = vector.load %arg6[%c0, %11, %c0_2, %c0_3] : memref<1x16x16x8xf32, #tpu.memory_space<vmem>>, vector<1x4x16x8xf32>
    %13 = vector.shape_cast %12 : vector<1x4x16x8xf32> to vector<4x16x8xf32>
    %14 = vector.broadcast %10 : i32 to vector<4x1x1xi32>
    %15 = arith.addi %1, %14 : vector<4x1x1xi32>
    %16 = vector.broadcast %5 : i32 to vector<4x1x1xi32>
    %17 = arith.cmpi sge, %15, %16 : vector<4x1x1xi32>
    %18 = vector.broadcast %10 : i32 to vector<4x1x1xi32>
    %19 = arith.addi %1, %18 : vector<4x1x1xi32>
    %20 = vector.broadcast %8 : i32 to vector<4x1x1xi32>
    %21 = arith.cmpi slt, %19, %20 : vector<4x1x1xi32>
    %22 = arith.andi %17, %21 : vector<4x1x1xi1>
    %cst = arith.constant 0xFF800000 : f32
    %23 = vector.shape_cast %22 : vector<4x1x1xi1> to vector<4x1x1xi1>
    %24 = vector.broadcast %23 : vector<4x1x1xi1> to vector<4x16x8xi1>
    %25 = vector.broadcast %cst : f32 to vector<4x16x8xf32>
    %26 = arith.select %24, %13, %25 : vector<4x16x8xi1>, vector<4x16x8xf32>
    %cst_4 = arith.constant dense<0xFF800000> : vector<16x8xf32>
    %27 = vector.multi_reduction <maximumf>, %26, %cst_4 [0] : vector<4x16x8xf32> to vector<16x8xf32>
    %28 = arith.cmpi sle, %8, %5 : i32
    %c0_i32_5 = arith.constant 0 : i32
    %29 = arith.addi %0, %c0_i32_5 : i32
    %30 = arith.index_cast %29 : i32 to index
    %31 = memref.load %arg4[%30] : memref<56xi32, #tpu.memory_space<smem>>
    %c0_i32_6 = arith.constant 0 : i32
    %32 = arith.addi %0, %c0_i32_6 : i32
    %33 = arith.index_cast %32 : i32 to index
    %34 = memref.load %arg5[%33] : memref<56xi32, #tpu.memory_space<smem>>
    %35 = vector.broadcast %31 : i32 to vector<16x1xi32>
    %36 = arith.cmpi sge, %2, %35 : vector<16x1xi32>
    %37 = vector.broadcast %34 : i32 to vector<16x1xi32>
    %38 = arith.cmpi slt, %2, %37 : vector<16x1xi32>
    %39 = arith.andi %36, %38 : vector<16x1xi1>
    %cst_7 = arith.constant 0xFF800000 : f32
    %40 = vector.shape_cast %39 : vector<16x1xi1> to vector<16x1xi1>
    %41 = vector.broadcast %40 : vector<16x1xi1> to vector<16x8xi1>
    %42 = vector.broadcast %cst_7 : f32 to vector<16x8xf32>
    %43 = arith.select %41, %27, %42 : vector<16x8xi1>, vector<16x8xf32>
    %cst_8 = arith.constant dense<0xFF800000> : vector<8xf32>
    %44 = vector.multi_reduction <maximumf>, %43, %cst_8 [0] : vector<16x8xf32> to vector<8xf32>
    %45 = vector.shape_cast %44 : vector<8xf32> to vector<1x8xf32>
    %46 = arith.cmpi sle, %34, %31 : i32
    %47 = arith.ori %28, %46 : i1
    %cst_9 = arith.constant 0.000000e+00 : f32
    %48 = vector.broadcast %cst_9 : f32 to vector<1x8xf32>
    %49 = arith.select %47, %48, %45 : vector<1x8xf32>
    %c0_10 = arith.constant 0 : index
    %c0_11 = arith.constant 0 : index
    %50 = vector.load %arg8[%c0_10, %c0_11] : memref<56x8xf32, #tpu.memory_space<vmem>>, vector<1x8xf32>
    tpu.vector_store %arg8[%c0_10, %c0_11], %49 {strides = array<i32>} : memref<56x8xf32, #tpu.memory_space<vmem>>, vector<1x8xf32>,
    %c1_i32 = arith.constant 1 : i32
    %51 = arith.addi %0, %c1_i32 : i32
    %52 = arith.index_cast %51 : i32 to index
    %53 = memref.load %arg4[%52] : memref<56xi32, #tpu.memory_space<smem>>
    %c1_i32_12 = arith.constant 1 : i32
    %54 = arith.addi %0, %c1_i32_12 : i32
    %55 = arith.index_cast %54 : i32 to index
    %56 = memref.load %arg5[%55] : memref<56xi32, #tpu.memory_space<smem>>
    %57 = vector.broadcast %53 : i32 to vector<16x1xi32>
    %58 = arith.cmpi sge, %2, %57 : vector<16x1xi32>
    %59 = vector.broadcast %56 : i32 to vector<16x1xi32>
    %60 = arith.cmpi slt, %2, %59 : vector<16x1xi32>
    %61 = arith.andi %58, %60 : vector<16x1xi1>
    %cst_13 = arith.constant 0xFF800000 : f32
    %62 = vector.shape_cast %61 : vector<16x1xi1> to vector<16x1xi1>
    %63 = vector.broadcast %62 : vector<16x1xi1> to vector<16x8xi1>
    %64 = vector.broadcast %cst_13 : f32 to vector<16x8xf32>
    %65 = arith.select %63, %27, %64 : vector<16x8xi1>, vector<16x8xf32>
    %cst_14 = arith.constant dense<0xFF800000> : vector<8xf32>
    %66 = vector.multi_reduction <maximumf>, %65, %cst_14 [0] : vector<16x8xf32> to vector<8xf32>
    %67 = vector.shape_cast %66 : vector<8xf32> to vector<1x8xf32>
    %68 = arith.cmpi sle, %56, %53 : i32
    %69 = arith.ori %28, %68 : i1
    %cst_15 = arith.constant 0.000000e+00 : f32
    %70 = vector.broadcast %cst_15 : f32 to vector<1x8xf32>
    %71 = arith.select %69, %70, %67 : vector<1x8xf32>
    %c1 = arith.constant 1 : index
    %c0_16 = arith.constant 0 : index
    %72 = vector.load %arg8[%c1, %c0_16] : memref<56x8xf32, #tpu.memory_space<vmem>>, vector<1x8xf32>
    tpu.vector_store %arg8[%c1, %c0_16], %71 {strides = array<i32>} : memref<56x8xf32, #tpu.memory_space<vmem>>, vector<1x8xf32>,
    %c2_i32 = arith.constant 2 : i32
    %73 = arith.addi %0, %c2_i32 : i32
    %74 = arith.index_cast %73 : i32 to index
    %75 = memref.load %arg4[%74] : memref<56xi32, #tpu.memory_space<smem>>
    %c2_i32_17 = arith.constant 2 : i32
    %76 = arith.addi %0, %c2_i32_17 : i32
    %77 = arith.index_cast %76 : i32 to index
    %78 = memref.load %arg5[%77] : memref<56xi32, #tpu.memory_space<smem>>
    %79 = vector.broadcast %75 : i32 to vector<16x1xi32>
    %80 = arith.cmpi sge, %2, %79 : vector<16x1xi32>
    %81 = vector.broadcast %78 : i32 to vector<16x1xi32>
    %82 = arith.cmpi slt, %2, %81 : vector<16x1xi32>
    %83 = arith.andi %80, %82 : vector<16x1xi1>
    %cst_18 = arith.constant 0xFF800000 : f32
    %84 = vector.shape_cast %83 : vector<16x1xi1> to vector<16x1xi1>
    %85 = vector.broadcast %84 : vector<16x1xi1> to vector<16x8xi1>
    %86 = vector.broadcast %cst_18 : f32 to vector<16x8xf32>
    %87 = arith.select %85, %27, %86 : vector<16x8xi1>, vector<16x8xf32>
    %cst_19 = arith.constant dense<0xFF800000> : vector<8xf32>
    %88 = vector.multi_reduction <maximumf>, %87, %cst_19 [0] : vector<16x8xf32> to vector<8xf32>
    %89 = vector.shape_cast %88 : vector<8xf32> to vector<1x8xf32>
    %90 = arith.cmpi sle, %78, %75 : i32
    %91 = arith.ori %28, %90 : i1
    %cst_20 = arith.constant 0.000000e+00 : f32
    %92 = vector.broadcast %cst_20 : f32 to vector<1x8xf32>
    %93 = arith.select %91, %92, %89 : vector<1x8xf32>
    %c2 = arith.constant 2 : index
    %c0_21 = arith.constant 0 : index
    %94 = vector.load %arg8[%c2, %c0_21] : memref<56x8xf32, #tpu.memory_space<vmem>>, vector<1x8xf32>
    tpu.vector_store %arg8[%c2, %c0_21], %93 {strides = array<i32>} : memref<56x8xf32, #tpu.memory_space<vmem>>, vector<1x8xf32>,
    %c3_i32 = arith.constant 3 : i32
    %95 = arith.addi %0, %c3_i32 : i32
    %96 = arith.index_cast %95 : i32 to index
    %97 = memref.load %arg4[%96] : memref<56xi32, #tpu.memory_space<smem>>
    %c3_i32_22 = arith.constant 3 : i32
    %98 = arith.addi %0, %c3_i32_22 : i32
    %99 = arith.index_cast %98 : i32 to index
    %100 = memref.load %arg5[%99] : memref<56xi32, #tpu.memory_space<smem>>
    %101 = vector.broadcast %97 : i32 to vector<16x1xi32>
    %102 = arith.cmpi sge, %2, %101 : vector<16x1xi32>
    %103 = vector.broadcast %100 : i32 to vector<16x1xi32>
    %104 = arith.cmpi slt, %2, %103 : vector<16x1xi32>
    %105 = arith.andi %102, %104 : vector<16x1xi1>
    %cst_23 = arith.constant 0xFF800000 : f32
    %106 = vector.shape_cast %105 : vector<16x1xi1> to vector<16x1xi1>
    %107 = vector.broadcast %106 : vector<16x1xi1> to vector<16x8xi1>
    %108 = vector.broadcast %cst_23 : f32 to vector<16x8xf32>
    %109 = arith.select %107, %27, %108 : vector<16x8xi1>, vector<16x8xf32>
    %cst_24 = arith.constant dense<0xFF800000> : vector<8xf32>
    %110 = vector.multi_reduction <maximumf>, %109, %cst_24 [0] : vector<16x8xf32> to vector<8xf32>
    %111 = vector.shape_cast %110 : vector<8xf32> to vector<1x8xf32>
    %112 = arith.cmpi sle, %100, %97 : i32
    %113 = arith.ori %28, %112 : i1
    %cst_25 = arith.constant 0.000000e+00 : f32
    %114 = vector.broadcast %cst_25 : f32 to vector<1x8xf32>
    %115 = arith.select %113, %114, %111 : vector<1x8xf32>
    %c3 = arith.constant 3 : index
    %c0_26 = arith.constant 0 : index
    %116 = vector.load %arg8[%c3, %c0_26] : memref<56x8xf32, #tpu.memory_space<vmem>>, vector<1x8xf32>
    tpu.vector_store %arg8[%c3, %c0_26], %115 {strides = array<i32>} : memref<56x8xf32, #tpu.memory_space<vmem>>, vector<1x8xf32>,
    %c4_i32 = arith.constant 4 : i32
    %117 = arith.addi %0, %c4_i32 : i32
    %118 = arith.index_cast %117 : i32 to index
    %119 = memref.load %arg4[%118] : memref<56xi32, #tpu.memory_space<smem>>
    %c4_i32_27 = arith.constant 4 : i32
    %120 = arith.addi %0, %c4_i32_27 : i32
    %121 = arith.index_cast %120 : i32 to index
    %122 = memref.load %arg5[%121] : memref<56xi32, #tpu.memory_space<smem>>
    %123 = vector.broadcast %119 : i32 to vector<16x1xi32>
    %124 = arith.cmpi sge, %2, %123 : vector<16x1xi32>
    %125 = vector.broadcast %122 : i32 to vector<16x1xi32>
    %126 = arith.cmpi slt, %2, %125 : vector<16x1xi32>
    %127 = arith.andi %124, %126 : vector<16x1xi1>
    %cst_28 = arith.constant 0xFF800000 : f32
    %128 = vector.shape_cast %127 : vector<16x1xi1> to vector<16x1xi1>
    %129 = vector.broadcast %128 : vector<16x1xi1> to vector<16x8xi1>
    %130 = vector.broadcast %cst_28 : f32 to vector<16x8xf32>
    %131 = arith.select %129, %27, %130 : vector<16x8xi1>, vector<16x8xf32>
    %cst_29 = arith.constant dense<0xFF800000> : vector<8xf32>
    %132 = vector.multi_reduction <maximumf>, %131, %cst_29 [0] : vector<16x8xf32> to vector<8xf32>
    %133 = vector.shape_cast %132 : vector<8xf32> to vector<1x8xf32>
    %134 = arith.cmpi sle, %122, %119 : i32
    %135 = arith.ori %28, %134 : i1
    %cst_30 = arith.constant 0.000000e+00 : f32
    %136 = vector.broadcast %cst_30 : f32 to vector<1x8xf32>
    %137 = arith.select %135, %136, %133 : vector<1x8xf32>
    %c4 = arith.constant 4 : index
    %c0_31 = arith.constant 0 : index
    %138 = vector.load %arg8[%c4, %c0_31] : memref<56x8xf32, #tpu.memory_space<vmem>>, vector<1x8xf32>
    tpu.vector_store %arg8[%c4, %c0_31], %137 {strides = array<i32>} : memref<56x8xf32, #tpu.memory_space<vmem>>, vector<1x8xf32>,
    %c5_i32 = arith.constant 5 : i32
    %139 = arith.addi %0, %c5_i32 : i32
    %140 = arith.index_cast %139 : i32 to index
    %141 = memref.load %arg4[%140] : memref<56xi32, #tpu.memory_space<smem>>
    %c5_i32_32 = arith.constant 5 : i32
    %142 = arith.addi %0, %c5_i32_32 : i32
    %143 = arith.index_cast %142 : i32 to index
    %144 = memref.load %arg5[%143] : memref<56xi32, #tpu.memory_space<smem>>
    %145 = vector.broadcast %141 : i32 to vector<16x1xi32>
    %146 = arith.cmpi sge, %2, %145 : vector<16x1xi32>
    %147 = vector.broadcast %144 : i32 to vector<16x1xi32>
    %148 = arith.cmpi slt, %2, %147 : vector<16x1xi32>
    %149 = arith.andi %146, %148 : vector<16x1xi1>
    %cst_33 = arith.constant 0xFF800000 : f32
    %150 = vector.shape_cast %149 : vector<16x1xi1> to vector<16x1xi1>
    %151 = vector.broadcast %150 : vector<16x1xi1> to vector<16x8xi1>
    %152 = vector.broadcast %cst_33 : f32 to vector<16x8xf32>
    %153 = arith.select %151, %27, %152 : vector<16x8xi1>, vector<16x8xf32>
    %cst_34 = arith.constant dense<0xFF800000> : vector<8xf32>
    %154 = vector.multi_reduction <maximumf>, %153, %cst_34 [0] : vector<16x8xf32> to vector<8xf32>
    %155 = vector.shape_cast %154 : vector<8xf32> to vector<1x8xf32>
    %156 = arith.cmpi sle, %144, %141 : i32
    %157 = arith.ori %28, %156 : i1
    %cst_35 = arith.constant 0.000000e+00 : f32
    %158 = vector.broadcast %cst_35 : f32 to vector<1x8xf32>
    %159 = arith.select %157, %158, %155 : vector<1x8xf32>
    %c5 = arith.constant 5 : index
    %c0_36 = arith.constant 0 : index
    %160 = vector.load %arg8[%c5, %c0_36] : memref<56x8xf32, #tpu.memory_space<vmem>>, vector<1x8xf32>
    tpu.vector_store %arg8[%c5, %c0_36], %159 {strides = array<i32>} : memref<56x8xf32, #tpu.memory_space<vmem>>, vector<1x8xf32>,
    %c6_i32 = arith.constant 6 : i32
    %161 = arith.addi %0, %c6_i32 : i32
    %162 = arith.index_cast %161 : i32 to index
    %163 = memref.load %arg4[%162] : memref<56xi32, #tpu.memory_space<smem>>
    %c6_i32_37 = arith.constant 6 : i32
    %164 = arith.addi %0, %c6_i32_37 : i32
    %165 = arith.index_cast %164 : i32 to index
    %166 = memref.load %arg5[%165] : memref<56xi32, #tpu.memory_space<smem>>
    %167 = vector.broadcast %163 : i32 to vector<16x1xi32>
    %168 = arith.cmpi sge, %2, %167 : vector<16x1xi32>
    %169 = vector.broadcast %166 : i32 to vector<16x1xi32>
    %170 = arith.cmpi slt, %2, %169 : vector<16x1xi32>
    %171 = arith.andi %168, %170 : vector<16x1xi1>
    %cst_38 = arith.constant 0xFF800000 : f32
    %172 = vector.shape_cast %171 : vector<16x1xi1> to vector<16x1xi1>
    %173 = vector.broadcast %172 : vector<16x1xi1> to vector<16x8xi1>
    %174 = vector.broadcast %cst_38 : f32 to vector<16x8xf32>
    %175 = arith.select %173, %27, %174 : vector<16x8xi1>, vector<16x8xf32>
    %cst_39 = arith.constant dense<0xFF800000> : vector<8xf32>
    %176 = vector.multi_reduction <maximumf>, %175, %cst_39 [0] : vector<16x8xf32> to vector<8xf32>
    %177 = vector.shape_cast %176 : vector<8xf32> to vector<1x8xf32>
    %178 = arith.cmpi sle, %166, %163 : i32
    %179 = arith.ori %28, %178 : i1
    %cst_40 = arith.constant 0.000000e+00 : f32
    %180 = vector.broadcast %cst_40 : f32 to vector<1x8xf32>
    %181 = arith.select %179, %180, %177 : vector<1x8xf32>
    %c6 = arith.constant 6 : index
    %c0_41 = arith.constant 0 : index
    %182 = vector.load %arg8[%c6, %c0_41] : memref<56x8xf32, #tpu.memory_space<vmem>>, vector<1x8xf32>
    tpu.vector_store %arg8[%c6, %c0_41], %181 {strides = array<i32>} : memref<56x8xf32, #tpu.memory_space<vmem>>, vector<1x8xf32>,
    %c1_i32_42 = arith.constant 1 : i32
    %183 = arith.addi %0, %c1_i32_42 : i32
    %184 = arith.index_cast %183 : i32 to index
    %185 = memref.load %arg2[%184] : memref<56xi32, #tpu.memory_space<smem>>
    %c1_i32_43 = arith.constant 1 : i32
    %186 = arith.addi %0, %c1_i32_43 : i32
    %187 = arith.index_cast %186 : i32 to index
    %188 = memref.load %arg3[%187] : memref<56xi32, #tpu.memory_space<smem>>
    %c0_i32_44 = arith.constant 0 : i32
    %c12_i32_45 = arith.constant 12 : i32
    %189 = arith.maxsi %c0_i32_44, %185 : i32
    %190 = arith.minsi %c12_i32_45, %189 : i32
    %c0_46 = arith.constant 0 : index
    %191 = arith.index_cast %190 : i32 to index
    %c0_47 = arith.constant 0 : index
    %c0_48 = arith.constant 0 : index
    %192 = vector.load %arg6[%c0_46, %191, %c0_47, %c0_48] : memref<1x16x16x8xf32, #tpu.memory_space<vmem>>, vector<1x4x16x8xf32>
    %193 = vector.shape_cast %192 : vector<1x4x16x8xf32> to vector<4x16x8xf32>
    %194 = vector.broadcast %190 : i32 to vector<4x1x1xi32>
    %195 = arith.addi %1, %194 : vector<4x1x1xi32>
    %196 = vector.broadcast %185 : i32 to vector<4x1x1xi32>
    %197 = arith.cmpi sge, %195, %196 : vector<4x1x1xi32>
    %198 = vector.broadcast %190 : i32 to vector<4x1x1xi32>
    %199 = arith.addi %1, %198 : vector<4x1x1xi32>
    %200 = vector.broadcast %188 : i32 to vector<4x1x1xi32>
    %201 = arith.cmpi slt, %199, %200 : vector<4x1x1xi32>
    %202 = arith.andi %197, %201 : vector<4x1x1xi1>
    %cst_49 = arith.constant 0xFF800000 : f32
    %203 = vector.shape_cast %202 : vector<4x1x1xi1> to vector<4x1x1xi1>
    %204 = vector.broadcast %203 : vector<4x1x1xi1> to vector<4x16x8xi1>
    %205 = vector.broadcast %cst_49 : f32 to vector<4x16x8xf32>
    %206 = arith.select %204, %193, %205 : vector<4x16x8xi1>, vector<4x16x8xf32>
    %cst_50 = arith.constant dense<0xFF800000> : vector<16x8xf32>
    %207 = vector.multi_reduction <maximumf>, %206, %cst_50 [0] : vector<4x16x8xf32> to vector<16x8xf32>
    %208 = arith.cmpi sle, %188, %185 : i32
    %c0_i32_51 = arith.constant 0 : i32
    %209 = arith.addi %0, %c0_i32_51 : i32
    %210 = arith.index_cast %209 : i32 to index
    %211 = memref.load %arg4[%210] : memref<56xi32, #tpu.memory_space<smem>>
    %c0_i32_52 = arith.constant 0 : i32
    %212 = arith.addi %0, %c0_i32_52 : i32
    %213 = arith.index_cast %212 : i32 to index
    %214 = memref.load %arg5[%213] : memref<56xi32, #tpu.memory_space<smem>>
    %215 = vector.broadcast %211 : i32 to vector<16x1xi32>
    %216 = arith.cmpi sge, %2, %215 : vector<16x1xi32>
    %217 = vector.broadcast %214 : i32 to vector<16x1xi32>
    %218 = arith.cmpi slt, %2, %217 : vector<16x1xi32>
    %219 = arith.andi %216, %218 : vector<16x1xi1>
    %cst_53 = arith.constant 0xFF800000 : f32
    %220 = vector.shape_cast %219 : vector<16x1xi1> to vector<16x1xi1>
    %221 = vector.broadcast %220 : vector<16x1xi1> to vector<16x8xi1>
    %222 = vector.broadcast %cst_53 : f32 to vector<16x8xf32>
    %223 = arith.select %221, %207, %222 : vector<16x8xi1>, vector<16x8xf32>
    %cst_54 = arith.constant dense<0xFF800000> : vector<8xf32>
    %224 = vector.multi_reduction <maximumf>, %223, %cst_54 [0] : vector<16x8xf32> to vector<8xf32>
    %225 = vector.shape_cast %224 : vector<8xf32> to vector<1x8xf32>
    %226 = arith.cmpi sle, %214, %211 : i32
    %227 = arith.ori %208, %226 : i1
    %cst_55 = arith.constant 0.000000e+00 : f32
    %228 = vector.broadcast %cst_55 : f32 to vector<1x8xf32>
    %229 = arith.select %227, %228, %225 : vector<1x8xf32>
    %c7 = arith.constant 7 : index
    %c0_56 = arith.constant 0 : index
    %230 = vector.load %arg8[%c7, %c0_56] : memref<56x8xf32, #tpu.memory_space<vmem>>, vector<1x8xf32>
    tpu.vector_store %arg8[%c7, %c0_56], %229 {strides = array<i32>} : memref<56x8xf32, #tpu.memory_space<vmem>>, vector<1x8xf32>,
    %c1_i32_57 = arith.constant 1 : i32
    %231 = arith.addi %0, %c1_i32_57 : i32
    %232 = arith.index_cast %231 : i32 to index
    %233 = memref.load %arg4[%232] : memref<56xi32, #tpu.memory_space<smem>>
    %c1_i32_58 = arith.constant 1 : i32
    %234 = arith.addi %0, %c1_i32_58 : i32
    %235 = arith.index_cast %234 : i32 to index
    %236 = memref.load %arg5[%235] : memref<56xi32, #tpu.memory_space<smem>>
    %237 = vector.broadcast %233 : i32 to vector<16x1xi32>
    %238 = arith.cmpi sge, %2, %237 : vector<16x1xi32>
    %239 = vector.broadcast %236 : i32 to vector<16x1xi32>
    %240 = arith.cmpi slt, %2, %239 : vector<16x1xi32>
    %241 = arith.andi %238, %240 : vector<16x1xi1>
    %cst_59 = arith.constant 0xFF800000 : f32
    %242 = vector.shape_cast %241 : vector<16x1xi1> to vector<16x1xi1>
    %243 = vector.broadcast %242 : vector<16x1xi1> to vector<16x8xi1>
    %244 = vector.broadcast %cst_59 : f32 to vector<16x8xf32>
    %245 = arith.select %243, %207, %244 : vector<16x8xi1>, vector<16x8xf32>
    %cst_60 = arith.constant dense<0xFF800000> : vector<8xf32>
    %246 = vector.multi_reduction <maximumf>, %245, %cst_60 [0] : vector<16x8xf32> to vector<8xf32>
    %247 = vector.shape_cast %246 : vector<8xf32> to vector<1x8xf32>
    %248 = arith.cmpi sle, %236, %233 : i32
    %249 = arith.ori %208, %248 : i1
    %cst_61 = arith.constant 0.000000e+00 : f32
    %250 = vector.broadcast %cst_61 : f32 to vector<1x8xf32>
    %251 = arith.select %249, %250, %247 : vector<1x8xf32>
    %c8 = arith.constant 8 : index
    %c0_62 = arith.constant 0 : index
    %252 = vector.load %arg8[%c8, %c0_62] : memref<56x8xf32, #tpu.memory_space<vmem>>, vector<1x8xf32>
    tpu.vector_store %arg8[%c8, %c0_62], %251 {strides = array<i32>} : memref<56x8xf32, #tpu.memory_space<vmem>>, vector<1x8xf32>,
    %c2_i32_63 = arith.constant 2 : i32
    %253 = arith.addi %0, %c2_i32_63 : i32
    %254 = arith.index_cast %253 : i32 to index
    %255 = memref.load %arg4[%254] : memref<56xi32, #tpu.memory_space<smem>>
    %c2_i32_64 = arith.constant 2 : i32
    %256 = arith.addi %0, %c2_i32_64 : i32
    %257 = arith.index_cast %256 : i32 to index
    %258 = memref.load %arg5[%257] : memref<56xi32, #tpu.memory_space<smem>>
    %259 = vector.broadcast %255 : i32 to vector<16x1xi32>
    %260 = arith.cmpi sge, %2, %259 : vector<16x1xi32>
    %261 = vector.broadcast %258 : i32 to vector<16x1xi32>
    %262 = arith.cmpi slt, %2, %261 : vector<16x1xi32>
    %263 = arith.andi %260, %262 : vector<16x1xi1>
    %cst_65 = arith.constant 0xFF800000 : f32
    %264 = vector.shape_cast %263 : vector<16x1xi1> to vector<16x1xi1>
    %265 = vector.broadcast %264 : vector<16x1xi1> to vector<16x8xi1>
    %266 = vector.broadcast %cst_65 : f32 to vector<16x8xf32>
    %267 = arith.select %265, %207, %266 : vector<16x8xi1>, vector<16x8xf32>
    %cst_66 = arith.constant dense<0xFF800000> : vector<8xf32>
    %268 = vector.multi_reduction <maximumf>, %267, %cst_66 [0] : vector<16x8xf32> to vector<8xf32>
    %269 = vector.shape_cast %268 : vector<8xf32> to vector<1x8xf32>
    %270 = arith.cmpi sle, %258, %255 : i32
    %271 = arith.ori %208, %270 : i1
    %cst_67 = arith.constant 0.000000e+00 : f32
    %272 = vector.broadcast %cst_67 : f32 to vector<1x8xf32>
    %273 = arith.select %271, %272, %269 : vector<1x8xf32>
    %c9 = arith.constant 9 : index
    %c0_68 = arith.constant 0 : index
    %274 = vector.load %arg8[%c9, %c0_68] : memref<56x8xf32, #tpu.memory_space<vmem>>, vector<1x8xf32>
    tpu.vector_store %arg8[%c9, %c0_68], %273 {strides = array<i32>} : memref<56x8xf32, #tpu.memory_space<vmem>>, vector<1x8xf32>,
    %c3_i32_69 = arith.constant 3 : i32
    %275 = arith.addi %0, %c3_i32_69 : i32
    %276 = arith.index_cast %275 : i32 to index
    %277 = memref.load %arg4[%276] : memref<56xi32, #tpu.memory_space<smem>>
    %c3_i32_70 = arith.constant 3 : i32
    %278 = arith.addi %0, %c3_i32_70 : i32
    %279 = arith.index_cast %278 : i32 to index
    %280 = memref.load %arg5[%279] : memref<56xi32, #tpu.memory_space<smem>>
    %281 = vector.broadcast %277 : i32 to vector<16x1xi32>
    %282 = arith.cmpi sge, %2, %281 : vector<16x1xi32>
    %283 = vector.broadcast %280 : i32 to vector<16x1xi32>
    %284 = arith.cmpi slt, %2, %283 : vector<16x1xi32>
    %285 = arith.andi %282, %284 : vector<16x1xi1>
    %cst_71 = arith.constant 0xFF800000 : f32
    %286 = vector.shape_cast %285 : vector<16x1xi1> to vector<16x1xi1>
    %287 = vector.broadcast %286 : vector<16x1xi1> to vector<16x8xi1>
    %288 = vector.broadcast %cst_71 : f32 to vector<16x8xf32>
    %289 = arith.select %287, %207, %288 : vector<16x8xi1>, vector<16x8xf32>
    %cst_72 = arith.constant dense<0xFF800000> : vector<8xf32>
    %290 = vector.multi_reduction <maximumf>, %289, %cst_72 [0] : vector<16x8xf32> to vector<8xf32>
    %291 = vector.shape_cast %290 : vector<8xf32> to vector<1x8xf32>
    %292 = arith.cmpi sle, %280, %277 : i32
    %293 = arith.ori %208, %292 : i1
    %cst_73 = arith.constant 0.000000e+00 : f32
    %294 = vector.broadcast %cst_73 : f32 to vector<1x8xf32>
    %295 = arith.select %293, %294, %291 : vector<1x8xf32>
    %c10 = arith.constant 10 : index
    %c0_74 = arith.constant 0 : index
    %296 = vector.load %arg8[%c10, %c0_74] : memref<56x8xf32, #tpu.memory_space<vmem>>, vector<1x8xf32>
    tpu.vector_store %arg8[%c10, %c0_74], %295 {strides = array<i32>} : memref<56x8xf32, #tpu.memory_space<vmem>>, vector<1x8xf32>,
    %c4_i32_75 = arith.constant 4 : i32
    %297 = arith.addi %0, %c4_i32_75 : i32
    %298 = arith.index_cast %297 : i32 to index
    %299 = memref.load %arg4[%298] : memref<56xi32, #tpu.memory_space<smem>>
    %c4_i32_76 = arith.constant 4 : i32
    %300 = arith.addi %0, %c4_i32_76 : i32
    %301 = arith.index_cast %300 : i32 to index
    %302 = memref.load %arg5[%301] : memref<56xi32, #tpu.memory_space<smem>>
    %303 = vector.broadcast %299 : i32 to vector<16x1xi32>
    %304 = arith.cmpi sge, %2, %303 : vector<16x1xi32>
    %305 = vector.broadcast %302 : i32 to vector<16x1xi32>
    %306 = arith.cmpi slt, %2, %305 : vector<16x1xi32>
    %307 = arith.andi %304, %306 : vector<16x1xi1>
    %cst_77 = arith.constant 0xFF800000 : f32
    %308 = vector.shape_cast %307 : vector<16x1xi1> to vector<16x1xi1>
    %309 = vector.broadcast %308 : vector<16x1xi1> to vector<16x8xi1>
    %310 = vector.broadcast %cst_77 : f32 to vector<16x8xf32>
    %311 = arith.select %309, %207, %310 : vector<16x8xi1>, vector<16x8xf32>
    %cst_78 = arith.constant dense<0xFF800000> : vector<8xf32>
    %312 = vector.multi_reduction <maximumf>, %311, %cst_78 [0] : vector<16x8xf32> to vector<8xf32>
    %313 = vector.shape_cast %312 : vector<8xf32> to vector<1x8xf32>
    %314 = arith.cmpi sle, %302, %299 : i32
    %315 = arith.ori %208, %314 : i1
    %cst_79 = arith.constant 0.000000e+00 : f32
    %316 = vector.broadcast %cst_79 : f32 to vector<1x8xf32>
    %317 = arith.select %315, %316, %313 : vector<1x8xf32>
    %c11 = arith.constant 11 : index
    %c0_80 = arith.constant 0 : index
    %318 = vector.load %arg8[%c11, %c0_80] : memref<56x8xf32, #tpu.memory_space<vmem>>, vector<1x8xf32>
    tpu.vector_store %arg8[%c11, %c0_80], %317 {strides = array<i32>} : memref<56x8xf32, #tpu.memory_space<vmem>>, vector<1x8xf32>,
    %c5_i32_81 = arith.constant 5 : i32
    %319 = arith.addi %0, %c5_i32_81 : i32
    %320 = arith.index_cast %319 : i32 to index
    %321 = memref.load %arg4[%320] : memref<56xi32, #tpu.memory_space<smem>>
    %c5_i32_82 = arith.constant 5 : i32
    %322 = arith.addi %0, %c5_i32_82 : i32
    %323 = arith.index_cast %322 : i32 to index
    %324 = memref.load %arg5[%323] : memref<56xi32, #tpu.memory_space<smem>>
    %325 = vector.broadcast %321 : i32 to vector<16x1xi32>
    %326 = arith.cmpi sge, %2, %325 : vector<16x1xi32>
    %327 = vector.broadcast %324 : i32 to vector<16x1xi32>
    %328 = arith.cmpi slt, %2, %327 : vector<16x1xi32>
    %329 = arith.andi %326, %328 : vector<16x1xi1>
    %cst_83 = arith.constant 0xFF800000 : f32
    %330 = vector.shape_cast %329 : vector<16x1xi1> to vector<16x1xi1>
    %331 = vector.broadcast %330 : vector<16x1xi1> to vector<16x8xi1>
    %332 = vector.broadcast %cst_83 : f32 to vector<16x8xf32>
    %333 = arith.select %331, %207, %332 : vector<16x8xi1>, vector<16x8xf32>
    %cst_84 = arith.constant dense<0xFF800000> : vector<8xf32>
    %334 = vector.multi_reduction <maximumf>, %333, %cst_84 [0] : vector<16x8xf32> to vector<8xf32>
    %335 = vector.shape_cast %334 : vector<8xf32> to vector<1x8xf32>
    %336 = arith.cmpi sle, %324, %321 : i32
    %337 = arith.ori %208, %336 : i1
    %cst_85 = arith.constant 0.000000e+00 : f32
    %338 = vector.broadcast %cst_85 : f32 to vector<1x8xf32>
    %339 = arith.select %337, %338, %335 : vector<1x8xf32>
    %c12 = arith.constant 12 : index
    %c0_86 = arith.constant 0 : index
    %340 = vector.load %arg8[%c12, %c0_86] : memref<56x8xf32, #tpu.memory_space<vmem>>, vector<1x8xf32>
    tpu.vector_store %arg8[%c12, %c0_86], %339 {strides = array<i32>} : memref<56x8xf32, #tpu.memory_space<vmem>>, vector<1x8xf32>,
    %c6_i32_87 = arith.constant 6 : i32
    %341 = arith.addi %0, %c6_i32_87 : i32
    %342 = arith.index_cast %341 : i32 to index
    %343 = memref.load %arg4[%342] : memref<56xi32, #tpu.memory_space<smem>>
    %c6_i32_88 = arith.constant 6 : i32
    %344 = arith.addi %0, %c6_i32_88 : i32
    %345 = arith.index_cast %344 : i32 to index
    %346 = memref.load %arg5[%345] : memref<56xi32, #tpu.memory_space<smem>>
    %347 = vector.broadcast %343 : i32 to vector<16x1xi32>
    %348 = arith.cmpi sge, %2, %347 : vector<16x1xi32>
    %349 = vector.broadcast %346 : i32 to vector<16x1xi32>
    %350 = arith.cmpi slt, %2, %349 : vector<16x1xi32>
    %351 = arith.andi %348, %350 : vector<16x1xi1>
    %cst_89 = arith.constant 0xFF800000 : f32
    %352 = vector.shape_cast %351 : vector<16x1xi1> to vector<16x1xi1>
    %353 = vector.broadcast %352 : vector<16x1xi1> to vector<16x8xi1>
    %354 = vector.broadcast %cst_89 : f32 to vector<16x8xf32>
    %355 = arith.select %353, %207, %354 : vector<16x8xi1>, vector<16x8xf32>
    %cst_90 = arith.constant dense<0xFF800000> : vector<8xf32>
    %356 = vector.multi_reduction <maximumf>, %355, %cst_90 [0] : vector<16x8xf32> to vector<8xf32>
    %357 = vector.shape_cast %356 : vector<8xf32> to vector<1x8xf32>
    %358 = arith.cmpi sle, %346, %343 : i32
    %359 = arith.ori %208, %358 : i1
    %cst_91 = arith.constant 0.000000e+00 : f32
    %360 = vector.broadcast %cst_91 : f32 to vector<1x8xf32>
    %361 = arith.select %359, %360, %357 : vector<1x8xf32>
    %c13 = arith.constant 13 : index
    %c0_92 = arith.constant 0 : index
    %362 = vector.load %arg8[%c13, %c0_92] : memref<56x8xf32, #tpu.memory_space<vmem>>, vector<1x8xf32>
    tpu.vector_store %arg8[%c13, %c0_92], %361 {strides = array<i32>} : memref<56x8xf32, #tpu.memory_space<vmem>>, vector<1x8xf32>,
    %c2_i32_93 = arith.constant 2 : i32
    %363 = arith.addi %0, %c2_i32_93 : i32
    %364 = arith.index_cast %363 : i32 to index
    %365 = memref.load %arg2[%364] : memref<56xi32, #tpu.memory_space<smem>>
    %c2_i32_94 = arith.constant 2 : i32
    %366 = arith.addi %0, %c2_i32_94 : i32
    %367 = arith.index_cast %366 : i32 to index
    %368 = memref.load %arg3[%367] : memref<56xi32, #tpu.memory_space<smem>>
    %c0_i32_95 = arith.constant 0 : i32
    %c12_i32_96 = arith.constant 12 : i32
    %369 = arith.maxsi %c0_i32_95, %365 : i32
    %370 = arith.minsi %c12_i32_96, %369 : i32
    %c0_97 = arith.constant 0 : index
    %371 = arith.index_cast %370 : i32 to index
    %c0_98 = arith.constant 0 : index
    %c0_99 = arith.constant 0 : index
    %372 = vector.load %arg6[%c0_97, %371, %c0_98, %c0_99] : memref<1x16x16x8xf32, #tpu.memory_space<vmem>>, vector<1x4x16x8xf32>
    %373 = vector.shape_cast %372 : vector<1x4x16x8xf32> to vector<4x16x8xf32>
    %374 = vector.broadcast %370 : i32 to vector<4x1x1xi32>
    %375 = arith.addi %1, %374 : vector<4x1x1xi32>
    %376 = vector.broadcast %365 : i32 to vector<4x1x1xi32>
    %377 = arith.cmpi sge, %375, %376 : vector<4x1x1xi32>
    %378 = vector.broadcast %370 : i32 to vector<4x1x1xi32>
    %379 = arith.addi %1, %378 : vector<4x1x1xi32>
    %380 = vector.broadcast %368 : i32 to vector<4x1x1xi32>
    %381 = arith.cmpi slt, %379, %380 : vector<4x1x1xi32>
    %382 = arith.andi %377, %381 : vector<4x1x1xi1>
    %cst_100 = arith.constant 0xFF800000 : f32
    %383 = vector.shape_cast %382 : vector<4x1x1xi1> to vector<4x1x1xi1>
    %384 = vector.broadcast %383 : vector<4x1x1xi1> to vector<4x16x8xi1>
    %385 = vector.broadcast %cst_100 : f32 to vector<4x16x8xf32>
    %386 = arith.select %384, %373, %385 : vector<4x16x8xi1>, vector<4x16x8xf32>
    %cst_101 = arith.constant dense<0xFF800000> : vector<16x8xf32>
    %387 = vector.multi_reduction <maximumf>, %386, %cst_101 [0] : vector<4x16x8xf32> to vector<16x8xf32>
    %388 = arith.cmpi sle, %368, %365 : i32
    %c0_i32_102 = arith.constant 0 : i32
    %389 = arith.addi %0, %c0_i32_102 : i32
    %390 = arith.index_cast %389 : i32 to index
    %391 = memref.load %arg4[%390] : memref<56xi32, #tpu.memory_space<smem>>
    %c0_i32_103 = arith.constant 0 : i32
    %392 = arith.addi %0, %c0_i32_103 : i32
    %393 = arith.index_cast %392 : i32 to index
    %394 = memref.load %arg5[%393] : memref<56xi32, #tpu.memory_space<smem>>
    %395 = vector.broadcast %391 : i32 to vector<16x1xi32>
    %396 = arith.cmpi sge, %2, %395 : vector<16x1xi32>
    %397 = vector.broadcast %394 : i32 to vector<16x1xi32>
    %398 = arith.cmpi slt, %2, %397 : vector<16x1xi32>
    %399 = arith.andi %396, %398 : vector<16x1xi1>
    %cst_104 = arith.constant 0xFF800000 : f32
    %400 = vector.shape_cast %399 : vector<16x1xi1> to vector<16x1xi1>
    %401 = vector.broadcast %400 : vector<16x1xi1> to vector<16x8xi1>
    %402 = vector.broadcast %cst_104 : f32 to vector<16x8xf32>
    %403 = arith.select %401, %387, %402 : vector<16x8xi1>, vector<16x8xf32>
    %cst_105 = arith.constant dense<0xFF800000> : vector<8xf32>
    %404 = vector.multi_reduction <maximumf>, %403, %cst_105 [0] : vector<16x8xf32> to vector<8xf32>
    %405 = vector.shape_cast %404 : vector<8xf32> to vector<1x8xf32>
    %406 = arith.cmpi sle, %394, %391 : i32
    %407 = arith.ori %388, %406 : i1
    %cst_106 = arith.constant 0.000000e+00 : f32
    %408 = vector.broadcast %cst_106 : f32 to vector<1x8xf32>
    %409 = arith.select %407, %408, %405 : vector<1x8xf32>
    %c14 = arith.constant 14 : index
    %c0_107 = arith.constant 0 : index
    %410 = vector.load %arg8[%c14, %c0_107] : memref<56x8xf32, #tpu.memory_space<vmem>>, vector<1x8xf32>
    tpu.vector_store %arg8[%c14, %c0_107], %409 {strides = array<i32>} : memref<56x8xf32, #tpu.memory_space<vmem>>, vector<1x8xf32>,
    %c1_i32_108 = arith.constant 1 : i32
    %411 = arith.addi %0, %c1_i32_108 : i32
    %412 = arith.index_cast %411 : i32 to index
    %413 = memref.load %arg4[%412] : memref<56xi32, #tpu.memory_space<smem>>
    %c1_i32_109 = arith.constant 1 : i32
    %414 = arith.addi %0, %c1_i32_109 : i32
    %415 = arith.index_cast %414 : i32 to index
    %416 = memref.load %arg5[%415] : memref<56xi32, #tpu.memory_space<smem>>
    %417 = vector.broadcast %413 : i32 to vector<16x1xi32>
    %418 = arith.cmpi sge, %2, %417 : vector<16x1xi32>
    %419 = vector.broadcast %416 : i32 to vector<16x1xi32>
    %420 = arith.cmpi slt, %2, %419 : vector<16x1xi32>
    %421 = arith.andi %418, %420 : vector<16x1xi1>
    %cst_110 = arith.constant 0xFF800000 : f32
    %422 = vector.shape_cast %421 : vector<16x1xi1> to vector<16x1xi1>
    %423 = vector.broadcast %422 : vector<16x1xi1> to vector<16x8xi1>
    %424 = vector.broadcast %cst_110 : f32 to vector<16x8xf32>
    %425 = arith.select %423, %387, %424 : vector<16x8xi1>, vector<16x8xf32>
    %cst_111 = arith.constant dense<0xFF800000> : vector<8xf32>
    %426 = vector.multi_reduction <maximumf>, %425, %cst_111 [0] : vector<16x8xf32> to vector<8xf32>
    %427 = vector.shape_cast %426 : vector<8xf32> to vector<1x8xf32>
    %428 = arith.cmpi sle, %416, %413 : i32
    %429 = arith.ori %388, %428 : i1
    %cst_112 = arith.constant 0.000000e+00 : f32
    %430 = vector.broadcast %cst_112 : f32 to vector<1x8xf32>
    %431 = arith.select %429, %430, %427 : vector<1x8xf32>
    %c15 = arith.constant 15 : index
    %c0_113 = arith.constant 0 : index
    %432 = vector.load %arg8[%c15, %c0_113] : memref<56x8xf32, #tpu.memory_space<vmem>>, vector<1x8xf32>
    tpu.vector_store %arg8[%c15, %c0_113], %431 {strides = array<i32>} : memref<56x8xf32, #tpu.memory_space<vmem>>, vector<1x8xf32>,
    %c2_i32_114 = arith.constant 2 : i32
    %433 = arith.addi %0, %c2_i32_114 : i32
    %434 = arith.index_cast %433 : i32 to index
    %435 = memref.load %arg4[%434] : memref<56xi32, #tpu.memory_space<smem>>
    %c2_i32_115 = arith.constant 2 : i32
    %436 = arith.addi %0, %c2_i32_115 : i32
    %437 = arith.index_cast %436 : i32 to index
    %438 = memref.load %arg5[%437] : memref<56xi32, #tpu.memory_space<smem>>
    %439 = vector.broadcast %435 : i32 to vector<16x1xi32>
    %440 = arith.cmpi sge, %2, %439 : vector<16x1xi32>
    %441 = vector.broadcast %438 : i32 to vector<16x1xi32>
    %442 = arith.cmpi slt, %2, %441 : vector<16x1xi32>
    %443 = arith.andi %440, %442 : vector<16x1xi1>
    %cst_116 = arith.constant 0xFF800000 : f32
    %444 = vector.shape_cast %443 : vector<16x1xi1> to vector<16x1xi1>
    %445 = vector.broadcast %444 : vector<16x1xi1> to vector<16x8xi1>
    %446 = vector.broadcast %cst_116 : f32 to vector<16x8xf32>
    %447 = arith.select %445, %387, %446 : vector<16x8xi1>, vector<16x8xf32>
    %cst_117 = arith.constant dense<0xFF800000> : vector<8xf32>
    %448 = vector.multi_reduction <maximumf>, %447, %cst_117 [0] : vector<16x8xf32> to vector<8xf32>
    %449 = vector.shape_cast %448 : vector<8xf32> to vector<1x8xf32>
    %450 = arith.cmpi sle, %438, %435 : i32
    %451 = arith.ori %388, %450 : i1
    %cst_118 = arith.constant 0.000000e+00 : f32
    %452 = vector.broadcast %cst_118 : f32 to vector<1x8xf32>
    %453 = arith.select %451, %452, %449 : vector<1x8xf32>
    %c16 = arith.constant 16 : index
    %c0_119 = arith.constant 0 : index
    %454 = vector.load %arg8[%c16, %c0_119] : memref<56x8xf32, #tpu.memory_space<vmem>>, vector<1x8xf32>
    tpu.vector_store %arg8[%c16, %c0_119], %453 {strides = array<i32>} : memref<56x8xf32, #tpu.memory_space<vmem>>, vector<1x8xf32>,
    %c3_i32_120 = arith.constant 3 : i32
    %455 = arith.addi %0, %c3_i32_120 : i32
    %456 = arith.index_cast %455 : i32 to index
    %457 = memref.load %arg4[%456] : memref<56xi32, #tpu.memory_space<smem>>
    %c3_i32_121 = arith.constant 3 : i32
    %458 = arith.addi %0, %c3_i32_121 : i32
    %459 = arith.index_cast %458 : i32 to index
    %460 = memref.load %arg5[%459] : memref<56xi32, #tpu.memory_space<smem>>
    %461 = vector.broadcast %457 : i32 to vector<16x1xi32>
    %462 = arith.cmpi sge, %2, %461 : vector<16x1xi32>
    %463 = vector.broadcast %460 : i32 to vector<16x1xi32>
    %464 = arith.cmpi slt, %2, %463 : vector<16x1xi32>
    %465 = arith.andi %462, %464 : vector<16x1xi1>
    %cst_122 = arith.constant 0xFF800000 : f32
    %466 = vector.shape_cast %465 : vector<16x1xi1> to vector<16x1xi1>
    %467 = vector.broadcast %466 : vector<16x1xi1> to vector<16x8xi1>
    %468 = vector.broadcast %cst_122 : f32 to vector<16x8xf32>
    %469 = arith.select %467, %387, %468 : vector<16x8xi1>, vector<16x8xf32>
    %cst_123 = arith.constant dense<0xFF800000> : vector<8xf32>
    %470 = vector.multi_reduction <maximumf>, %469, %cst_123 [0] : vector<16x8xf32> to vector<8xf32>
    %471 = vector.shape_cast %470 : vector<8xf32> to vector<1x8xf32>
    %472 = arith.cmpi sle, %460, %457 : i32
    %473 = arith.ori %388, %472 : i1
    %cst_124 = arith.constant 0.000000e+00 : f32
    %474 = vector.broadcast %cst_124 : f32 to vector<1x8xf32>
    %475 = arith.select %473, %474, %471 : vector<1x8xf32>
    %c17 = arith.constant 17 : index
    %c0_125 = arith.constant 0 : index
    %476 = vector.load %arg8[%c17, %c0_125] : memref<56x8xf32, #tpu.memory_space<vmem>>, vector<1x8xf32>
    tpu.vector_store %arg8[%c17, %c0_125], %475 {strides = array<i32>} : memref<56x8xf32, #tpu.memory_space<vmem>>, vector<1x8xf32>,
    %c4_i32_126 = arith.constant 4 : i32
    %477 = arith.addi %0, %c4_i32_126 : i32
    %478 = arith.index_cast %477 : i32 to index
    %479 = memref.load %arg4[%478] : memref<56xi32, #tpu.memory_space<smem>>
    %c4_i32_127 = arith.constant 4 : i32
    %480 = arith.addi %0, %c4_i32_127 : i32
    %481 = arith.index_cast %480 : i32 to index
    %482 = memref.load %arg5[%481] : memref<56xi32, #tpu.memory_space<smem>>
    %483 = vector.broadcast %479 : i32 to vector<16x1xi32>
    %484 = arith.cmpi sge, %2, %483 : vector<16x1xi32>
    %485 = vector.broadcast %482 : i32 to vector<16x1xi32>
    %486 = arith.cmpi slt, %2, %485 : vector<16x1xi32>
    %487 = arith.andi %484, %486 : vector<16x1xi1>
    %cst_128 = arith.constant 0xFF800000 : f32
    %488 = vector.shape_cast %487 : vector<16x1xi1> to vector<16x1xi1>
    %489 = vector.broadcast %488 : vector<16x1xi1> to vector<16x8xi1>
    %490 = vector.broadcast %cst_128 : f32 to vector<16x8xf32>
    %491 = arith.select %489, %387, %490 : vector<16x8xi1>, vector<16x8xf32>
    %cst_129 = arith.constant dense<0xFF800000> : vector<8xf32>
    %492 = vector.multi_reduction <maximumf>, %491, %cst_129 [0] : vector<16x8xf32> to vector<8xf32>
    %493 = vector.shape_cast %492 : vector<8xf32> to vector<1x8xf32>
    %494 = arith.cmpi sle, %482, %479 : i32
    %495 = arith.ori %388, %494 : i1
    %cst_130 = arith.constant 0.000000e+00 : f32
    %496 = vector.broadcast %cst_130 : f32 to vector<1x8xf32>
    %497 = arith.select %495, %496, %493 : vector<1x8xf32>
    %c18 = arith.constant 18 : index
    %c0_131 = arith.constant 0 : index
    %498 = vector.load %arg8[%c18, %c0_131] : memref<56x8xf32, #tpu.memory_space<vmem>>, vector<1x8xf32>
    tpu.vector_store %arg8[%c18, %c0_131], %497 {strides = array<i32>} : memref<56x8xf32, #tpu.memory_space<vmem>>, vector<1x8xf32>,
    %c5_i32_132 = arith.constant 5 : i32
    %499 = arith.addi %0, %c5_i32_132 : i32
    %500 = arith.index_cast %499 : i32 to index
    %501 = memref.load %arg4[%500] : memref<56xi32, #tpu.memory_space<smem>>
    %c5_i32_133 = arith.constant 5 : i32
    %502 = arith.addi %0, %c5_i32_133 : i32
    %503 = arith.index_cast %502 : i32 to index
    %504 = memref.load %arg5[%503] : memref<56xi32, #tpu.memory_space<smem>>
    %505 = vector.broadcast %501 : i32 to vector<16x1xi32>
    %506 = arith.cmpi sge, %2, %505 : vector<16x1xi32>
    %507 = vector.broadcast %504 : i32 to vector<16x1xi32>
    %508 = arith.cmpi slt, %2, %507 : vector<16x1xi32>
    %509 = arith.andi %506, %508 : vector<16x1xi1>
    %cst_134 = arith.constant 0xFF800000 : f32
    %510 = vector.shape_cast %509 : vector<16x1xi1> to vector<16x1xi1>
    %511 = vector.broadcast %510 : vector<16x1xi1> to vector<16x8xi1>
    %512 = vector.broadcast %cst_134 : f32 to vector<16x8xf32>
    %513 = arith.select %511, %387, %512 : vector<16x8xi1>, vector<16x8xf32>
    %cst_135 = arith.constant dense<0xFF800000> : vector<8xf32>
    %514 = vector.multi_reduction <maximumf>, %513, %cst_135 [0] : vector<16x8xf32> to vector<8xf32>
    %515 = vector.shape_cast %514 : vector<8xf32> to vector<1x8xf32>
    %516 = arith.cmpi sle, %504, %501 : i32
    %517 = arith.ori %388, %516 : i1
    %cst_136 = arith.constant 0.000000e+00 : f32
    %518 = vector.broadcast %cst_136 : f32 to vector<1x8xf32>
    %519 = arith.select %517, %518, %515 : vector<1x8xf32>
    %c19 = arith.constant 19 : index
    %c0_137 = arith.constant 0 : index
    %520 = vector.load %arg8[%c19, %c0_137] : memref<56x8xf32, #tpu.memory_space<vmem>>, vector<1x8xf32>
    tpu.vector_store %arg8[%c19, %c0_137], %519 {strides = array<i32>} : memref<56x8xf32, #tpu.memory_space<vmem>>, vector<1x8xf32>,
    %c6_i32_138 = arith.constant 6 : i32
    %521 = arith.addi %0, %c6_i32_138 : i32
    %522 = arith.index_cast %521 : i32 to index
    %523 = memref.load %arg4[%522] : memref<56xi32, #tpu.memory_space<smem>>
    %c6_i32_139 = arith.constant 6 : i32
    %524 = arith.addi %0, %c6_i32_139 : i32
    %525 = arith.index_cast %524 : i32 to index
    %526 = memref.load %arg5[%525] : memref<56xi32, #tpu.memory_space<smem>>
    %527 = vector.broadcast %523 : i32 to vector<16x1xi32>
    %528 = arith.cmpi sge, %2, %527 : vector<16x1xi32>
    %529 = vector.broadcast %526 : i32 to vector<16x1xi32>
    %530 = arith.cmpi slt, %2, %529 : vector<16x1xi32>
    %531 = arith.andi %528, %530 : vector<16x1xi1>
    %cst_140 = arith.constant 0xFF800000 : f32
    %532 = vector.shape_cast %531 : vector<16x1xi1> to vector<16x1xi1>
    %533 = vector.broadcast %532 : vector<16x1xi1> to vector<16x8xi1>
    %534 = vector.broadcast %cst_140 : f32 to vector<16x8xf32>
    %535 = arith.select %533, %387, %534 : vector<16x8xi1>, vector<16x8xf32>
    %cst_141 = arith.constant dense<0xFF800000> : vector<8xf32>
    %536 = vector.multi_reduction <maximumf>, %535, %cst_141 [0] : vector<16x8xf32> to vector<8xf32>
    %537 = vector.shape_cast %536 : vector<8xf32> to vector<1x8xf32>
    %538 = arith.cmpi sle, %526, %523 : i32
    %539 = arith.ori %388, %538 : i1
    %cst_142 = arith.constant 0.000000e+00 : f32
    %540 = vector.broadcast %cst_142 : f32 to vector<1x8xf32>
    %541 = arith.select %539, %540, %537 : vector<1x8xf32>
    %c20 = arith.constant 20 : index
    %c0_143 = arith.constant 0 : index
    %542 = vector.load %arg8[%c20, %c0_143] : memref<56x8xf32, #tpu.memory_space<vmem>>, vector<1x8xf32>
    tpu.vector_store %arg8[%c20, %c0_143], %541 {strides = array<i32>} : memref<56x8xf32, #tpu.memory_space<vmem>>, vector<1x8xf32>,
    %c3_i32_144 = arith.constant 3 : i32
    %543 = arith.addi %0, %c3_i32_144 : i32
    %544 = arith.index_cast %543 : i32 to index
    %545 = memref.load %arg2[%544] : memref<56xi32, #tpu.memory_space<smem>>
    %c3_i32_145 = arith.constant 3 : i32
    %546 = arith.addi %0, %c3_i32_145 : i32
    %547 = arith.index_cast %546 : i32 to index
    %548 = memref.load %arg3[%547] : memref<56xi32, #tpu.memory_space<smem>>
    %c0_i32_146 = arith.constant 0 : i32
    %c12_i32_147 = arith.constant 12 : i32
    %549 = arith.maxsi %c0_i32_146, %545 : i32
    %550 = arith.minsi %c12_i32_147, %549 : i32
    %c0_148 = arith.constant 0 : index
    %551 = arith.index_cast %550 : i32 to index
    %c0_149 = arith.constant 0 : index
    %c0_150 = arith.constant 0 : index
    %552 = vector.load %arg6[%c0_148, %551, %c0_149, %c0_150] : memref<1x16x16x8xf32, #tpu.memory_space<vmem>>, vector<1x4x16x8xf32>
    %553 = vector.shape_cast %552 : vector<1x4x16x8xf32> to vector<4x16x8xf32>
    %554 = vector.broadcast %550 : i32 to vector<4x1x1xi32>
    %555 = arith.addi %1, %554 : vector<4x1x1xi32>
    %556 = vector.broadcast %545 : i32 to vector<4x1x1xi32>
    %557 = arith.cmpi sge, %555, %556 : vector<4x1x1xi32>
    %558 = vector.broadcast %550 : i32 to vector<4x1x1xi32>
    %559 = arith.addi %1, %558 : vector<4x1x1xi32>
    %560 = vector.broadcast %548 : i32 to vector<4x1x1xi32>
    %561 = arith.cmpi slt, %559, %560 : vector<4x1x1xi32>
    %562 = arith.andi %557, %561 : vector<4x1x1xi1>
    %cst_151 = arith.constant 0xFF800000 : f32
    %563 = vector.shape_cast %562 : vector<4x1x1xi1> to vector<4x1x1xi1>
    %564 = vector.broadcast %563 : vector<4x1x1xi1> to vector<4x16x8xi1>
    %565 = vector.broadcast %cst_151 : f32 to vector<4x16x8xf32>
    %566 = arith.select %564, %553, %565 : vector<4x16x8xi1>, vector<4x16x8xf32>
    %cst_152 = arith.constant dense<0xFF800000> : vector<16x8xf32>
    %567 = vector.multi_reduction <maximumf>, %566, %cst_152 [0] : vector<4x16x8xf32> to vector<16x8xf32>
    %568 = arith.cmpi sle, %548, %545 : i32
    %c0_i32_153 = arith.constant 0 : i32
    %569 = arith.addi %0, %c0_i32_153 : i32
    %570 = arith.index_cast %569 : i32 to index
    %571 = memref.load %arg4[%570] : memref<56xi32, #tpu.memory_space<smem>>
    %c0_i32_154 = arith.constant 0 : i32
    %572 = arith.addi %0, %c0_i32_154 : i32
    %573 = arith.index_cast %572 : i32 to index
    %574 = memref.load %arg5[%573] : memref<56xi32, #tpu.memory_space<smem>>
    %575 = vector.broadcast %571 : i32 to vector<16x1xi32>
    %576 = arith.cmpi sge, %2, %575 : vector<16x1xi32>
    %577 = vector.broadcast %574 : i32 to vector<16x1xi32>
    %578 = arith.cmpi slt, %2, %577 : vector<16x1xi32>
    %579 = arith.andi %576, %578 : vector<16x1xi1>
    %cst_155 = arith.constant 0xFF800000 : f32
    %580 = vector.shape_cast %579 : vector<16x1xi1> to vector<16x1xi1>
    %581 = vector.broadcast %580 : vector<16x1xi1> to vector<16x8xi1>
    %582 = vector.broadcast %cst_155 : f32 to vector<16x8xf32>
    %583 = arith.select %581, %567, %582 : vector<16x8xi1>, vector<16x8xf32>
    %cst_156 = arith.constant dense<0xFF800000> : vector<8xf32>
    %584 = vector.multi_reduction <maximumf>, %583, %cst_156 [0] : vector<16x8xf32> to vector<8xf32>
    %585 = vector.shape_cast %584 : vector<8xf32> to vector<1x8xf32>
    %586 = arith.cmpi sle, %574, %571 : i32
    %587 = arith.ori %568, %586 : i1
    %cst_157 = arith.constant 0.000000e+00 : f32
    %588 = vector.broadcast %cst_157 : f32 to vector<1x8xf32>
    %589 = arith.select %587, %588, %585 : vector<1x8xf32>
    %c21 = arith.constant 21 : index
    %c0_158 = arith.constant 0 : index
    %590 = vector.load %arg8[%c21, %c0_158] : memref<56x8xf32, #tpu.memory_space<vmem>>, vector<1x8xf32>
    tpu.vector_store %arg8[%c21, %c0_158], %589 {strides = array<i32>} : memref<56x8xf32, #tpu.memory_space<vmem>>, vector<1x8xf32>,
    %c1_i32_159 = arith.constant 1 : i32
    %591 = arith.addi %0, %c1_i32_159 : i32
    %592 = arith.index_cast %591 : i32 to index
    %593 = memref.load %arg4[%592] : memref<56xi32, #tpu.memory_space<smem>>
    %c1_i32_160 = arith.constant 1 : i32
    %594 = arith.addi %0, %c1_i32_160 : i32
    %595 = arith.index_cast %594 : i32 to index
    %596 = memref.load %arg5[%595] : memref<56xi32, #tpu.memory_space<smem>>
    %597 = vector.broadcast %593 : i32 to vector<16x1xi32>
    %598 = arith.cmpi sge, %2, %597 : vector<16x1xi32>
    %599 = vector.broadcast %596 : i32 to vector<16x1xi32>
    %600 = arith.cmpi slt, %2, %599 : vector<16x1xi32>
    %601 = arith.andi %598, %600 : vector<16x1xi1>
    %cst_161 = arith.constant 0xFF800000 : f32
    %602 = vector.shape_cast %601 : vector<16x1xi1> to vector<16x1xi1>
    %603 = vector.broadcast %602 : vector<16x1xi1> to vector<16x8xi1>
    %604 = vector.broadcast %cst_161 : f32 to vector<16x8xf32>
    %605 = arith.select %603, %567, %604 : vector<16x8xi1>, vector<16x8xf32>
    %cst_162 = arith.constant dense<0xFF800000> : vector<8xf32>
    %606 = vector.multi_reduction <maximumf>, %605, %cst_162 [0] : vector<16x8xf32> to vector<8xf32>
    %607 = vector.shape_cast %606 : vector<8xf32> to vector<1x8xf32>
    %608 = arith.cmpi sle, %596, %593 : i32
    %609 = arith.ori %568, %608 : i1
    %cst_163 = arith.constant 0.000000e+00 : f32
    %610 = vector.broadcast %cst_163 : f32 to vector<1x8xf32>
    %611 = arith.select %609, %610, %607 : vector<1x8xf32>
    %c22 = arith.constant 22 : index
    %c0_164 = arith.constant 0 : index
    %612 = vector.load %arg8[%c22, %c0_164] : memref<56x8xf32, #tpu.memory_space<vmem>>, vector<1x8xf32>
    tpu.vector_store %arg8[%c22, %c0_164], %611 {strides = array<i32>} : memref<56x8xf32, #tpu.memory_space<vmem>>, vector<1x8xf32>,
    %c2_i32_165 = arith.constant 2 : i32
    %613 = arith.addi %0, %c2_i32_165 : i32
    %614 = arith.index_cast %613 : i32 to index
    %615 = memref.load %arg4[%614] : memref<56xi32, #tpu.memory_space<smem>>
    %c2_i32_166 = arith.constant 2 : i32
    %616 = arith.addi %0, %c2_i32_166 : i32
    %617 = arith.index_cast %616 : i32 to index
    %618 = memref.load %arg5[%617] : memref<56xi32, #tpu.memory_space<smem>>
    %619 = vector.broadcast %615 : i32 to vector<16x1xi32>
    %620 = arith.cmpi sge, %2, %619 : vector<16x1xi32>
    %621 = vector.broadcast %618 : i32 to vector<16x1xi32>
    %622 = arith.cmpi slt, %2, %621 : vector<16x1xi32>
    %623 = arith.andi %620, %622 : vector<16x1xi1>
    %cst_167 = arith.constant 0xFF800000 : f32
    %624 = vector.shape_cast %623 : vector<16x1xi1> to vector<16x1xi1>
    %625 = vector.broadcast %624 : vector<16x1xi1> to vector<16x8xi1>
    %626 = vector.broadcast %cst_167 : f32 to vector<16x8xf32>
    %627 = arith.select %625, %567, %626 : vector<16x8xi1>, vector<16x8xf32>
    %cst_168 = arith.constant dense<0xFF800000> : vector<8xf32>
    %628 = vector.multi_reduction <maximumf>, %627, %cst_168 [0] : vector<16x8xf32> to vector<8xf32>
    %629 = vector.shape_cast %628 : vector<8xf32> to vector<1x8xf32>
    %630 = arith.cmpi sle, %618, %615 : i32
    %631 = arith.ori %568, %630 : i1
    %cst_169 = arith.constant 0.000000e+00 : f32
    %632 = vector.broadcast %cst_169 : f32 to vector<1x8xf32>
    %633 = arith.select %631, %632, %629 : vector<1x8xf32>
    %c23 = arith.constant 23 : index
    %c0_170 = arith.constant 0 : index
    %634 = vector.load %arg8[%c23, %c0_170] : memref<56x8xf32, #tpu.memory_space<vmem>>, vector<1x8xf32>
    tpu.vector_store %arg8[%c23, %c0_170], %633 {strides = array<i32>} : memref<56x8xf32, #tpu.memory_space<vmem>>, vector<1x8xf32>,
    %c3_i32_171 = arith.constant 3 : i32
    %635 = arith.addi %0, %c3_i32_171 : i32
    %636 = arith.index_cast %635 : i32 to index
    %637 = memref.load %arg4[%636] : memref<56xi32, #tpu.memory_space<smem>>
    %c3_i32_172 = arith.constant 3 : i32
    %638 = arith.addi %0, %c3_i32_172 : i32
    %639 = arith.index_cast %638 : i32 to index
    %640 = memref.load %arg5[%639] : memref<56xi32, #tpu.memory_space<smem>>
    %641 = vector.broadcast %637 : i32 to vector<16x1xi32>
    %642 = arith.cmpi sge, %2, %641 : vector<16x1xi32>
    %643 = vector.broadcast %640 : i32 to vector<16x1xi32>
    %644 = arith.cmpi slt, %2, %643 : vector<16x1xi32>
    %645 = arith.andi %642, %644 : vector<16x1xi1>
    %cst_173 = arith.constant 0xFF800000 : f32
    %646 = vector.shape_cast %645 : vector<16x1xi1> to vector<16x1xi1>
    %647 = vector.broadcast %646 : vector<16x1xi1> to vector<16x8xi1>
    %648 = vector.broadcast %cst_173 : f32 to vector<16x8xf32>
    %649 = arith.select %647, %567, %648 : vector<16x8xi1>, vector<16x8xf32>
    %cst_174 = arith.constant dense<0xFF800000> : vector<8xf32>
    %650 = vector.multi_reduction <maximumf>, %649, %cst_174 [0] : vector<16x8xf32> to vector<8xf32>
    %651 = vector.shape_cast %650 : vector<8xf32> to vector<1x8xf32>
    %652 = arith.cmpi sle, %640, %637 : i32
    %653 = arith.ori %568, %652 : i1
    %cst_175 = arith.constant 0.000000e+00 : f32
    %654 = vector.broadcast %cst_175 : f32 to vector<1x8xf32>
    %655 = arith.select %653, %654, %651 : vector<1x8xf32>
    %c24 = arith.constant 24 : index
    %c0_176 = arith.constant 0 : index
    %656 = vector.load %arg8[%c24, %c0_176] : memref<56x8xf32, #tpu.memory_space<vmem>>, vector<1x8xf32>
    tpu.vector_store %arg8[%c24, %c0_176], %655 {strides = array<i32>} : memref<56x8xf32, #tpu.memory_space<vmem>>, vector<1x8xf32>,
    %c4_i32_177 = arith.constant 4 : i32
    %657 = arith.addi %0, %c4_i32_177 : i32
    %658 = arith.index_cast %657 : i32 to index
    %659 = memref.load %arg4[%658] : memref<56xi32, #tpu.memory_space<smem>>
    %c4_i32_178 = arith.constant 4 : i32
    %660 = arith.addi %0, %c4_i32_178 : i32
    %661 = arith.index_cast %660 : i32 to index
    %662 = memref.load %arg5[%661] : memref<56xi32, #tpu.memory_space<smem>>
    %663 = vector.broadcast %659 : i32 to vector<16x1xi32>
    %664 = arith.cmpi sge, %2, %663 : vector<16x1xi32>
    %665 = vector.broadcast %662 : i32 to vector<16x1xi32>
    %666 = arith.cmpi slt, %2, %665 : vector<16x1xi32>
    %667 = arith.andi %664, %666 : vector<16x1xi1>
    %cst_179 = arith.constant 0xFF800000 : f32
    %668 = vector.shape_cast %667 : vector<16x1xi1> to vector<16x1xi1>
    %669 = vector.broadcast %668 : vector<16x1xi1> to vector<16x8xi1>
    %670 = vector.broadcast %cst_179 : f32 to vector<16x8xf32>
    %671 = arith.select %669, %567, %670 : vector<16x8xi1>, vector<16x8xf32>
    %cst_180 = arith.constant dense<0xFF800000> : vector<8xf32>
    %672 = vector.multi_reduction <maximumf>, %671, %cst_180 [0] : vector<16x8xf32> to vector<8xf32>
    %673 = vector.shape_cast %672 : vector<8xf32> to vector<1x8xf32>
    %674 = arith.cmpi sle, %662, %659 : i32
    %675 = arith.ori %568, %674 : i1
    %cst_181 = arith.constant 0.000000e+00 : f32
    %676 = vector.broadcast %cst_181 : f32 to vector<1x8xf32>
    %677 = arith.select %675, %676, %673 : vector<1x8xf32>
    %c25 = arith.constant 25 : index
    %c0_182 = arith.constant 0 : index
    %678 = vector.load %arg8[%c25, %c0_182] : memref<56x8xf32, #tpu.memory_space<vmem>>, vector<1x8xf32>
    tpu.vector_store %arg8[%c25, %c0_182], %677 {strides = array<i32>} : memref<56x8xf32, #tpu.memory_space<vmem>>, vector<1x8xf32>,
    %c5_i32_183 = arith.constant 5 : i32
    %679 = arith.addi %0, %c5_i32_183 : i32
    %680 = arith.index_cast %679 : i32 to index
    %681 = memref.load %arg4[%680] : memref<56xi32, #tpu.memory_space<smem>>
    %c5_i32_184 = arith.constant 5 : i32
    %682 = arith.addi %0, %c5_i32_184 : i32
    %683 = arith.index_cast %682 : i32 to index
    %684 = memref.load %arg5[%683] : memref<56xi32, #tpu.memory_space<smem>>
    %685 = vector.broadcast %681 : i32 to vector<16x1xi32>
    %686 = arith.cmpi sge, %2, %685 : vector<16x1xi32>
    %687 = vector.broadcast %684 : i32 to vector<16x1xi32>
    %688 = arith.cmpi slt, %2, %687 : vector<16x1xi32>
    %689 = arith.andi %686, %688 : vector<16x1xi1>
    %cst_185 = arith.constant 0xFF800000 : f32
    %690 = vector.shape_cast %689 : vector<16x1xi1> to vector<16x1xi1>
    %691 = vector.broadcast %690 : vector<16x1xi1> to vector<16x8xi1>
    %692 = vector.broadcast %cst_185 : f32 to vector<16x8xf32>
    %693 = arith.select %691, %567, %692 : vector<16x8xi1>, vector<16x8xf32>
    %cst_186 = arith.constant dense<0xFF800000> : vector<8xf32>
    %694 = vector.multi_reduction <maximumf>, %693, %cst_186 [0] : vector<16x8xf32> to vector<8xf32>
    %695 = vector.shape_cast %694 : vector<8xf32> to vector<1x8xf32>
    %696 = arith.cmpi sle, %684, %681 : i32
    %697 = arith.ori %568, %696 : i1
    %cst_187 = arith.constant 0.000000e+00 : f32
    %698 = vector.broadcast %cst_187 : f32 to vector<1x8xf32>
    %699 = arith.select %697, %698, %695 : vector<1x8xf32>
    %c26 = arith.constant 26 : index
    %c0_188 = arith.constant 0 : index
    %700 = vector.load %arg8[%c26, %c0_188] : memref<56x8xf32, #tpu.memory_space<vmem>>, vector<1x8xf32>
    tpu.vector_store %arg8[%c26, %c0_188], %699 {strides = array<i32>} : memref<56x8xf32, #tpu.memory_space<vmem>>, vector<1x8xf32>,
    %c6_i32_189 = arith.constant 6 : i32
    %701 = arith.addi %0, %c6_i32_189 : i32
    %702 = arith.index_cast %701 : i32 to index
    %703 = memref.load %arg4[%702] : memref<56xi32, #tpu.memory_space<smem>>
    %c6_i32_190 = arith.constant 6 : i32
    %704 = arith.addi %0, %c6_i32_190 : i32
    %705 = arith.index_cast %704 : i32 to index
    %706 = memref.load %arg5[%705] : memref<56xi32, #tpu.memory_space<smem>>
    %707 = vector.broadcast %703 : i32 to vector<16x1xi32>
    %708 = arith.cmpi sge, %2, %707 : vector<16x1xi32>
    %709 = vector.broadcast %706 : i32 to vector<16x1xi32>
    %710 = arith.cmpi slt, %2, %709 : vector<16x1xi32>
    %711 = arith.andi %708, %710 : vector<16x1xi1>
    %cst_191 = arith.constant 0xFF800000 : f32
    %712 = vector.shape_cast %711 : vector<16x1xi1> to vector<16x1xi1>
    %713 = vector.broadcast %712 : vector<16x1xi1> to vector<16x8xi1>
    %714 = vector.broadcast %cst_191 : f32 to vector<16x8xf32>
    %715 = arith.select %713, %567, %714 : vector<16x8xi1>, vector<16x8xf32>
    %cst_192 = arith.constant dense<0xFF800000> : vector<8xf32>
    %716 = vector.multi_reduction <maximumf>, %715, %cst_192 [0] : vector<16x8xf32> to vector<8xf32>
    %717 = vector.shape_cast %716 : vector<8xf32> to vector<1x8xf32>
    %718 = arith.cmpi sle, %706, %703 : i32
    %719 = arith.ori %568, %718 : i1
    %cst_193 = arith.constant 0.000000e+00 : f32
    %720 = vector.broadcast %cst_193 : f32 to vector<1x8xf32>
    %721 = arith.select %719, %720, %717 : vector<1x8xf32>
    %c27 = arith.constant 27 : index
    %c0_194 = arith.constant 0 : index
    %722 = vector.load %arg8[%c27, %c0_194] : memref<56x8xf32, #tpu.memory_space<vmem>>, vector<1x8xf32>
    tpu.vector_store %arg8[%c27, %c0_194], %721 {strides = array<i32>} : memref<56x8xf32, #tpu.memory_space<vmem>>, vector<1x8xf32>,
    %c4_i32_195 = arith.constant 4 : i32
    %723 = arith.addi %0, %c4_i32_195 : i32
    %724 = arith.index_cast %723 : i32 to index
    %725 = memref.load %arg2[%724] : memref<56xi32, #tpu.memory_space<smem>>
    %c4_i32_196 = arith.constant 4 : i32
    %726 = arith.addi %0, %c4_i32_196 : i32
    %727 = arith.index_cast %726 : i32 to index
    %728 = memref.load %arg3[%727] : memref<56xi32, #tpu.memory_space<smem>>
    %c0_i32_197 = arith.constant 0 : i32
    %c12_i32_198 = arith.constant 12 : i32
    %729 = arith.maxsi %c0_i32_197, %725 : i32
    %730 = arith.minsi %c12_i32_198, %729 : i32
    %c0_199 = arith.constant 0 : index
    %731 = arith.index_cast %730 : i32 to index
    %c0_200 = arith.constant 0 : index
    %c0_201 = arith.constant 0 : index
    %732 = vector.load %arg6[%c0_199, %731, %c0_200, %c0_201] : memref<1x16x16x8xf32, #tpu.memory_space<vmem>>, vector<1x4x16x8xf32>
    %733 = vector.shape_cast %732 : vector<1x4x16x8xf32> to vector<4x16x8xf32>
    %734 = vector.broadcast %730 : i32 to vector<4x1x1xi32>
    %735 = arith.addi %1, %734 : vector<4x1x1xi32>
    %736 = vector.broadcast %725 : i32 to vector<4x1x1xi32>
    %737 = arith.cmpi sge, %735, %736 : vector<4x1x1xi32>
    %738 = vector.broadcast %730 : i32 to vector<4x1x1xi32>
    %739 = arith.addi %1, %738 : vector<4x1x1xi32>
    %740 = vector.broadcast %728 : i32 to vector<4x1x1xi32>
    %741 = arith.cmpi slt, %739, %740 : vector<4x1x1xi32>
    %742 = arith.andi %737, %741 : vector<4x1x1xi1>
    %cst_202 = arith.constant 0xFF800000 : f32
    %743 = vector.shape_cast %742 : vector<4x1x1xi1> to vector<4x1x1xi1>
    %744 = vector.broadcast %743 : vector<4x1x1xi1> to vector<4x16x8xi1>
    %745 = vector.broadcast %cst_202 : f32 to vector<4x16x8xf32>
    %746 = arith.select %744, %733, %745 : vector<4x16x8xi1>, vector<4x16x8xf32>
    %cst_203 = arith.constant dense<0xFF800000> : vector<16x8xf32>
    %747 = vector.multi_reduction <maximumf>, %746, %cst_203 [0] : vector<4x16x8xf32> to vector<16x8xf32>
    %748 = arith.cmpi sle, %728, %725 : i32
    %c0_i32_204 = arith.constant 0 : i32
    %749 = arith.addi %0, %c0_i32_204 : i32
    %750 = arith.index_cast %749 : i32 to index
    %751 = memref.load %arg4[%750] : memref<56xi32, #tpu.memory_space<smem>>
    %c0_i32_205 = arith.constant 0 : i32
    %752 = arith.addi %0, %c0_i32_205 : i32
    %753 = arith.index_cast %752 : i32 to index
    %754 = memref.load %arg5[%753] : memref<56xi32, #tpu.memory_space<smem>>
    %755 = vector.broadcast %751 : i32 to vector<16x1xi32>
    %756 = arith.cmpi sge, %2, %755 : vector<16x1xi32>
    %757 = vector.broadcast %754 : i32 to vector<16x1xi32>
    %758 = arith.cmpi slt, %2, %757 : vector<16x1xi32>
    %759 = arith.andi %756, %758 : vector<16x1xi1>
    %cst_206 = arith.constant 0xFF800000 : f32
    %760 = vector.shape_cast %759 : vector<16x1xi1> to vector<16x1xi1>
    %761 = vector.broadcast %760 : vector<16x1xi1> to vector<16x8xi1>
    %762 = vector.broadcast %cst_206 : f32 to vector<16x8xf32>
    %763 = arith.select %761, %747, %762 : vector<16x8xi1>, vector<16x8xf32>
    %cst_207 = arith.constant dense<0xFF800000> : vector<8xf32>
    %764 = vector.multi_reduction <maximumf>, %763, %cst_207 [0] : vector<16x8xf32> to vector<8xf32>
    %765 = vector.shape_cast %764 : vector<8xf32> to vector<1x8xf32>
    %766 = arith.cmpi sle, %754, %751 : i32
    %767 = arith.ori %748, %766 : i1
    %cst_208 = arith.constant 0.000000e+00 : f32
    %768 = vector.broadcast %cst_208 : f32 to vector<1x8xf32>
    %769 = arith.select %767, %768, %765 : vector<1x8xf32>
    %c28 = arith.constant 28 : index
    %c0_209 = arith.constant 0 : index
    %770 = vector.load %arg8[%c28, %c0_209] : memref<56x8xf32, #tpu.memory_space<vmem>>, vector<1x8xf32>
    tpu.vector_store %arg8[%c28, %c0_209], %769 {strides = array<i32>} : memref<56x8xf32, #tpu.memory_space<vmem>>, vector<1x8xf32>,
    %c1_i32_210 = arith.constant 1 : i32
    %771 = arith.addi %0, %c1_i32_210 : i32
    %772 = arith.index_cast %771 : i32 to index
    %773 = memref.load %arg4[%772] : memref<56xi32, #tpu.memory_space<smem>>
    %c1_i32_211 = arith.constant 1 : i32
    %774 = arith.addi %0, %c1_i32_211 : i32
    %775 = arith.index_cast %774 : i32 to index
    %776 = memref.load %arg5[%775] : memref<56xi32, #tpu.memory_space<smem>>
    %777 = vector.broadcast %773 : i32 to vector<16x1xi32>
    %778 = arith.cmpi sge, %2, %777 : vector<16x1xi32>
    %779 = vector.broadcast %776 : i32 to vector<16x1xi32>
    %780 = arith.cmpi slt, %2, %779 : vector<16x1xi32>
    %781 = arith.andi %778, %780 : vector<16x1xi1>
    %cst_212 = arith.constant 0xFF800000 : f32
    %782 = vector.shape_cast %781 : vector<16x1xi1> to vector<16x1xi1>
    %783 = vector.broadcast %782 : vector<16x1xi1> to vector<16x8xi1>
    %784 = vector.broadcast %cst_212 : f32 to vector<16x8xf32>
    %785 = arith.select %783, %747, %784 : vector<16x8xi1>, vector<16x8xf32>
    %cst_213 = arith.constant dense<0xFF800000> : vector<8xf32>
    %786 = vector.multi_reduction <maximumf>, %785, %cst_213 [0] : vector<16x8xf32> to vector<8xf32>
    %787 = vector.shape_cast %786 : vector<8xf32> to vector<1x8xf32>
    %788 = arith.cmpi sle, %776, %773 : i32
    %789 = arith.ori %748, %788 : i1
    %cst_214 = arith.constant 0.000000e+00 : f32
    %790 = vector.broadcast %cst_214 : f32 to vector<1x8xf32>
    %791 = arith.select %789, %790, %787 : vector<1x8xf32>
    %c29 = arith.constant 29 : index
    %c0_215 = arith.constant 0 : index
    %792 = vector.load %arg8[%c29, %c0_215] : memref<56x8xf32, #tpu.memory_space<vmem>>, vector<1x8xf32>
    tpu.vector_store %arg8[%c29, %c0_215], %791 {strides = array<i32>} : memref<56x8xf32, #tpu.memory_space<vmem>>, vector<1x8xf32>,
    %c2_i32_216 = arith.constant 2 : i32
    %793 = arith.addi %0, %c2_i32_216 : i32
    %794 = arith.index_cast %793 : i32 to index
    %795 = memref.load %arg4[%794] : memref<56xi32, #tpu.memory_space<smem>>
    %c2_i32_217 = arith.constant 2 : i32
    %796 = arith.addi %0, %c2_i32_217 : i32
    %797 = arith.index_cast %796 : i32 to index
    %798 = memref.load %arg5[%797] : memref<56xi32, #tpu.memory_space<smem>>
    %799 = vector.broadcast %795 : i32 to vector<16x1xi32>
    %800 = arith.cmpi sge, %2, %799 : vector<16x1xi32>
    %801 = vector.broadcast %798 : i32 to vector<16x1xi32>
    %802 = arith.cmpi slt, %2, %801 : vector<16x1xi32>
    %803 = arith.andi %800, %802 : vector<16x1xi1>
    %cst_218 = arith.constant 0xFF800000 : f32
    %804 = vector.shape_cast %803 : vector<16x1xi1> to vector<16x1xi1>
    %805 = vector.broadcast %804 : vector<16x1xi1> to vector<16x8xi1>
    %806 = vector.broadcast %cst_218 : f32 to vector<16x8xf32>
    %807 = arith.select %805, %747, %806 : vector<16x8xi1>, vector<16x8xf32>
    %cst_219 = arith.constant dense<0xFF800000> : vector<8xf32>
    %808 = vector.multi_reduction <maximumf>, %807, %cst_219 [0] : vector<16x8xf32> to vector<8xf32>
    %809 = vector.shape_cast %808 : vector<8xf32> to vector<1x8xf32>
    %810 = arith.cmpi sle, %798, %795 : i32
    %811 = arith.ori %748, %810 : i1
    %cst_220 = arith.constant 0.000000e+00 : f32
    %812 = vector.broadcast %cst_220 : f32 to vector<1x8xf32>
    %813 = arith.select %811, %812, %809 : vector<1x8xf32>
    %c30 = arith.constant 30 : index
    %c0_221 = arith.constant 0 : index
    %814 = vector.load %arg8[%c30, %c0_221] : memref<56x8xf32, #tpu.memory_space<vmem>>, vector<1x8xf32>
    tpu.vector_store %arg8[%c30, %c0_221], %813 {strides = array<i32>} : memref<56x8xf32, #tpu.memory_space<vmem>>, vector<1x8xf32>,
    %c3_i32_222 = arith.constant 3 : i32
    %815 = arith.addi %0, %c3_i32_222 : i32
    %816 = arith.index_cast %815 : i32 to index
    %817 = memref.load %arg4[%816] : memref<56xi32, #tpu.memory_space<smem>>
    %c3_i32_223 = arith.constant 3 : i32
    %818 = arith.addi %0, %c3_i32_223 : i32
    %819 = arith.index_cast %818 : i32 to index
    %820 = memref.load %arg5[%819] : memref<56xi32, #tpu.memory_space<smem>>
    %821 = vector.broadcast %817 : i32 to vector<16x1xi32>
    %822 = arith.cmpi sge, %2, %821 : vector<16x1xi32>
    %823 = vector.broadcast %820 : i32 to vector<16x1xi32>
    %824 = arith.cmpi slt, %2, %823 : vector<16x1xi32>
    %825 = arith.andi %822, %824 : vector<16x1xi1>
    %cst_224 = arith.constant 0xFF800000 : f32
    %826 = vector.shape_cast %825 : vector<16x1xi1> to vector<16x1xi1>
    %827 = vector.broadcast %826 : vector<16x1xi1> to vector<16x8xi1>
    %828 = vector.broadcast %cst_224 : f32 to vector<16x8xf32>
    %829 = arith.select %827, %747, %828 : vector<16x8xi1>, vector<16x8xf32>
    %cst_225 = arith.constant dense<0xFF800000> : vector<8xf32>
    %830 = vector.multi_reduction <maximumf>, %829, %cst_225 [0] : vector<16x8xf32> to vector<8xf32>
    %831 = vector.shape_cast %830 : vector<8xf32> to vector<1x8xf32>
    %832 = arith.cmpi sle, %820, %817 : i32
    %833 = arith.ori %748, %832 : i1
    %cst_226 = arith.constant 0.000000e+00 : f32
    %834 = vector.broadcast %cst_226 : f32 to vector<1x8xf32>
    %835 = arith.select %833, %834, %831 : vector<1x8xf32>
    %c31 = arith.constant 31 : index
    %c0_227 = arith.constant 0 : index
    %836 = vector.load %arg8[%c31, %c0_227] : memref<56x8xf32, #tpu.memory_space<vmem>>, vector<1x8xf32>
    tpu.vector_store %arg8[%c31, %c0_227], %835 {strides = array<i32>} : memref<56x8xf32, #tpu.memory_space<vmem>>, vector<1x8xf32>,
    %c4_i32_228 = arith.constant 4 : i32
    %837 = arith.addi %0, %c4_i32_228 : i32
    %838 = arith.index_cast %837 : i32 to index
    %839 = memref.load %arg4[%838] : memref<56xi32, #tpu.memory_space<smem>>
    %c4_i32_229 = arith.constant 4 : i32
    %840 = arith.addi %0, %c4_i32_229 : i32
    %841 = arith.index_cast %840 : i32 to index
    %842 = memref.load %arg5[%841] : memref<56xi32, #tpu.memory_space<smem>>
    %843 = vector.broadcast %839 : i32 to vector<16x1xi32>
    %844 = arith.cmpi sge, %2, %843 : vector<16x1xi32>
    %845 = vector.broadcast %842 : i32 to vector<16x1xi32>
    %846 = arith.cmpi slt, %2, %845 : vector<16x1xi32>
    %847 = arith.andi %844, %846 : vector<16x1xi1>
    %cst_230 = arith.constant 0xFF800000 : f32
    %848 = vector.shape_cast %847 : vector<16x1xi1> to vector<16x1xi1>
    %849 = vector.broadcast %848 : vector<16x1xi1> to vector<16x8xi1>
    %850 = vector.broadcast %cst_230 : f32 to vector<16x8xf32>
    %851 = arith.select %849, %747, %850 : vector<16x8xi1>, vector<16x8xf32>
    %cst_231 = arith.constant dense<0xFF800000> : vector<8xf32>
    %852 = vector.multi_reduction <maximumf>, %851, %cst_231 [0] : vector<16x8xf32> to vector<8xf32>
    %853 = vector.shape_cast %852 : vector<8xf32> to vector<1x8xf32>
    %854 = arith.cmpi sle, %842, %839 : i32
    %855 = arith.ori %748, %854 : i1
    %cst_232 = arith.constant 0.000000e+00 : f32
    %856 = vector.broadcast %cst_232 : f32 to vector<1x8xf32>
    %857 = arith.select %855, %856, %853 : vector<1x8xf32>
    %c32 = arith.constant 32 : index
    %c0_233 = arith.constant 0 : index
    %858 = vector.load %arg8[%c32, %c0_233] : memref<56x8xf32, #tpu.memory_space<vmem>>, vector<1x8xf32>
    tpu.vector_store %arg8[%c32, %c0_233], %857 {strides = array<i32>} : memref<56x8xf32, #tpu.memory_space<vmem>>, vector<1x8xf32>,
    %c5_i32_234 = arith.constant 5 : i32
    %859 = arith.addi %0, %c5_i32_234 : i32
    %860 = arith.index_cast %859 : i32 to index
    %861 = memref.load %arg4[%860] : memref<56xi32, #tpu.memory_space<smem>>
    %c5_i32_235 = arith.constant 5 : i32
    %862 = arith.addi %0, %c5_i32_235 : i32
    %863 = arith.index_cast %862 : i32 to index
    %864 = memref.load %arg5[%863] : memref<56xi32, #tpu.memory_space<smem>>
    %865 = vector.broadcast %861 : i32 to vector<16x1xi32>
    %866 = arith.cmpi sge, %2, %865 : vector<16x1xi32>
    %867 = vector.broadcast %864 : i32 to vector<16x1xi32>
    %868 = arith.cmpi slt, %2, %867 : vector<16x1xi32>
    %869 = arith.andi %866, %868 : vector<16x1xi1>
    %cst_236 = arith.constant 0xFF800000 : f32
    %870 = vector.shape_cast %869 : vector<16x1xi1> to vector<16x1xi1>
    %871 = vector.broadcast %870 : vector<16x1xi1> to vector<16x8xi1>
    %872 = vector.broadcast %cst_236 : f32 to vector<16x8xf32>
    %873 = arith.select %871, %747, %872 : vector<16x8xi1>, vector<16x8xf32>
    %cst_237 = arith.constant dense<0xFF800000> : vector<8xf32>
    %874 = vector.multi_reduction <maximumf>, %873, %cst_237 [0] : vector<16x8xf32> to vector<8xf32>
    %875 = vector.shape_cast %874 : vector<8xf32> to vector<1x8xf32>
    %876 = arith.cmpi sle, %864, %861 : i32
    %877 = arith.ori %748, %876 : i1
    %cst_238 = arith.constant 0.000000e+00 : f32
    %878 = vector.broadcast %cst_238 : f32 to vector<1x8xf32>
    %879 = arith.select %877, %878, %875 : vector<1x8xf32>
    %c33 = arith.constant 33 : index
    %c0_239 = arith.constant 0 : index
    %880 = vector.load %arg8[%c33, %c0_239] : memref<56x8xf32, #tpu.memory_space<vmem>>, vector<1x8xf32>
    tpu.vector_store %arg8[%c33, %c0_239], %879 {strides = array<i32>} : memref<56x8xf32, #tpu.memory_space<vmem>>, vector<1x8xf32>,
    %c6_i32_240 = arith.constant 6 : i32
    %881 = arith.addi %0, %c6_i32_240 : i32
    %882 = arith.index_cast %881 : i32 to index
    %883 = memref.load %arg4[%882] : memref<56xi32, #tpu.memory_space<smem>>
    %c6_i32_241 = arith.constant 6 : i32
    %884 = arith.addi %0, %c6_i32_241 : i32
    %885 = arith.index_cast %884 : i32 to index
    %886 = memref.load %arg5[%885] : memref<56xi32, #tpu.memory_space<smem>>
    %887 = vector.broadcast %883 : i32 to vector<16x1xi32>
    %888 = arith.cmpi sge, %2, %887 : vector<16x1xi32>
    %889 = vector.broadcast %886 : i32 to vector<16x1xi32>
    %890 = arith.cmpi slt, %2, %889 : vector<16x1xi32>
    %891 = arith.andi %888, %890 : vector<16x1xi1>
    %cst_242 = arith.constant 0xFF800000 : f32
    %892 = vector.shape_cast %891 : vector<16x1xi1> to vector<16x1xi1>
    %893 = vector.broadcast %892 : vector<16x1xi1> to vector<16x8xi1>
    %894 = vector.broadcast %cst_242 : f32 to vector<16x8xf32>
    %895 = arith.select %893, %747, %894 : vector<16x8xi1>, vector<16x8xf32>
    %cst_243 = arith.constant dense<0xFF800000> : vector<8xf32>
    %896 = vector.multi_reduction <maximumf>, %895, %cst_243 [0] : vector<16x8xf32> to vector<8xf32>
    %897 = vector.shape_cast %896 : vector<8xf32> to vector<1x8xf32>
    %898 = arith.cmpi sle, %886, %883 : i32
    %899 = arith.ori %748, %898 : i1
    %cst_244 = arith.constant 0.000000e+00 : f32
    %900 = vector.broadcast %cst_244 : f32 to vector<1x8xf32>
    %901 = arith.select %899, %900, %897 : vector<1x8xf32>
    %c34 = arith.constant 34 : index
    %c0_245 = arith.constant 0 : index
    %902 = vector.load %arg8[%c34, %c0_245] : memref<56x8xf32, #tpu.memory_space<vmem>>, vector<1x8xf32>
    tpu.vector_store %arg8[%c34, %c0_245], %901 {strides = array<i32>} : memref<56x8xf32, #tpu.memory_space<vmem>>, vector<1x8xf32>,
    %c5_i32_246 = arith.constant 5 : i32
    %903 = arith.addi %0, %c5_i32_246 : i32
    %904 = arith.index_cast %903 : i32 to index
    %905 = memref.load %arg2[%904] : memref<56xi32, #tpu.memory_space<smem>>
    %c5_i32_247 = arith.constant 5 : i32
    %906 = arith.addi %0, %c5_i32_247 : i32
    %907 = arith.index_cast %906 : i32 to index
    %908 = memref.load %arg3[%907] : memref<56xi32, #tpu.memory_space<smem>>
    %c0_i32_248 = arith.constant 0 : i32
    %c12_i32_249 = arith.constant 12 : i32
    %909 = arith.maxsi %c0_i32_248, %905 : i32
    %910 = arith.minsi %c12_i32_249, %909 : i32
    %c0_250 = arith.constant 0 : index
    %911 = arith.index_cast %910 : i32 to index
    %c0_251 = arith.constant 0 : index
    %c0_252 = arith.constant 0 : index
    %912 = vector.load %arg6[%c0_250, %911, %c0_251, %c0_252] : memref<1x16x16x8xf32, #tpu.memory_space<vmem>>, vector<1x4x16x8xf32>
    %913 = vector.shape_cast %912 : vector<1x4x16x8xf32> to vector<4x16x8xf32>
    %914 = vector.broadcast %910 : i32 to vector<4x1x1xi32>
    %915 = arith.addi %1, %914 : vector<4x1x1xi32>
    %916 = vector.broadcast %905 : i32 to vector<4x1x1xi32>
    %917 = arith.cmpi sge, %915, %916 : vector<4x1x1xi32>
    %918 = vector.broadcast %910 : i32 to vector<4x1x1xi32>
    %919 = arith.addi %1, %918 : vector<4x1x1xi32>
    %920 = vector.broadcast %908 : i32 to vector<4x1x1xi32>
    %921 = arith.cmpi slt, %919, %920 : vector<4x1x1xi32>
    %922 = arith.andi %917, %921 : vector<4x1x1xi1>
    %cst_253 = arith.constant 0xFF800000 : f32
    %923 = vector.shape_cast %922 : vector<4x1x1xi1> to vector<4x1x1xi1>
    %924 = vector.broadcast %923 : vector<4x1x1xi1> to vector<4x16x8xi1>
    %925 = vector.broadcast %cst_253 : f32 to vector<4x16x8xf32>
    %926 = arith.select %924, %913, %925 : vector<4x16x8xi1>, vector<4x16x8xf32>
    %cst_254 = arith.constant dense<0xFF800000> : vector<16x8xf32>
    %927 = vector.multi_reduction <maximumf>, %926, %cst_254 [0] : vector<4x16x8xf32> to vector<16x8xf32>
    %928 = arith.cmpi sle, %908, %905 : i32
    %c0_i32_255 = arith.constant 0 : i32
    %929 = arith.addi %0, %c0_i32_255 : i32
    %930 = arith.index_cast %929 : i32 to index
    %931 = memref.load %arg4[%930] : memref<56xi32, #tpu.memory_space<smem>>
    %c0_i32_256 = arith.constant 0 : i32
    %932 = arith.addi %0, %c0_i32_256 : i32
    %933 = arith.index_cast %932 : i32 to index
    %934 = memref.load %arg5[%933] : memref<56xi32, #tpu.memory_space<smem>>
    %935 = vector.broadcast %931 : i32 to vector<16x1xi32>
    %936 = arith.cmpi sge, %2, %935 : vector<16x1xi32>
    %937 = vector.broadcast %934 : i32 to vector<16x1xi32>
    %938 = arith.cmpi slt, %2, %937 : vector<16x1xi32>
    %939 = arith.andi %936, %938 : vector<16x1xi1>
    %cst_257 = arith.constant 0xFF800000 : f32
    %940 = vector.shape_cast %939 : vector<16x1xi1> to vector<16x1xi1>
    %941 = vector.broadcast %940 : vector<16x1xi1> to vector<16x8xi1>
    %942 = vector.broadcast %cst_257 : f32 to vector<16x8xf32>
    %943 = arith.select %941, %927, %942 : vector<16x8xi1>, vector<16x8xf32>
    %cst_258 = arith.constant dense<0xFF800000> : vector<8xf32>
    %944 = vector.multi_reduction <maximumf>, %943, %cst_258 [0] : vector<16x8xf32> to vector<8xf32>
    %945 = vector.shape_cast %944 : vector<8xf32> to vector<1x8xf32>
    %946 = arith.cmpi sle, %934, %931 : i32
    %947 = arith.ori %928, %946 : i1
    %cst_259 = arith.constant 0.000000e+00 : f32
    %948 = vector.broadcast %cst_259 : f32 to vector<1x8xf32>
    %949 = arith.select %947, %948, %945 : vector<1x8xf32>
    %c35 = arith.constant 35 : index
    %c0_260 = arith.constant 0 : index
    %950 = vector.load %arg8[%c35, %c0_260] : memref<56x8xf32, #tpu.memory_space<vmem>>, vector<1x8xf32>
    tpu.vector_store %arg8[%c35, %c0_260], %949 {strides = array<i32>} : memref<56x8xf32, #tpu.memory_space<vmem>>, vector<1x8xf32>,
    %c1_i32_261 = arith.constant 1 : i32
    %951 = arith.addi %0, %c1_i32_261 : i32
    %952 = arith.index_cast %951 : i32 to index
    %953 = memref.load %arg4[%952] : memref<56xi32, #tpu.memory_space<smem>>
    %c1_i32_262 = arith.constant 1 : i32
    %954 = arith.addi %0, %c1_i32_262 : i32
    %955 = arith.index_cast %954 : i32 to index
    %956 = memref.load %arg5[%955] : memref<56xi32, #tpu.memory_space<smem>>
    %957 = vector.broadcast %953 : i32 to vector<16x1xi32>
    %958 = arith.cmpi sge, %2, %957 : vector<16x1xi32>
    %959 = vector.broadcast %956 : i32 to vector<16x1xi32>
    %960 = arith.cmpi slt, %2, %959 : vector<16x1xi32>
    %961 = arith.andi %958, %960 : vector<16x1xi1>
    %cst_263 = arith.constant 0xFF800000 : f32
    %962 = vector.shape_cast %961 : vector<16x1xi1> to vector<16x1xi1>
    %963 = vector.broadcast %962 : vector<16x1xi1> to vector<16x8xi1>
    %964 = vector.broadcast %cst_263 : f32 to vector<16x8xf32>
    %965 = arith.select %963, %927, %964 : vector<16x8xi1>, vector<16x8xf32>
    %cst_264 = arith.constant dense<0xFF800000> : vector<8xf32>
    %966 = vector.multi_reduction <maximumf>, %965, %cst_264 [0] : vector<16x8xf32> to vector<8xf32>
    %967 = vector.shape_cast %966 : vector<8xf32> to vector<1x8xf32>
    %968 = arith.cmpi sle, %956, %953 : i32
    %969 = arith.ori %928, %968 : i1
    %cst_265 = arith.constant 0.000000e+00 : f32
    %970 = vector.broadcast %cst_265 : f32 to vector<1x8xf32>
    %971 = arith.select %969, %970, %967 : vector<1x8xf32>
    %c36 = arith.constant 36 : index
    %c0_266 = arith.constant 0 : index
    %972 = vector.load %arg8[%c36, %c0_266] : memref<56x8xf32, #tpu.memory_space<vmem>>, vector<1x8xf32>
    tpu.vector_store %arg8[%c36, %c0_266], %971 {strides = array<i32>} : memref<56x8xf32, #tpu.memory_space<vmem>>, vector<1x8xf32>,
    %c2_i32_267 = arith.constant 2 : i32
    %973 = arith.addi %0, %c2_i32_267 : i32
    %974 = arith.index_cast %973 : i32 to index
    %975 = memref.load %arg4[%974] : memref<56xi32, #tpu.memory_space<smem>>
    %c2_i32_268 = arith.constant 2 : i32
    %976 = arith.addi %0, %c2_i32_268 : i32
    %977 = arith.index_cast %976 : i32 to index
    %978 = memref.load %arg5[%977] : memref<56xi32, #tpu.memory_space<smem>>
    %979 = vector.broadcast %975 : i32 to vector<16x1xi32>
    %980 = arith.cmpi sge, %2, %979 : vector<16x1xi32>
    %981 = vector.broadcast %978 : i32 to vector<16x1xi32>
    %982 = arith.cmpi slt, %2, %981 : vector<16x1xi32>
    %983 = arith.andi %980, %982 : vector<16x1xi1>
    %cst_269 = arith.constant 0xFF800000 : f32
    %984 = vector.shape_cast %983 : vector<16x1xi1> to vector<16x1xi1>
    %985 = vector.broadcast %984 : vector<16x1xi1> to vector<16x8xi1>
    %986 = vector.broadcast %cst_269 : f32 to vector<16x8xf32>
    %987 = arith.select %985, %927, %986 : vector<16x8xi1>, vector<16x8xf32>
    %cst_270 = arith.constant dense<0xFF800000> : vector<8xf32>
    %988 = vector.multi_reduction <maximumf>, %987, %cst_270 [0] : vector<16x8xf32> to vector<8xf32>
    %989 = vector.shape_cast %988 : vector<8xf32> to vector<1x8xf32>
    %990 = arith.cmpi sle, %978, %975 : i32
    %991 = arith.ori %928, %990 : i1
    %cst_271 = arith.constant 0.000000e+00 : f32
    %992 = vector.broadcast %cst_271 : f32 to vector<1x8xf32>
    %993 = arith.select %991, %992, %989 : vector<1x8xf32>
    %c37 = arith.constant 37 : index
    %c0_272 = arith.constant 0 : index
    %994 = vector.load %arg8[%c37, %c0_272] : memref<56x8xf32, #tpu.memory_space<vmem>>, vector<1x8xf32>
    tpu.vector_store %arg8[%c37, %c0_272], %993 {strides = array<i32>} : memref<56x8xf32, #tpu.memory_space<vmem>>, vector<1x8xf32>,
    %c3_i32_273 = arith.constant 3 : i32
    %995 = arith.addi %0, %c3_i32_273 : i32
    %996 = arith.index_cast %995 : i32 to index
    %997 = memref.load %arg4[%996] : memref<56xi32, #tpu.memory_space<smem>>
    %c3_i32_274 = arith.constant 3 : i32
    %998 = arith.addi %0, %c3_i32_274 : i32
    %999 = arith.index_cast %998 : i32 to index
    %1000 = memref.load %arg5[%999] : memref<56xi32, #tpu.memory_space<smem>>
    %1001 = vector.broadcast %997 : i32 to vector<16x1xi32>
    %1002 = arith.cmpi sge, %2, %1001 : vector<16x1xi32>
    %1003 = vector.broadcast %1000 : i32 to vector<16x1xi32>
    %1004 = arith.cmpi slt, %2, %1003 : vector<16x1xi32>
    %1005 = arith.andi %1002, %1004 : vector<16x1xi1>
    %cst_275 = arith.constant 0xFF800000 : f32
    %1006 = vector.shape_cast %1005 : vector<16x1xi1> to vector<16x1xi1>
    %1007 = vector.broadcast %1006 : vector<16x1xi1> to vector<16x8xi1>
    %1008 = vector.broadcast %cst_275 : f32 to vector<16x8xf32>
    %1009 = arith.select %1007, %927, %1008 : vector<16x8xi1>, vector<16x8xf32>
    %cst_276 = arith.constant dense<0xFF800000> : vector<8xf32>
    %1010 = vector.multi_reduction <maximumf>, %1009, %cst_276 [0] : vector<16x8xf32> to vector<8xf32>
    %1011 = vector.shape_cast %1010 : vector<8xf32> to vector<1x8xf32>
    %1012 = arith.cmpi sle, %1000, %997 : i32
    %1013 = arith.ori %928, %1012 : i1
    %cst_277 = arith.constant 0.000000e+00 : f32
    %1014 = vector.broadcast %cst_277 : f32 to vector<1x8xf32>
    %1015 = arith.select %1013, %1014, %1011 : vector<1x8xf32>
    %c38 = arith.constant 38 : index
    %c0_278 = arith.constant 0 : index
    %1016 = vector.load %arg8[%c38, %c0_278] : memref<56x8xf32, #tpu.memory_space<vmem>>, vector<1x8xf32>
    tpu.vector_store %arg8[%c38, %c0_278], %1015 {strides = array<i32>} : memref<56x8xf32, #tpu.memory_space<vmem>>, vector<1x8xf32>,
    %c4_i32_279 = arith.constant 4 : i32
    %1017 = arith.addi %0, %c4_i32_279 : i32
    %1018 = arith.index_cast %1017 : i32 to index
    %1019 = memref.load %arg4[%1018] : memref<56xi32, #tpu.memory_space<smem>>
    %c4_i32_280 = arith.constant 4 : i32
    %1020 = arith.addi %0, %c4_i32_280 : i32
    %1021 = arith.index_cast %1020 : i32 to index
    %1022 = memref.load %arg5[%1021] : memref<56xi32, #tpu.memory_space<smem>>
    %1023 = vector.broadcast %1019 : i32 to vector<16x1xi32>
    %1024 = arith.cmpi sge, %2, %1023 : vector<16x1xi32>
    %1025 = vector.broadcast %1022 : i32 to vector<16x1xi32>
    %1026 = arith.cmpi slt, %2, %1025 : vector<16x1xi32>
    %1027 = arith.andi %1024, %1026 : vector<16x1xi1>
    %cst_281 = arith.constant 0xFF800000 : f32
    %1028 = vector.shape_cast %1027 : vector<16x1xi1> to vector<16x1xi1>
    %1029 = vector.broadcast %1028 : vector<16x1xi1> to vector<16x8xi1>
    %1030 = vector.broadcast %cst_281 : f32 to vector<16x8xf32>
    %1031 = arith.select %1029, %927, %1030 : vector<16x8xi1>, vector<16x8xf32>
    %cst_282 = arith.constant dense<0xFF800000> : vector<8xf32>
    %1032 = vector.multi_reduction <maximumf>, %1031, %cst_282 [0] : vector<16x8xf32> to vector<8xf32>
    %1033 = vector.shape_cast %1032 : vector<8xf32> to vector<1x8xf32>
    %1034 = arith.cmpi sle, %1022, %1019 : i32
    %1035 = arith.ori %928, %1034 : i1
    %cst_283 = arith.constant 0.000000e+00 : f32
    %1036 = vector.broadcast %cst_283 : f32 to vector<1x8xf32>
    %1037 = arith.select %1035, %1036, %1033 : vector<1x8xf32>
    %c39 = arith.constant 39 : index
    %c0_284 = arith.constant 0 : index
    %1038 = vector.load %arg8[%c39, %c0_284] : memref<56x8xf32, #tpu.memory_space<vmem>>, vector<1x8xf32>
    tpu.vector_store %arg8[%c39, %c0_284], %1037 {strides = array<i32>} : memref<56x8xf32, #tpu.memory_space<vmem>>, vector<1x8xf32>,
    %c5_i32_285 = arith.constant 5 : i32
    %1039 = arith.addi %0, %c5_i32_285 : i32
    %1040 = arith.index_cast %1039 : i32 to index
    %1041 = memref.load %arg4[%1040] : memref<56xi32, #tpu.memory_space<smem>>
    %c5_i32_286 = arith.constant 5 : i32
    %1042 = arith.addi %0, %c5_i32_286 : i32
    %1043 = arith.index_cast %1042 : i32 to index
    %1044 = memref.load %arg5[%1043] : memref<56xi32, #tpu.memory_space<smem>>
    %1045 = vector.broadcast %1041 : i32 to vector<16x1xi32>
    %1046 = arith.cmpi sge, %2, %1045 : vector<16x1xi32>
    %1047 = vector.broadcast %1044 : i32 to vector<16x1xi32>
    %1048 = arith.cmpi slt, %2, %1047 : vector<16x1xi32>
    %1049 = arith.andi %1046, %1048 : vector<16x1xi1>
    %cst_287 = arith.constant 0xFF800000 : f32
    %1050 = vector.shape_cast %1049 : vector<16x1xi1> to vector<16x1xi1>
    %1051 = vector.broadcast %1050 : vector<16x1xi1> to vector<16x8xi1>
    %1052 = vector.broadcast %cst_287 : f32 to vector<16x8xf32>
    %1053 = arith.select %1051, %927, %1052 : vector<16x8xi1>, vector<16x8xf32>
    %cst_288 = arith.constant dense<0xFF800000> : vector<8xf32>
    %1054 = vector.multi_reduction <maximumf>, %1053, %cst_288 [0] : vector<16x8xf32> to vector<8xf32>
    %1055 = vector.shape_cast %1054 : vector<8xf32> to vector<1x8xf32>
    %1056 = arith.cmpi sle, %1044, %1041 : i32
    %1057 = arith.ori %928, %1056 : i1
    %cst_289 = arith.constant 0.000000e+00 : f32
    %1058 = vector.broadcast %cst_289 : f32 to vector<1x8xf32>
    %1059 = arith.select %1057, %1058, %1055 : vector<1x8xf32>
    %c40 = arith.constant 40 : index
    %c0_290 = arith.constant 0 : index
    %1060 = vector.load %arg8[%c40, %c0_290] : memref<56x8xf32, #tpu.memory_space<vmem>>, vector<1x8xf32>
    tpu.vector_store %arg8[%c40, %c0_290], %1059 {strides = array<i32>} : memref<56x8xf32, #tpu.memory_space<vmem>>, vector<1x8xf32>,
    %c6_i32_291 = arith.constant 6 : i32
    %1061 = arith.addi %0, %c6_i32_291 : i32
    %1062 = arith.index_cast %1061 : i32 to index
    %1063 = memref.load %arg4[%1062] : memref<56xi32, #tpu.memory_space<smem>>
    %c6_i32_292 = arith.constant 6 : i32
    %1064 = arith.addi %0, %c6_i32_292 : i32
    %1065 = arith.index_cast %1064 : i32 to index
    %1066 = memref.load %arg5[%1065] : memref<56xi32, #tpu.memory_space<smem>>
    %1067 = vector.broadcast %1063 : i32 to vector<16x1xi32>
    %1068 = arith.cmpi sge, %2, %1067 : vector<16x1xi32>
    %1069 = vector.broadcast %1066 : i32 to vector<16x1xi32>
    %1070 = arith.cmpi slt, %2, %1069 : vector<16x1xi32>
    %1071 = arith.andi %1068, %1070 : vector<16x1xi1>
    %cst_293 = arith.constant 0xFF800000 : f32
    %1072 = vector.shape_cast %1071 : vector<16x1xi1> to vector<16x1xi1>
    %1073 = vector.broadcast %1072 : vector<16x1xi1> to vector<16x8xi1>
    %1074 = vector.broadcast %cst_293 : f32 to vector<16x8xf32>
    %1075 = arith.select %1073, %927, %1074 : vector<16x8xi1>, vector<16x8xf32>
    %cst_294 = arith.constant dense<0xFF800000> : vector<8xf32>
    %1076 = vector.multi_reduction <maximumf>, %1075, %cst_294 [0] : vector<16x8xf32> to vector<8xf32>
    %1077 = vector.shape_cast %1076 : vector<8xf32> to vector<1x8xf32>
    %1078 = arith.cmpi sle, %1066, %1063 : i32
    %1079 = arith.ori %928, %1078 : i1
    %cst_295 = arith.constant 0.000000e+00 : f32
    %1080 = vector.broadcast %cst_295 : f32 to vector<1x8xf32>
    %1081 = arith.select %1079, %1080, %1077 : vector<1x8xf32>
    %c41 = arith.constant 41 : index
    %c0_296 = arith.constant 0 : index
    %1082 = vector.load %arg8[%c41, %c0_296] : memref<56x8xf32, #tpu.memory_space<vmem>>, vector<1x8xf32>
    tpu.vector_store %arg8[%c41, %c0_296], %1081 {strides = array<i32>} : memref<56x8xf32, #tpu.memory_space<vmem>>, vector<1x8xf32>,
    %c6_i32_297 = arith.constant 6 : i32
    %1083 = arith.addi %0, %c6_i32_297 : i32
    %1084 = arith.index_cast %1083 : i32 to index
    %1085 = memref.load %arg2[%1084] : memref<56xi32, #tpu.memory_space<smem>>
    %c6_i32_298 = arith.constant 6 : i32
    %1086 = arith.addi %0, %c6_i32_298 : i32
    %1087 = arith.index_cast %1086 : i32 to index
    %1088 = memref.load %arg3[%1087] : memref<56xi32, #tpu.memory_space<smem>>
    %c0_i32_299 = arith.constant 0 : i32
    %c12_i32_300 = arith.constant 12 : i32
    %1089 = arith.maxsi %c0_i32_299, %1085 : i32
    %1090 = arith.minsi %c12_i32_300, %1089 : i32
    %c0_301 = arith.constant 0 : index
    %1091 = arith.index_cast %1090 : i32 to index
    %c0_302 = arith.constant 0 : index
    %c0_303 = arith.constant 0 : index
    %1092 = vector.load %arg6[%c0_301, %1091, %c0_302, %c0_303] : memref<1x16x16x8xf32, #tpu.memory_space<vmem>>, vector<1x4x16x8xf32>
    %1093 = vector.shape_cast %1092 : vector<1x4x16x8xf32> to vector<4x16x8xf32>
    %1094 = vector.broadcast %1090 : i32 to vector<4x1x1xi32>
    %1095 = arith.addi %1, %1094 : vector<4x1x1xi32>
    %1096 = vector.broadcast %1085 : i32 to vector<4x1x1xi32>
    %1097 = arith.cmpi sge, %1095, %1096 : vector<4x1x1xi32>
    %1098 = vector.broadcast %1090 : i32 to vector<4x1x1xi32>
    %1099 = arith.addi %1, %1098 : vector<4x1x1xi32>
    %1100 = vector.broadcast %1088 : i32 to vector<4x1x1xi32>
    %1101 = arith.cmpi slt, %1099, %1100 : vector<4x1x1xi32>
    %1102 = arith.andi %1097, %1101 : vector<4x1x1xi1>
    %cst_304 = arith.constant 0xFF800000 : f32
    %1103 = vector.shape_cast %1102 : vector<4x1x1xi1> to vector<4x1x1xi1>
    %1104 = vector.broadcast %1103 : vector<4x1x1xi1> to vector<4x16x8xi1>
    %1105 = vector.broadcast %cst_304 : f32 to vector<4x16x8xf32>
    %1106 = arith.select %1104, %1093, %1105 : vector<4x16x8xi1>, vector<4x16x8xf32>
    %cst_305 = arith.constant dense<0xFF800000> : vector<16x8xf32>
    %1107 = vector.multi_reduction <maximumf>, %1106, %cst_305 [0] : vector<4x16x8xf32> to vector<16x8xf32>
    %1108 = arith.cmpi sle, %1088, %1085 : i32
    %c0_i32_306 = arith.constant 0 : i32
    %1109 = arith.addi %0, %c0_i32_306 : i32
    %1110 = arith.index_cast %1109 : i32 to index
    %1111 = memref.load %arg4[%1110] : memref<56xi32, #tpu.memory_space<smem>>
    %c0_i32_307 = arith.constant 0 : i32
    %1112 = arith.addi %0, %c0_i32_307 : i32
    %1113 = arith.index_cast %1112 : i32 to index
    %1114 = memref.load %arg5[%1113] : memref<56xi32, #tpu.memory_space<smem>>
    %1115 = vector.broadcast %1111 : i32 to vector<16x1xi32>
    %1116 = arith.cmpi sge, %2, %1115 : vector<16x1xi32>
    %1117 = vector.broadcast %1114 : i32 to vector<16x1xi32>
    %1118 = arith.cmpi slt, %2, %1117 : vector<16x1xi32>
    %1119 = arith.andi %1116, %1118 : vector<16x1xi1>
    %cst_308 = arith.constant 0xFF800000 : f32
    %1120 = vector.shape_cast %1119 : vector<16x1xi1> to vector<16x1xi1>
    %1121 = vector.broadcast %1120 : vector<16x1xi1> to vector<16x8xi1>
    %1122 = vector.broadcast %cst_308 : f32 to vector<16x8xf32>
    %1123 = arith.select %1121, %1107, %1122 : vector<16x8xi1>, vector<16x8xf32>
    %cst_309 = arith.constant dense<0xFF800000> : vector<8xf32>
    %1124 = vector.multi_reduction <maximumf>, %1123, %cst_309 [0] : vector<16x8xf32> to vector<8xf32>
    %1125 = vector.shape_cast %1124 : vector<8xf32> to vector<1x8xf32>
    %1126 = arith.cmpi sle, %1114, %1111 : i32
    %1127 = arith.ori %1108, %1126 : i1
    %cst_310 = arith.constant 0.000000e+00 : f32
    %1128 = vector.broadcast %cst_310 : f32 to vector<1x8xf32>
    %1129 = arith.select %1127, %1128, %1125 : vector<1x8xf32>
    %c42 = arith.constant 42 : index
    %c0_311 = arith.constant 0 : index
    %1130 = vector.load %arg8[%c42, %c0_311] : memref<56x8xf32, #tpu.memory_space<vmem>>, vector<1x8xf32>
    tpu.vector_store %arg8[%c42, %c0_311], %1129 {strides = array<i32>} : memref<56x8xf32, #tpu.memory_space<vmem>>, vector<1x8xf32>,
    %c1_i32_312 = arith.constant 1 : i32
    %1131 = arith.addi %0, %c1_i32_312 : i32
    %1132 = arith.index_cast %1131 : i32 to index
    %1133 = memref.load %arg4[%1132] : memref<56xi32, #tpu.memory_space<smem>>
    %c1_i32_313 = arith.constant 1 : i32
    %1134 = arith.addi %0, %c1_i32_313 : i32
    %1135 = arith.index_cast %1134 : i32 to index
    %1136 = memref.load %arg5[%1135] : memref<56xi32, #tpu.memory_space<smem>>
    %1137 = vector.broadcast %1133 : i32 to vector<16x1xi32>
    %1138 = arith.cmpi sge, %2, %1137 : vector<16x1xi32>
    %1139 = vector.broadcast %1136 : i32 to vector<16x1xi32>
    %1140 = arith.cmpi slt, %2, %1139 : vector<16x1xi32>
    %1141 = arith.andi %1138, %1140 : vector<16x1xi1>
    %cst_314 = arith.constant 0xFF800000 : f32
    %1142 = vector.shape_cast %1141 : vector<16x1xi1> to vector<16x1xi1>
    %1143 = vector.broadcast %1142 : vector<16x1xi1> to vector<16x8xi1>
    %1144 = vector.broadcast %cst_314 : f32 to vector<16x8xf32>
    %1145 = arith.select %1143, %1107, %1144 : vector<16x8xi1>, vector<16x8xf32>
    %cst_315 = arith.constant dense<0xFF800000> : vector<8xf32>
    %1146 = vector.multi_reduction <maximumf>, %1145, %cst_315 [0] : vector<16x8xf32> to vector<8xf32>
    %1147 = vector.shape_cast %1146 : vector<8xf32> to vector<1x8xf32>
    %1148 = arith.cmpi sle, %1136, %1133 : i32
    %1149 = arith.ori %1108, %1148 : i1
    %cst_316 = arith.constant 0.000000e+00 : f32
    %1150 = vector.broadcast %cst_316 : f32 to vector<1x8xf32>
    %1151 = arith.select %1149, %1150, %1147 : vector<1x8xf32>
    %c43 = arith.constant 43 : index
    %c0_317 = arith.constant 0 : index
    %1152 = vector.load %arg8[%c43, %c0_317] : memref<56x8xf32, #tpu.memory_space<vmem>>, vector<1x8xf32>
    tpu.vector_store %arg8[%c43, %c0_317], %1151 {strides = array<i32>} : memref<56x8xf32, #tpu.memory_space<vmem>>, vector<1x8xf32>,
    %c2_i32_318 = arith.constant 2 : i32
    %1153 = arith.addi %0, %c2_i32_318 : i32
    %1154 = arith.index_cast %1153 : i32 to index
    %1155 = memref.load %arg4[%1154] : memref<56xi32, #tpu.memory_space<smem>>
    %c2_i32_319 = arith.constant 2 : i32
    %1156 = arith.addi %0, %c2_i32_319 : i32
    %1157 = arith.index_cast %1156 : i32 to index
    %1158 = memref.load %arg5[%1157] : memref<56xi32, #tpu.memory_space<smem>>
    %1159 = vector.broadcast %1155 : i32 to vector<16x1xi32>
    %1160 = arith.cmpi sge, %2, %1159 : vector<16x1xi32>
    %1161 = vector.broadcast %1158 : i32 to vector<16x1xi32>
    %1162 = arith.cmpi slt, %2, %1161 : vector<16x1xi32>
    %1163 = arith.andi %1160, %1162 : vector<16x1xi1>
    %cst_320 = arith.constant 0xFF800000 : f32
    %1164 = vector.shape_cast %1163 : vector<16x1xi1> to vector<16x1xi1>
    %1165 = vector.broadcast %1164 : vector<16x1xi1> to vector<16x8xi1>
    %1166 = vector.broadcast %cst_320 : f32 to vector<16x8xf32>
    %1167 = arith.select %1165, %1107, %1166 : vector<16x8xi1>, vector<16x8xf32>
    %cst_321 = arith.constant dense<0xFF800000> : vector<8xf32>
    %1168 = vector.multi_reduction <maximumf>, %1167, %cst_321 [0] : vector<16x8xf32> to vector<8xf32>
    %1169 = vector.shape_cast %1168 : vector<8xf32> to vector<1x8xf32>
    %1170 = arith.cmpi sle, %1158, %1155 : i32
    %1171 = arith.ori %1108, %1170 : i1
    %cst_322 = arith.constant 0.000000e+00 : f32
    %1172 = vector.broadcast %cst_322 : f32 to vector<1x8xf32>
    %1173 = arith.select %1171, %1172, %1169 : vector<1x8xf32>
    %c44 = arith.constant 44 : index
    %c0_323 = arith.constant 0 : index
    %1174 = vector.load %arg8[%c44, %c0_323] : memref<56x8xf32, #tpu.memory_space<vmem>>, vector<1x8xf32>
    tpu.vector_store %arg8[%c44, %c0_323], %1173 {strides = array<i32>} : memref<56x8xf32, #tpu.memory_space<vmem>>, vector<1x8xf32>,
    %c3_i32_324 = arith.constant 3 : i32
    %1175 = arith.addi %0, %c3_i32_324 : i32
    %1176 = arith.index_cast %1175 : i32 to index
    %1177 = memref.load %arg4[%1176] : memref<56xi32, #tpu.memory_space<smem>>
    %c3_i32_325 = arith.constant 3 : i32
    %1178 = arith.addi %0, %c3_i32_325 : i32
    %1179 = arith.index_cast %1178 : i32 to index
    %1180 = memref.load %arg5[%1179] : memref<56xi32, #tpu.memory_space<smem>>
    %1181 = vector.broadcast %1177 : i32 to vector<16x1xi32>
    %1182 = arith.cmpi sge, %2, %1181 : vector<16x1xi32>
    %1183 = vector.broadcast %1180 : i32 to vector<16x1xi32>
    %1184 = arith.cmpi slt, %2, %1183 : vector<16x1xi32>
    %1185 = arith.andi %1182, %1184 : vector<16x1xi1>
    %cst_326 = arith.constant 0xFF800000 : f32
    %1186 = vector.shape_cast %1185 : vector<16x1xi1> to vector<16x1xi1>
    %1187 = vector.broadcast %1186 : vector<16x1xi1> to vector<16x8xi1>
    %1188 = vector.broadcast %cst_326 : f32 to vector<16x8xf32>
    %1189 = arith.select %1187, %1107, %1188 : vector<16x8xi1>, vector<16x8xf32>
    %cst_327 = arith.constant dense<0xFF800000> : vector<8xf32>
    %1190 = vector.multi_reduction <maximumf>, %1189, %cst_327 [0] : vector<16x8xf32> to vector<8xf32>
    %1191 = vector.shape_cast %1190 : vector<8xf32> to vector<1x8xf32>
    %1192 = arith.cmpi sle, %1180, %1177 : i32
    %1193 = arith.ori %1108, %1192 : i1
    %cst_328 = arith.constant 0.000000e+00 : f32
    %1194 = vector.broadcast %cst_328 : f32 to vector<1x8xf32>
    %1195 = arith.select %1193, %1194, %1191 : vector<1x8xf32>
    %c45 = arith.constant 45 : index
    %c0_329 = arith.constant 0 : index
    %1196 = vector.load %arg8[%c45, %c0_329] : memref<56x8xf32, #tpu.memory_space<vmem>>, vector<1x8xf32>
    tpu.vector_store %arg8[%c45, %c0_329], %1195 {strides = array<i32>} : memref<56x8xf32, #tpu.memory_space<vmem>>, vector<1x8xf32>,
    %c4_i32_330 = arith.constant 4 : i32
    %1197 = arith.addi %0, %c4_i32_330 : i32
    %1198 = arith.index_cast %1197 : i32 to index
    %1199 = memref.load %arg4[%1198] : memref<56xi32, #tpu.memory_space<smem>>
    %c4_i32_331 = arith.constant 4 : i32
    %1200 = arith.addi %0, %c4_i32_331 : i32
    %1201 = arith.index_cast %1200 : i32 to index
    %1202 = memref.load %arg5[%1201] : memref<56xi32, #tpu.memory_space<smem>>
    %1203 = vector.broadcast %1199 : i32 to vector<16x1xi32>
    %1204 = arith.cmpi sge, %2, %1203 : vector<16x1xi32>
    %1205 = vector.broadcast %1202 : i32 to vector<16x1xi32>
    %1206 = arith.cmpi slt, %2, %1205 : vector<16x1xi32>
    %1207 = arith.andi %1204, %1206 : vector<16x1xi1>
    %cst_332 = arith.constant 0xFF800000 : f32
    %1208 = vector.shape_cast %1207 : vector<16x1xi1> to vector<16x1xi1>
    %1209 = vector.broadcast %1208 : vector<16x1xi1> to vector<16x8xi1>
    %1210 = vector.broadcast %cst_332 : f32 to vector<16x8xf32>
    %1211 = arith.select %1209, %1107, %1210 : vector<16x8xi1>, vector<16x8xf32>
    %cst_333 = arith.constant dense<0xFF800000> : vector<8xf32>
    %1212 = vector.multi_reduction <maximumf>, %1211, %cst_333 [0] : vector<16x8xf32> to vector<8xf32>
    %1213 = vector.shape_cast %1212 : vector<8xf32> to vector<1x8xf32>
    %1214 = arith.cmpi sle, %1202, %1199 : i32
    %1215 = arith.ori %1108, %1214 : i1
    %cst_334 = arith.constant 0.000000e+00 : f32
    %1216 = vector.broadcast %cst_334 : f32 to vector<1x8xf32>
    %1217 = arith.select %1215, %1216, %1213 : vector<1x8xf32>
    %c46 = arith.constant 46 : index
    %c0_335 = arith.constant 0 : index
    %1218 = vector.load %arg8[%c46, %c0_335] : memref<56x8xf32, #tpu.memory_space<vmem>>, vector<1x8xf32>
    tpu.vector_store %arg8[%c46, %c0_335], %1217 {strides = array<i32>} : memref<56x8xf32, #tpu.memory_space<vmem>>, vector<1x8xf32>,
    %c5_i32_336 = arith.constant 5 : i32
    %1219 = arith.addi %0, %c5_i32_336 : i32
    %1220 = arith.index_cast %1219 : i32 to index
    %1221 = memref.load %arg4[%1220] : memref<56xi32, #tpu.memory_space<smem>>
    %c5_i32_337 = arith.constant 5 : i32
    %1222 = arith.addi %0, %c5_i32_337 : i32
    %1223 = arith.index_cast %1222 : i32 to index
    %1224 = memref.load %arg5[%1223] : memref<56xi32, #tpu.memory_space<smem>>
    %1225 = vector.broadcast %1221 : i32 to vector<16x1xi32>
    %1226 = arith.cmpi sge, %2, %1225 : vector<16x1xi32>
    %1227 = vector.broadcast %1224 : i32 to vector<16x1xi32>
    %1228 = arith.cmpi slt, %2, %1227 : vector<16x1xi32>
    %1229 = arith.andi %1226, %1228 : vector<16x1xi1>
    %cst_338 = arith.constant 0xFF800000 : f32
    %1230 = vector.shape_cast %1229 : vector<16x1xi1> to vector<16x1xi1>
    %1231 = vector.broadcast %1230 : vector<16x1xi1> to vector<16x8xi1>
    %1232 = vector.broadcast %cst_338 : f32 to vector<16x8xf32>
    %1233 = arith.select %1231, %1107, %1232 : vector<16x8xi1>, vector<16x8xf32>
    %cst_339 = arith.constant dense<0xFF800000> : vector<8xf32>
    %1234 = vector.multi_reduction <maximumf>, %1233, %cst_339 [0] : vector<16x8xf32> to vector<8xf32>
    %1235 = vector.shape_cast %1234 : vector<8xf32> to vector<1x8xf32>
    %1236 = arith.cmpi sle, %1224, %1221 : i32
    %1237 = arith.ori %1108, %1236 : i1
    %cst_340 = arith.constant 0.000000e+00 : f32
    %1238 = vector.broadcast %cst_340 : f32 to vector<1x8xf32>
    %1239 = arith.select %1237, %1238, %1235 : vector<1x8xf32>
    %c47 = arith.constant 47 : index
    %c0_341 = arith.constant 0 : index
    %1240 = vector.load %arg8[%c47, %c0_341] : memref<56x8xf32, #tpu.memory_space<vmem>>, vector<1x8xf32>
    tpu.vector_store %arg8[%c47, %c0_341], %1239 {strides = array<i32>} : memref<56x8xf32, #tpu.memory_space<vmem>>, vector<1x8xf32>,
    %c6_i32_342 = arith.constant 6 : i32
    %1241 = arith.addi %0, %c6_i32_342 : i32
    %1242 = arith.index_cast %1241 : i32 to index
    %1243 = memref.load %arg4[%1242] : memref<56xi32, #tpu.memory_space<smem>>
    %c6_i32_343 = arith.constant 6 : i32
    %1244 = arith.addi %0, %c6_i32_343 : i32
    %1245 = arith.index_cast %1244 : i32 to index
    %1246 = memref.load %arg5[%1245] : memref<56xi32, #tpu.memory_space<smem>>
    %1247 = vector.broadcast %1243 : i32 to vector<16x1xi32>
    %1248 = arith.cmpi sge, %2, %1247 : vector<16x1xi32>
    %1249 = vector.broadcast %1246 : i32 to vector<16x1xi32>
    %1250 = arith.cmpi slt, %2, %1249 : vector<16x1xi32>
    %1251 = arith.andi %1248, %1250 : vector<16x1xi1>
    %cst_344 = arith.constant 0xFF800000 : f32
    %1252 = vector.shape_cast %1251 : vector<16x1xi1> to vector<16x1xi1>
    %1253 = vector.broadcast %1252 : vector<16x1xi1> to vector<16x8xi1>
    %1254 = vector.broadcast %cst_344 : f32 to vector<16x8xf32>
    %1255 = arith.select %1253, %1107, %1254 : vector<16x8xi1>, vector<16x8xf32>
    %cst_345 = arith.constant dense<0xFF800000> : vector<8xf32>
    %1256 = vector.multi_reduction <maximumf>, %1255, %cst_345 [0] : vector<16x8xf32> to vector<8xf32>
    %1257 = vector.shape_cast %1256 : vector<8xf32> to vector<1x8xf32>
    %1258 = arith.cmpi sle, %1246, %1243 : i32
    %1259 = arith.ori %1108, %1258 : i1
    %cst_346 = arith.constant 0.000000e+00 : f32
    %1260 = vector.broadcast %cst_346 : f32 to vector<1x8xf32>
    %1261 = arith.select %1259, %1260, %1257 : vector<1x8xf32>
    %c48 = arith.constant 48 : index
    %c0_347 = arith.constant 0 : index
    %1262 = vector.load %arg8[%c48, %c0_347] : memref<56x8xf32, #tpu.memory_space<vmem>>, vector<1x8xf32>
    tpu.vector_store %arg8[%c48, %c0_347], %1261 {strides = array<i32>} : memref<56x8xf32, #tpu.memory_space<vmem>>, vector<1x8xf32>,
    %cst_348 = arith.constant 0.000000e+00 : f32
    %1263 = vector.broadcast %cst_348 : f32 to vector<7x8xf32>
    %c49 = arith.constant 49 : index
    %c0_349 = arith.constant 0 : index
    %1264 = vector.load %arg8[%c49, %c0_349] : memref<56x8xf32, #tpu.memory_space<vmem>>, vector<7x8xf32>
    tpu.vector_store %arg8[%c49, %c0_349], %1263 {strides = array<i32>} : memref<56x8xf32, #tpu.memory_space<vmem>>, vector<7x8xf32>,
    %c0_350 = arith.constant 0 : index
    %c0_351 = arith.constant 0 : index
    %1265 = vector.load %arg8[%c0_350, %c0_351] : memref<56x8xf32, #tpu.memory_space<vmem>>, vector<56x8xf32>
    %1266 = arith.truncf %1265 : vector<56x8xf32> to vector<56x8xbf16>
    %c0_352 = arith.constant 0 : index
    %c0_353 = arith.constant 0 : index
    %c0_354 = arith.constant 0 : index
    %1267 = vector.load %arg7[%c0_352, %c0_353, %c0_354] : memref<1x56x8xbf16, #tpu.memory_space<vmem>>, vector<1x56x8xbf16>
    %1268 = vector.shape_cast %1267 : vector<1x56x8xbf16> to vector<56x8xbf16>
    %1269 = vector.shape_cast %1266 : vector<56x8xbf16> to vector<1x56x8xbf16>
    tpu.vector_store %arg7[%c0_352, %c0_353, %c0_354], %1269 {strides = array<i32>} : memref<1x56x8xbf16, #tpu.memory_space<vmem>>, vector<1x56x8xbf16>,
    return
  }
  func.func @transform_0(%arg0: i32, %arg1: memref<8xi32, #tpu.memory_space<smem>>, %arg2: memref<56xi32, #tpu.memory_space<smem>>, %arg3: memref<56xi32, #tpu.memory_space<smem>>, %arg4: memref<56xi32, #tpu.memory_space<smem>>, %arg5: memref<56xi32, #tpu.memory_space<smem>>) -> (i32, i32, i32, i32) {
    %0 = arith.index_cast %arg0 : i32 to index
    %1 = memref.load %arg1[%0] : memref<8xi32, #tpu.memory_space<smem>>
    %c0_i32 = arith.constant 0 : i32
    %c0_i32_0 = arith.constant 0 : i32
    %c0_i32_1 = arith.constant 0 : i32
    %c0_i32_2 = arith.constant 0 : i32
    return %1, %c0_i32, %c0_i32_0, %c0_i32_1 : i32, i32, i32, i32
  }
  func.func @transform_1(%arg0: i32, %arg1: memref<8xi32, #tpu.memory_space<smem>>, %arg2: memref<56xi32, #tpu.memory_space<smem>>, %arg3: memref<56xi32, #tpu.memory_space<smem>>, %arg4: memref<56xi32, #tpu.memory_space<smem>>, %arg5: memref<56xi32, #tpu.memory_space<smem>>) -> (i32, i32, i32) {
    %c0_i32 = arith.constant 0 : i32
    %c0_i32_0 = arith.constant 0 : i32
    %c0_i32_1 = arith.constant 0 : i32
    return %arg0, %c0_i32, %c0_i32_0 : i32, i32, i32
  }
}

</mosaic_0001>

<llo_original>
// kernel: tpu_custom_call.1
$region0: #{tpu_custom_call.1}
  #allocation0 [shape = 'u32[]', space=smem, size = 0x4, offset = 0x4, fixed_abs, tag = 'smem constant byte address 0x4 - core index']
  #allocation1 [shape = 'u32[72,128]{1,0:T(1,128)}', space=vmem, size = 0x9000, scoped, tag = 'internal scratch']
  #allocation2 [shape = 'f32[56,8]{1,0:T(8,128)}', space=vmem, size = 0x7000, scoped, tag = 'scratch operand']
  #allocation3 [shape = 's32[1]{0}', space=sflag, size = 0x4, scoped, tag = 'scoped memory for tpu_custom_call.1']
  #allocation4 [shape = 'u8[512]{0}', space=smem, size = 0x200, scoped, tag = 'prefetched SMEM operand 0']
  #allocation5 [shape = 'u8[512]{0}', space=smem, size = 0x200, scoped, tag = 'prefetched SMEM operand 1']
  #allocation6 [shape = 'u8[512]{0}', space=smem, size = 0x200, scoped, tag = 'prefetched SMEM operand 2']
  #allocation7 [shape = 'u8[512]{0}', space=smem, size = 0x200, scoped, tag = 'prefetched SMEM operand 3']
  #allocation8 [shape = 'u8[512]{0}', space=smem, size = 0x200, scoped, tag = 'prefetched SMEM operand 4']
  %s0 = inlined_call_operand.vmem [shape: s32[8], index: 0, kind: input, shape index: {}]
  %s1 = inlined_call_operand.vmem [shape: s32[56], index: 1, kind: input, shape index: {}]
  %s2 = inlined_call_operand.vmem [shape: s32[56], index: 2, kind: input, shape index: {}]
  %s3 = inlined_call_operand.vmem [shape: s32[56], index: 3, kind: input, shape index: {}]
  %s4 = inlined_call_operand.vmem [shape: s32[56], index: 4, kind: input, shape index: {}]
  %s5 = inlined_call_operand.vmem [shape: f32[2,16,16,8], index: 5, kind: input, shape index: {}]
  %s6 = inlined_call_operand.vmem [shape: bf16[8,56,8], index: 6, kind: output, shape index: {}]
  %s7 = sld [smem:[#allocation0]]
  $region37: #{tpu_custom_call.1} parent=0
    _
  %s9 = ssub.s32 1, %s7
  %s10 = scalar_select 0, %s9, %s7
  %s12 = sshll.u32 %s0, 4
  %s13 = int_to_ptr.vmem [resolvable:$true] %s12
  %15 = dma.vmem_to_smem %s13, 16, [#allocation4], [#allocation3]
  %s17 = sshll.u32 %s1, 4
  %s18 = int_to_ptr.vmem [resolvable:$true] %s17
  %20 = dma.vmem_to_smem %s18, 16, [#allocation5], [#allocation3]
  %s22 = sshll.u32 %s2, 4
  %s23 = int_to_ptr.vmem [resolvable:$true] %s22
  %25 = dma.vmem_to_smem %s23, 16, [#allocation6], [#allocation3]
  %s27 = sshll.u32 %s3, 4
  %s28 = int_to_ptr.vmem [resolvable:$true] %s27
  %30 = dma.vmem_to_smem %s28, 16, [#allocation7], [#allocation3]
  %s32 = sshll.u32 %s4, 4
  %s33 = int_to_ptr.vmem [resolvable:$true] %s32
  %35 = dma.vmem_to_smem %s33, 16, [#allocation8], [#allocation3]
  %37 = dma.done [#allocation3], 80
  %38 = sfence
  loop: start=0, step=1, limit=10
  $region2: #{tpu_custom_call.1} parent=0 // loop_pre_header
    _
  $region3: #{tpu_custom_call.1} parent=0 // loop_header
    %s40 = sphi 0, %s44
    %p41 = scmp.ge.s32.totalorder %s40, 10
    %s52 = sphi 0, %s54
    %s55 = sphi 0, %s52
    %s56 = sphi 0, %s55
    %s72 = sphi 0, %s56
    %s78 = sphi 0, %s80
    %s81 = sphi 0, %s78
    %s82 = sphi 0, %s81
    %s98 = sphi 0, %s82
  $region4: #{tpu_custom_call.1} parent=0 // loop_header_branch
    %43 = sbr.rel (%p41) target = $region8
  $region5: #{tpu_custom_call.1} parent=0 // loop_body
    %s45 = ssub.s32 %s40, 1
    %s46 = ssub.s32 %s40, 2
    %s47 = sadd.s32 %s40, 1
    %s48 = sld [smem:[#allocation4 + %s40]]
    %s49 = sld [smem:[#allocation4 + %s47]]
    %s50 = ssub.s32 %s48, %s49
    %p51 = scmp.eq.s32.totalorder %s50, 0
    %s53 = sadd.s32 %s52, 1
    %s54 = scalar_select %p51, %s52, %s53
    %p57 = pneg %p51
    %p58 = scmp.eq.s32.totalorder %s40, 7
    %p59 = por %p57, %p58
    %p60 = scmp.ne.s32.totalorder %s52, %s55
    %p61 = scmp.eq.s32.totalorder %s40, 0
    %p62 = por %p60, %p61
    %p63 = scmp.ne.s32.totalorder %s52, %s55
    %p64 = scmp.eq.s32.totalorder %s45, 7
    %p65 = por %p63, %p64
    %p66 = scmp.ne.s32.totalorder %s55, %s56
    %p67 = scmp.eq.s32.totalorder %s45, 0
    %p68 = por %p66, %p67
    %p69 = scmp.ne.s32.totalorder %s55, %s56
    %p70 = scmp.eq.s32.totalorder %s46, 7
    %p71 = por %p69, %p70
    %p73 = scmp.ne.s32.totalorder %s56, %s72
    %p74 = scmp.eq.s32.totalorder %s46, 0
    %p75 = por %p73, %p74
    %s76 = ssub.s32 %s40, %s47
    %p77 = scmp.eq.s32.totalorder %s76, 0
    %s79 = sadd.s32 %s78, 1
    %s80 = scalar_select %p77, %s78, %s79
    %p83 = pneg %p77
    %p84 = scmp.eq.s32.totalorder %s40, 7
    %p85 = por %p83, %p84
    %p86 = scmp.ne.s32.totalorder %s78, %s81
    %p87 = scmp.eq.s32.totalorder %s40, 0
    %p88 = por %p86, %p87
    %p89 = scmp.ne.s32.totalorder %s78, %s81
    %p90 = scmp.eq.s32.totalorder %s45, 7
    %p91 = por %p89, %p90
    %p92 = scmp.ne.s32.totalorder %s81, %s82
    %p93 = scmp.eq.s32.totalorder %s45, 0
    %p94 = por %p92, %p93
    %p95 = scmp.ne.s32.totalorder %s81, %s82
    %p96 = scmp.eq.s32.totalorder %s46, 7
    %p97 = por %p95, %p96
    %p99 = scmp.ne.s32.totalorder %s82, %s98
    %p100 = scmp.eq.s32.totalorder %s46, 0
    %p101 = por %p99, %p100
    %p102 = scmp.le.s32.totalorder 1, %s40
    %p103 = scmp.lt.s32.totalorder %s40, 9
    %p104 = pnand %p102, %p103
    %p105 = pneg %p104
    // Predicated region
    $region9: #{tpu_custom_call.1} parent=5 // pred_check
      _
    $region10: #{tpu_custom_call.1} parent=5 // pred_check_branch
      %107 = sbr.rel (%p104) target = $region12
    $region11: #{tpu_custom_call.1} parent=5 // pred_region
      %s108 = ssub.s32 %s40, 1
    $region12: #{tpu_custom_call.1} parent=5 // pred_fallthru
      _
    %p109 = scmp.lt.s32.totalorder %s40, 8
    // Predicated region
    $region13: #{tpu_custom_call.1} parent=5 // pred_check
      %p110 = pneg %p109
    $region14: #{tpu_custom_call.1} parent=5 // pred_check_branch
      %112 = sbr.rel (%p110) target = $region16
    $region15: #{tpu_custom_call.1} parent=5 // pred_region
      // Predicated region
      $region17: #{tpu_custom_call.1} parent=15 // pred_check
        %p113 = pneg %p62
      $region18: #{tpu_custom_call.1} parent=15 // pred_check_branch
        %115 = sbr.rel (%p113) target = $region20
      $region19: #{tpu_custom_call.1} parent=15 // pred_region
        %s116 = sld [smem:[#allocation4 + %s40]]
        %p117 = scmp.lt.s32.totalorder %s116, 1
        %s118 = scalar_select %p117, %s116, 1
        %s119 = smul.addr %s118, 32
        %s120 = smul.addr %s119, 8
        %s121 = scalar_lea.vmem %s5, %s120
        %s122 = sld [smem:[#allocation4 + %s40]]
      $region20: #{tpu_custom_call.1} parent=15 // pred_fallthru
        _
    $region16: #{tpu_custom_call.1} parent=5 // pred_fallthru
      _
    %p123 = scmp.le.s32.totalorder 1, %s40
    %p124 = scmp.lt.s32.totalorder %s40, 9
    %p125 = pnand %p123, %p124
    %p126 = pneg %p125
    // Predicated region
    $region21: #{tpu_custom_call.1} parent=5 // pred_check
      _
    $region22: #{tpu_custom_call.1} parent=5 // pred_check_branch
      %128 = sbr.rel (%p125) target = $region24
    $region23: #{tpu_custom_call.1} parent=5 // pred_region
      %s129 = ssub.s32 %s40, 1
      %s130 = sld [smem:[#allocation4 + %s45]]
      %p131 = scmp.lt.s32.totalorder %s130, 1
      %s132 = scalar_select %p131, %s130, 1
      %s133 = smul.addr %s132, 32
      %s134 = smul.addr %s133, 8
      %s135 = scalar_lea.vmem %s5, %s134
      %p136 = pneg %p68
      %p137 = pneg %p65
      %p138 = pneg %p94
      %p139 = pneg %p91
      %p140 = scmp.lt.s32.totalorder %s45, 7
      %s141 = scalar_select %p140, %s45, 7
      %s142 = smul.addr %s141, 7
      %s143 = smul.addr %s142, 4
      %s144 = scalar_lea.vmem %s6, %s143
      %s145 = sld [smem:[#allocation4 + %s45]]
      %p146 = scmp.lt.s32.totalorder %s145, 1
      %s147 = scalar_select %p146, %s145, 1
      %s148 = smul.addr %s147, 32
      %s149 = smul.addr %s148, 8
      %s150 = scalar_lea.vmem %s5, %s149
      %s151 = sld [smem:[#allocation4 + %s45]]
      %p152 = scmp.lt.s32.totalorder %s45, 7
      %s153 = scalar_select %p152, %s45, 7
      %s154 = smul.addr %s153, 7
      %s155 = smul.addr %s154, 4
      %s156 = scalar_lea.vmem %s6, %s155
      %s157 = smul.u32 %s45, 7
      %v158 = vlaneseq
      %v159 = vshrl.u32 %v158, 7
      %v160 = vadd.s32 %v159, 8
      %s161 = sld [smem:[#allocation5 + %s157]]
      %s162 = sld [smem:[#allocation6 + %s157]]
      %p163 = scmp.gt.s32.totalorder %s161, 0
      %s164 = scalar_select %p163, %s161, 0
      %p165 = scmp.lt.s32.totalorder %s164, 12
      %s166 = scalar_select %p165, %s164, 12
      %s167 = smul.u32 %s166, 16
      %s168 = scalar_lea.vmem %s150, %s167
      %v169 = vld [vmem:[%s168] sm:$0xff]
      %v170 = vld [vmem:[%s168 + $0x8] sm:$0xff]
      %v171 = vld [vmem:[%s168 + $0x10] sm:$0xff]
      %v172 = vld [vmem:[%s168 + $0x18] sm:$0xff]
      %v173 = vld [vmem:[%s168 + $0x20] sm:$0xff]
      %v174 = vld [vmem:[%s168 + $0x28] sm:$0xff]
      %v175 = vld [vmem:[%s168 + $0x30] sm:$0xff]
      %v176 = vld [vmem:[%s168 + $0x38] sm:$0xff]
      %v177 = vstv %s166
      %v178 = vadd.s32 %v177, 1
      %v179 = vadd.s32 %v177, 2
      %v180 = vadd.s32 %v177, 3
      %v181 = vstv %s161
      %vm182 = vcmp.ge.s32.totalorder %v177, %v181
      %vm183 = vcmp.ge.s32.totalorder %v178, %v181
      %vm184 = vcmp.ge.s32.totalorder %v179, %v181
      %vm185 = vcmp.ge.s32.totalorder %v180, %v181
      %v186 = vstv %s162
      %vm187 = vcmp.lt.s32.totalorder %v177, %v186
      %vm188 = vcmp.lt.s32.totalorder %v178, %v186
      %vm189 = vcmp.lt.s32.totalorder %v179, %v186
      %vm190 = vcmp.lt.s32.totalorder %v180, %v186
      %vm191 = vmand %vm182, %vm187
      %vm192 = vmand %vm183, %vm188
      %vm193 = vmand %vm184, %vm189
      %vm194 = vmand %vm185, %vm190
      %v195 = vsel %vm191, 1, 0
      %v196 = vsel %vm192, 1, 0
      %v197 = vsel %vm193, 1, 0
      %v198 = vsel %vm194, 1, 0
      %vm199 = vcmp.eq.s32.totalorder %v195, 1
      %vm200 = vcmp.eq.s32.totalorder %v196, 1
      %vm201 = vcmp.eq.s32.totalorder %v197, 1
      %vm202 = vcmp.eq.s32.totalorder %v198, 1
      %v203 = vsel %vm199, %v169, -inf
      %v204 = vsel %vm199, %v170, -inf
      %v205 = vsel %vm200, %v171, -inf
      %v206 = vsel %vm200, %v172, -inf
      %v207 = vsel %vm201, %v173, -inf
      %v208 = vsel %vm201, %v174, -inf
      %v209 = vsel %vm202, %v175, -inf
      %v210 = vsel %vm202, %v176, -inf
      %vm211 = vcmask 64512
      %v212 = vsel %vm211, %v203, -inf
      %v213 = vsel %vm211, %v205, -inf
      %v214 = vsel %vm211, %v207, -inf
      %v215 = vmax.f32 %v212, %v214
      %v216 = vsel %vm211, %v209, -inf
      %v217 = vmax.f32 %v213, %v216
      %v218 = vmax.f32 %v215, %v217
      %v219 = vsel %vm211, %v204, -inf
      %v220 = vsel %vm211, %v206, -inf
      %v221 = vsel %vm211, %v208, -inf
      %v222 = vmax.f32 %v219, %v221
      %v223 = vsel %vm211, %v210, -inf
      %v224 = vmax.f32 %v220, %v223
      %v225 = vmax.f32 %v222, %v224
      %p226 = scmp.le.s32.totalorder %s162, %s161
      %s227 = sld [smem:[#allocation7 + %s157]]
      %s228 = sld [smem:[#allocation8 + %s157]]
      %v229 = vstv %s227
      %vm230 = vcmp.ge.s32.totalorder %v159, %v229
      %vm231 = vcmp.ge.s32.totalorder %v160, %v229
      %v232 = vstv %s228
      %vm233 = vcmp.lt.s32.totalorder %v159, %v232
      %vm234 = vcmp.lt.s32.totalorder %v160, %v232
      %vm235 = vmand %vm230, %vm233
      %vm236 = vmand %vm231, %vm234
      %v237 = vsel %vm235, 1, 0
      %v238 = vsel %vm236, 1, 0
      %vm239 = vcmp.eq.s32.totalorder %v237, 1
      %vm240 = vcmp.eq.s32.totalorder %v238, 1
      %v241 = vsel %vm239, %v218, -inf
      %v242 = vsel %vm240, %v225, -inf
      %v243 = vsel %vm211, %v241, -inf
      %v244 = vsel %vm211, %v242, -inf
      %v245 = vmax.f32 %v243, %v244
      %v246 = vrot.slane %v245, 4
      %v247 = vmax.f32 %v245, %v246
      %v248 = vrot.slane %v247, 2
      %v249 = vmax.f32 %v247, %v248
      %v250 = vrot.slane %v249, 1
      %v251 = vmax.f32 %v249, %v250
      %p252 = scmp.le.s32.totalorder %s228, %s227
      %p253 = por %p226, %p252
      %s254 = scalar_select %p253, 1, 0
      %v255 = vstv %s254
      %vm256 = vcmp.eq.s32.totalorder %v255, 1
      %v257 = vsel %vm256, 0.0, %v251
      %vm258 = vcmask 57344
      %259 = vst.msk [vmem:[#allocation2] sm:$0x1] %vm258, %v257
      %s260 = sadd.s32 %s157, 1
      %s261 = sld [smem:[#allocation7 + %s260]]
      %s262 = sld [smem:[#allocation8 + %s260]]
      %v263 = vstv %s261
      %vm264 = vcmp.ge.s32.totalorder %v159, %v263
      %vm265 = vcmp.ge.s32.totalorder %v160, %v263
      %v266 = vstv %s262
      %vm267 = vcmp.lt.s32.totalorder %v159, %v266
      %vm268 = vcmp.lt.s32.totalorder %v160, %v266
      %vm269 = vmand %vm264, %vm267
      %vm270 = vmand %vm265, %vm268
      %v271 = vsel %vm269, 1, 0
      %v272 = vsel %vm270, 1, 0
      %vm273 = vcmp.eq.s32.totalorder %v271, 1
      %vm274 = vcmp.eq.s32.totalorder %v272, 1
      %v275 = vsel %vm273, %v218, -inf
      %v276 = vsel %vm274, %v225, -inf
      %v277 = vsel %vm211, %v275, -inf
      %v278 = vsel %vm211, %v276, -inf
      %v279 = vmax.f32 %v277, %v278
      %v280 = vrot.slane %v279, 4
      %v281 = vmax.f32 %v279, %v280
      %v282 = vrot.slane %v281, 2
      %v283 = vmax.f32 %v281, %v282
      %v284 = vrot.slane %v283, 1
      %v285 = vmax.f32 %v283, %v284
      %p286 = scmp.le.s32.totalorder %s262, %s261
      %p287 = por %p226, %p286
      %s288 = scalar_select %p287, 1, 0
      %v289 = vstv %s288
      %vm290 = vcmp.eq.s32.totalorder %v289, 1
      %v291 = vsel %vm290, 0.0, %v285
      %292 = vst.msk [vmem:[#allocation2 + $0x1] sm:$0x1] %vm258, %v291
      %s293 = sadd.s32 %s157, 2
      %s294 = sld [smem:[#allocation7 + %s293]]
      %s295 = sld [smem:[#allocation8 + %s293]]
      %v296 = vstv %s294
      %vm297 = vcmp.ge.s32.totalorder %v159, %v296
      %vm298 = vcmp.ge.s32.totalorder %v160, %v296
      %v299 = vstv %s295
      %vm300 = vcmp.lt.s32.totalorder %v159, %v299
      %vm301 = vcmp.lt.s32.totalorder %v160, %v299
      %vm302 = vmand %vm297, %vm300
      %vm303 = vmand %vm298, %vm301
      %v304 = vsel %vm302, 1, 0
      %v305 = vsel %vm303, 1, 0
      %vm306 = vcmp.eq.s32.totalorder %v304, 1
      %vm307 = vcmp.eq.s32.totalorder %v305, 1
      %v308 = vsel %vm306, %v218, -inf
      %v309 = vsel %vm307, %v225, -inf
      %v310 = vsel %vm211, %v308, -inf
      %v311 = vsel %vm211, %v309, -inf
      %v312 = vmax.f32 %v310, %v311
      %v313 = vrot.slane %v312, 4
      %v314 = vmax.f32 %v312, %v313
      %v315 = vrot.slane %v314, 2
      %v316 = vmax.f32 %v314, %v315
      %v317 = vrot.slane %v316, 1
      %v318 = vmax.f32 %v316, %v317
      %p319 = scmp.le.s32.totalorder %s295, %s294
      %p320 = por %p226, %p319
      %s321 = scalar_select %p320, 1, 0
      %v322 = vstv %s321
      %vm323 = vcmp.eq.s32.totalorder %v322, 1
      %v324 = vsel %vm323, 0.0, %v318
      %325 = vst.msk [vmem:[#allocation2 + $0x2] sm:$0x1] %vm258, %v324
      %s326 = sadd.s32 %s157, 3
      %s327 = sld [smem:[#allocation7 + %s326]]
      %s328 = sld [smem:[#allocation8 + %s326]]
      %v329 = vstv %s327
      %vm330 = vcmp.ge.s32.totalorder %v159, %v329
      %vm331 = vcmp.ge.s32.totalorder %v160, %v329
      %v332 = vstv %s328
      %vm333 = vcmp.lt.s32.totalorder %v159, %v332
      %vm334 = vcmp.lt.s32.totalorder %v160, %v332
      %vm335 = vmand %vm330, %vm333
      %vm336 = vmand %vm331, %vm334
      %v337 = vsel %vm335, 1, 0
      %v338 = vsel %vm336, 1, 0
      %vm339 = vcmp.eq.s32.totalorder %v337, 1
      %vm340 = vcmp.eq.s32.totalorder %v338, 1
      %v341 = vsel %vm339, %v218, -inf
      %v342 = vsel %vm340, %v225, -inf
      %v343 = vsel %vm211, %v341, -inf
      %v344 = vsel %vm211, %v342, -inf
      %v345 = vmax.f32 %v343, %v344
      %v346 = vrot.slane %v345, 4
      %v347 = vmax.f32 %v345, %v346
      %v348 = vrot.slane %v347, 2
      %v349 = vmax.f32 %v347, %v348
      %v350 = vrot.slane %v349, 1
      %v351 = vmax.f32 %v349, %v350
      %p352 = scmp.le.s32.totalorder %s328, %s327
      %p353 = por %p226, %p352
      %s354 = scalar_select %p353, 1, 0
      %v355 = vstv %s354
      %vm356 = vcmp.eq.s32.totalorder %v355, 1
      %v357 = vsel %vm356, 0.0, %v351
      %358 = vst.msk [vmem:[#allocation2 + $0x3] sm:$0x1] %vm258, %v357
      %s359 = sadd.s32 %s157, 4
      %s360 = sld [smem:[#allocation7 + %s359]]
      %s361 = sld [smem:[#allocation8 + %s359]]
      %v362 = vstv %s360
      %vm363 = vcmp.ge.s32.totalorder %v159, %v362
      %vm364 = vcmp.ge.s32.totalorder %v160, %v362
      %v365 = vstv %s361
      %vm366 = vcmp.lt.s32.totalorder %v159, %v365
      %vm367 = vcmp.lt.s32.totalorder %v160, %v365
      %vm368 = vmand %vm363, %vm366
      %vm369 = vmand %vm364, %vm367
      %v370 = vsel %vm368, 1, 0
      %v371 = vsel %vm369, 1, 0
      %vm372 = vcmp.eq.s32.totalorder %v370, 1
      %vm373 = vcmp.eq.s32.totalorder %v371, 1
      %v374 = vsel %vm372, %v218, -inf
      %v375 = vsel %vm373, %v225, -inf
      %v376 = vsel %vm211, %v374, -inf
      %v377 = vsel %vm211, %v375, -inf
      %v378 = vmax.f32 %v376, %v377
      %v379 = vrot.slane %v378, 4
      %v380 = vmax.f32 %v378, %v379
      %v381 = vrot.slane %v380, 2
      %v382 = vmax.f32 %v380, %v381
      %v383 = vrot.slane %v382, 1
      %v384 = vmax.f32 %v382, %v383
      %p385 = scmp.le.s32.totalorder %s361, %s360
      %p386 = por %p226, %p385
      %s387 = scalar_select %p386, 1, 0
      %v388 = vstv %s387
      %vm389 = vcmp.eq.s32.totalorder %v388, 1
      %v390 = vsel %vm389, 0.0, %v384
      %391 = vst.msk [vmem:[#allocation2 + $0x4] sm:$0x1] %vm258, %v390
      %s392 = sadd.s32 %s157, 5
      %s393 = sld [smem:[#allocation7 + %s392]]
      %s394 = sld [smem:[#allocation8 + %s392]]
      %v395 = vstv %s393
      %vm396 = vcmp.ge.s32.totalorder %v159, %v395
      %vm397 = vcmp.ge.s32.totalorder %v160, %v395
      %v398 = vstv %s394
      %vm399 = vcmp.lt.s32.totalorder %v159, %v398
      %vm400 = vcmp.lt.s32.totalorder %v160, %v398
      %vm401 = vmand %vm396, %vm399
      %vm402 = vmand %vm397, %vm400
      %v403 = vsel %vm401, 1, 0
      %v404 = vsel %vm402, 1, 0
      %vm405 = vcmp.eq.s32.totalorder %v403, 1
      %vm406 = vcmp.eq.s32.totalorder %v404, 1
      %v407 = vsel %vm405, %v218, -inf
      %v408 = vsel %vm406, %v225, -inf
      %v409 = vsel %vm211, %v407, -inf
      %v410 = vsel %vm211, %v408, -inf
      %v411 = vmax.f32 %v409, %v410
      %v412 = vrot.slane %v411, 4
      %v413 = vmax.f32 %v411, %v412
      %v414 = vrot.slane %v413, 2
      %v415 = vmax.f32 %v413, %v414
      %v416 = vrot.slane %v415, 1
      %v417 = vmax.f32 %v415, %v416
      %p418 = scmp.le.s32.totalorder %s394, %s393
      %p419 = por %p226, %p418
      %s420 = scalar_select %p419, 1, 0
      %v421 = vstv %s420
      %vm422 = vcmp.eq.s32.totalorder %v421, 1
      %v423 = vsel %vm422, 0.0, %v417
      %424 = vst.msk [vmem:[#allocation2 + $0x5] sm:$0x1] %vm258, %v423
      %s425 = sadd.s32 %s157, 6
      %s426 = sld [smem:[#allocation7 + %s425]]
      %s427 = sld [smem:[#allocation8 + %s425]]
      %v428 = vstv %s426
      %vm429 = vcmp.ge.s32.totalorder %v159, %v428
      %vm430 = vcmp.ge.s32.totalorder %v160, %v428
      %v431 = vstv %s427
      %vm432 = vcmp.lt.s32.totalorder %v159, %v431
      %vm433 = vcmp.lt.s32.totalorder %v160, %v431
      %vm434 = vmand %vm429, %vm432
      %vm435 = vmand %vm430, %vm433
      %v436 = vsel %vm434, 1, 0
      %v437 = vsel %vm435, 1, 0
      %vm438 = vcmp.eq.s32.totalorder %v436, 1
      %vm439 = vcmp.eq.s32.totalorder %v437, 1
      %v440 = vsel %vm438, %v218, -inf
      %v441 = vsel %vm439, %v225, -inf
      %v442 = vsel %vm211, %v440, -inf
      %v443 = vsel %vm211, %v441, -inf
      %v444 = vmax.f32 %v442, %v443
      %v445 = vrot.slane %v444, 4
      %v446 = vmax.f32 %v444, %v445
      %v447 = vrot.slane %v446, 2
      %v448 = vmax.f32 %v446, %v447
      %v449 = vrot.slane %v448, 1
      %v450 = vmax.f32 %v448, %v449
      %p451 = scmp.le.s32.totalorder %s427, %s426
      %p452 = por %p226, %p451
      %s453 = scalar_select %p452, 1, 0
      %v454 = vstv %s453
      %vm455 = vcmp.eq.s32.totalorder %v454, 1
      %v456 = vsel %vm455, 0.0, %v450
      %457 = vst.msk [vmem:[#allocation2 + $0x6] sm:$0x1] %vm258, %v456
      %s458 = sld [smem:[#allocation5 + %s260]]
      %s459 = sld [smem:[#allocation6 + %s260]]
      %p460 = scmp.gt.s32.totalorder %s458, 0
      %s461 = scalar_select %p460, %s458, 0
      %p462 = scmp.lt.s32.totalorder %s461, 12
      %s463 = scalar_select %p462, %s461, 12
      %s464 = smul.u32 %s463, 16
      %s465 = scalar_lea.vmem %s150, %s464
      %v466 = vld [vmem:[%s465] sm:$0xff]
      %v467 = vld [vmem:[%s465 + $0x8] sm:$0xff]
      %v468 = vld [vmem:[%s465 + $0x10] sm:$0xff]
      %v469 = vld [vmem:[%s465 + $0x18] sm:$0xff]
      %v470 = vld [vmem:[%s465 + $0x20] sm:$0xff]
      %v471 = vld [vmem:[%s465 + $0x28] sm:$0xff]
      %v472 = vld [vmem:[%s465 + $0x30] sm:$0xff]
      %v473 = vld [vmem:[%s465 + $0x38] sm:$0xff]
      %v474 = vstv %s463
      %v475 = vadd.s32 %v474, 1
      %v476 = vadd.s32 %v474, 2
      %v477 = vadd.s32 %v474, 3
      %v478 = vstv %s458
      %vm479 = vcmp.ge.s32.totalorder %v474, %v478
      %vm480 = vcmp.ge.s32.totalorder %v475, %v478
      %vm481 = vcmp.ge.s32.totalorder %v476, %v478
      %vm482 = vcmp.ge.s32.totalorder %v477, %v478
      %v483 = vstv %s459
      %vm484 = vcmp.lt.s32.totalorder %v474, %v483
      %vm485 = vcmp.lt.s32.totalorder %v475, %v483
      %vm486 = vcmp.lt.s32.totalorder %v476, %v483
      %vm487 = vcmp.lt.s32.totalorder %v477, %v483
      %vm488 = vmand %vm479, %vm484
      %vm489 = vmand %vm480, %vm485
      %vm490 = vmand %vm481, %vm486
      %vm491 = vmand %vm482, %vm487
      %v492 = vsel %vm488, 1, 0
      %v493 = vsel %vm489, 1, 0
      %v494 = vsel %vm490, 1, 0
      %v495 = vsel %vm491, 1, 0
      %vm496 = vcmp.eq.s32.totalorder %v492, 1
      %vm497 = vcmp.eq.s32.totalorder %v493, 1
      %vm498 = vcmp.eq.s32.totalorder %v494, 1
      %vm499 = vcmp.eq.s32.totalorder %v495, 1
      %v500 = vsel %vm496, %v466, -inf
      %v501 = vsel %vm496, %v467, -inf
      %v502 = vsel %vm497, %v468, -inf
      %v503 = vsel %vm497, %v469, -inf
      %v504 = vsel %vm498, %v470, -inf
      %v505 = vsel %vm498, %v471, -inf
      %v506 = vsel %vm499, %v472, -inf
      %v507 = vsel %vm499, %v473, -inf
      %v508 = vsel %vm211, %v500, -inf
      %v509 = vsel %vm211, %v502, -inf
      %v510 = vsel %vm211, %v504, -inf
      %v511 = vmax.f32 %v508, %v510
      %v512 = vsel %vm211, %v506, -inf
      %v513 = vmax.f32 %v509, %v512
      %v514 = vmax.f32 %v511, %v513
      %v515 = vsel %vm211, %v501, -inf
      %v516 = vsel %vm211, %v503, -inf
      %v517 = vsel %vm211, %v505, -inf
      %v518 = vmax.f32 %v515, %v517
      %v519 = vsel %vm211, %v507, -inf
      %v520 = vmax.f32 %v516, %v519
      %v521 = vmax.f32 %v518, %v520
      %p522 = scmp.le.s32.totalorder %s459, %s458
      %s523 = sld [smem:[#allocation7 + %s157]]
      %s524 = sld [smem:[#allocation8 + %s157]]
      %v525 = vstv %s523
      %vm526 = vcmp.ge.s32.totalorder %v159, %v525
      %vm527 = vcmp.ge.s32.totalorder %v160, %v525
      %v528 = vstv %s524
      %vm529 = vcmp.lt.s32.totalorder %v159, %v528
      %vm530 = vcmp.lt.s32.totalorder %v160, %v528
      %vm531 = vmand %vm526, %vm529
      %vm532 = vmand %vm527, %vm530
      %v533 = vsel %vm531, 1, 0
      %v534 = vsel %vm532, 1, 0
      %vm535 = vcmp.eq.s32.totalorder %v533, 1
      %vm536 = vcmp.eq.s32.totalorder %v534, 1
      %v537 = vsel %vm535, %v514, -inf
      %v538 = vsel %vm536, %v521, -inf
      %v539 = vsel %vm211, %v537, -inf
      %v540 = vsel %vm211, %v538, -inf
      %v541 = vmax.f32 %v539, %v540
      %v542 = vrot.slane %v541, 4
      %v543 = vmax.f32 %v541, %v542
      %v544 = vrot.slane %v543, 2
      %v545 = vmax.f32 %v543, %v544
      %v546 = vrot.slane %v545, 1
      %v547 = vmax.f32 %v545, %v546
      %p548 = scmp.le.s32.totalorder %s524, %s523
      %p549 = por %p522, %p548
      %s550 = scalar_select %p549, 1, 0
      %v551 = vstv %s550
      %vm552 = vcmp.eq.s32.totalorder %v551, 1
      %v553 = vsel %vm552, 0.0, %v547
      %554 = vst.msk [vmem:[#allocation2 + $0x7] sm:$0x1] %vm258, %v553
      %s555 = sld [smem:[#allocation7 + %s260]]
      %s556 = sld [smem:[#allocation8 + %s260]]
      %v557 = vstv %s555
      %vm558 = vcmp.ge.s32.totalorder %v159, %v557
      %vm559 = vcmp.ge.s32.totalorder %v160, %v557
      %v560 = vstv %s556
      %vm561 = vcmp.lt.s32.totalorder %v159, %v560
      %vm562 = vcmp.lt.s32.totalorder %v160, %v560
      %vm563 = vmand %vm558, %vm561
      %vm564 = vmand %vm559, %vm562
      %v565 = vsel %vm563, 1, 0
      %v566 = vsel %vm564, 1, 0
      %vm567 = vcmp.eq.s32.totalorder %v565, 1
      %vm568 = vcmp.eq.s32.totalorder %v566, 1
      %v569 = vsel %vm567, %v514, -inf
      %v570 = vsel %vm568, %v521, -inf
      %v571 = vsel %vm211, %v569, -inf
      %v572 = vsel %vm211, %v570, -inf
      %v573 = vmax.f32 %v571, %v572
      %v574 = vrot.slane %v573, 4
      %v575 = vmax.f32 %v573, %v574
      %v576 = vrot.slane %v575, 2
      %v577 = vmax.f32 %v575, %v576
      %v578 = vrot.slane %v577, 1
      %v579 = vmax.f32 %v577, %v578
      %p580 = scmp.le.s32.totalorder %s556, %s555
      %p581 = por %p522, %p580
      %s582 = scalar_select %p581, 1, 0
      %v583 = vstv %s582
      %vm584 = vcmp.eq.s32.totalorder %v583, 1
      %v585 = vsel %vm584, 0.0, %v579
      %586 = vst.msk [vmem:[#allocation2 + $0x8] sm:$0x1] %vm258, %v585
      %s587 = sld [smem:[#allocation7 + %s293]]
      %s588 = sld [smem:[#allocation8 + %s293]]
      %v589 = vstv %s587
      %vm590 = vcmp.ge.s32.totalorder %v159, %v589
      %vm591 = vcmp.ge.s32.totalorder %v160, %v589
      %v592 = vstv %s588
      %vm593 = vcmp.lt.s32.totalorder %v159, %v592
      %vm594 = vcmp.lt.s32.totalorder %v160, %v592
      %vm595 = vmand %vm590, %vm593
      %vm596 = vmand %vm591, %vm594
      %v597 = vsel %vm595, 1, 0
      %v598 = vsel %vm596, 1, 0
      %vm599 = vcmp.eq.s32.totalorder %v597, 1
      %vm600 = vcmp.eq.s32.totalorder %v598, 1
      %v601 = vsel %vm599, %v514, -inf
      %v602 = vsel %vm600, %v521, -inf
      %v603 = vsel %vm211, %v601, -inf
      %v604 = vsel %vm211, %v602, -inf
      %v605 = vmax.f32 %v603, %v604
      %v606 = vrot.slane %v605, 4
      %v607 = vmax.f32 %v605, %v606
      %v608 = vrot.slane %v607, 2
      %v609 = vmax.f32 %v607, %v608
      %v610 = vrot.slane %v609, 1
      %v611 = vmax.f32 %v609, %v610
      %p612 = scmp.le.s32.totalorder %s588, %s587
      %p613 = por %p522, %p612
      %s614 = scalar_select %p613, 1, 0
      %v615 = vstv %s614
      %vm616 = vcmp.eq.s32.totalorder %v615, 1
      %v617 = vsel %vm616, 0.0, %v611
      %618 = vst.msk [vmem:[#allocation2 + $0x9] sm:$0x1] %vm258, %v617
      %s619 = sld [smem:[#allocation7 + %s326]]
      %s620 = sld [smem:[#allocation8 + %s326]]
      %v621 = vstv %s619
      %vm622 = vcmp.ge.s32.totalorder %v159, %v621
      %vm623 = vcmp.ge.s32.totalorder %v160, %v621
      %v624 = vstv %s620
      %vm625 = vcmp.lt.s32.totalorder %v159, %v624
      %vm626 = vcmp.lt.s32.totalorder %v160, %v624
      %vm627 = vmand %vm622, %vm625
      %vm628 = vmand %vm623, %vm626
      %v629 = vsel %vm627, 1, 0
      %v630 = vsel %vm628, 1, 0
      %vm631 = vcmp.eq.s32.totalorder %v629, 1
      %vm632 = vcmp.eq.s32.totalorder %v630, 1
      %v633 = vsel %vm631, %v514, -inf
      %v634 = vsel %vm632, %v521, -inf
      %v635 = vsel %vm211, %v633, -inf
      %v636 = vsel %vm211, %v634, -inf
      %v637 = vmax.f32 %v635, %v636
      %v638 = vrot.slane %v637, 4
      %v639 = vmax.f32 %v637, %v638
      %v640 = vrot.slane %v639, 2
      %v641 = vmax.f32 %v639, %v640
      %v642 = vrot.slane %v641, 1
      %v643 = vmax.f32 %v641, %v642
      %p644 = scmp.le.s32.totalorder %s620, %s619
      %p645 = por %p522, %p644
      %s646 = scalar_select %p645, 1, 0
      %v647 = vstv %s646
      %vm648 = vcmp.eq.s32.totalorder %v647, 1
      %v649 = vsel %vm648, 0.0, %v643
      %650 = vst.msk [vmem:[#allocation2 + $0xa] sm:$0x1] %vm258, %v649
      %s651 = sld [smem:[#allocation7 + %s359]]
      %s652 = sld [smem:[#allocation8 + %s359]]
      %v653 = vstv %s651
      %vm654 = vcmp.ge.s32.totalorder %v159, %v653
      %vm655 = vcmp.ge.s32.totalorder %v160, %v653
      %v656 = vstv %s652
      %vm657 = vcmp.lt.s32.totalorder %v159, %v656
      %vm658 = vcmp.lt.s32.totalorder %v160, %v656
      %vm659 = vmand %vm654, %vm657
      %vm660 = vmand %vm655, %vm658
      %v661 = vsel %vm659, 1, 0
      %v662 = vsel %vm660, 1, 0
      %vm663 = vcmp.eq.s32.totalorder %v661, 1
      %vm664 = vcmp.eq.s32.totalorder %v662, 1
      %v665 = vsel %vm663, %v514, -inf
      %v666 = vsel %vm664, %v521, -inf
      %v667 = vsel %vm211, %v665, -inf
      %v668 = vsel %vm211, %v666, -inf
      %v669 = vmax.f32 %v667, %v668
      %v670 = vrot.slane %v669, 4
      %v671 = vmax.f32 %v669, %v670
      %v672 = vrot.slane %v671, 2
      %v673 = vmax.f32 %v671, %v672
      %v674 = vrot.slane %v673, 1
      %v675 = vmax.f32 %v673, %v674
      %p676 = scmp.le.s32.totalorder %s652, %s651
      %p677 = por %p522, %p676
      %s678 = scalar_select %p677, 1, 0
      %v679 = vstv %s678
      %vm680 = vcmp.eq.s32.totalorder %v679, 1
      %v681 = vsel %vm680, 0.0, %v675
      %682 = vst.msk [vmem:[#allocation2 + $0xb] sm:$0x1] %vm258, %v681
      %s683 = sld [smem:[#allocation7 + %s392]]
      %s684 = sld [smem:[#allocation8 + %s392]]
      %v685 = vstv %s683
      %vm686 = vcmp.ge.s32.totalorder %v159, %v685
      %vm687 = vcmp.ge.s32.totalorder %v160, %v685
      %v688 = vstv %s684
      %vm689 = vcmp.lt.s32.totalorder %v159, %v688
      %vm690 = vcmp.lt.s32.totalorder %v160, %v688
      %vm691 = vmand %vm686, %vm689
      %vm692 = vmand %vm687, %vm690
      %v693 = vsel %vm691, 1, 0
      %v694 = vsel %vm692, 1, 0
      %vm695 = vcmp.eq.s32.totalorder %v693, 1
      %vm696 = vcmp.eq.s32.totalorder %v694, 1
      %v697 = vsel %vm695, %v514, -inf
      %v698 = vsel %vm696, %v521, -inf
      %v699 = vsel %vm211, %v697, -inf
      %v700 = vsel %vm211, %v698, -inf
      %v701 = vmax.f32 %v699, %v700
      %v702 = vrot.slane %v701, 4
      %v703 = vmax.f32 %v701, %v702
      %v704 = vrot.slane %v703, 2
      %v705 = vmax.f32 %v703, %v704
      %v706 = vrot.slane %v705, 1
      %v707 = vmax.f32 %v705, %v706
      %p708 = scmp.le.s32.totalorder %s684, %s683
      %p709 = por %p522, %p708
      %s710 = scalar_select %p709, 1, 0
      %v711 = vstv %s710
      %vm712 = vcmp.eq.s32.totalorder %v711, 1
      %v713 = vsel %vm712, 0.0, %v707
      %714 = vst.msk [vmem:[#allocation2 + $0xc] sm:$0x1] %vm258, %v713
      %s715 = sld [smem:[#allocation7 + %s425]]
      %s716 = sld [smem:[#allocation8 + %s425]]
      %v717 = vstv %s715
      %vm718 = vcmp.ge.s32.totalorder %v159, %v717
      %vm719 = vcmp.ge.s32.totalorder %v160, %v717
      %v720 = vstv %s716
      %vm721 = vcmp.lt.s32.totalorder %v159, %v720
      %vm722 = vcmp.lt.s32.totalorder %v160, %v720
      %vm723 = vmand %vm718, %vm721
      %vm724 = vmand %vm719, %vm722
      %v725 = vsel %vm723, 1, 0
      %v726 = vsel %vm724, 1, 0
      %vm727 = vcmp.eq.s32.totalorder %v725, 1
      %vm728 = vcmp.eq.s32.totalorder %v726, 1
      %v729 = vsel %vm727, %v514, -inf
      %v730 = vsel %vm728, %v521, -inf
      %v731 = vsel %vm211, %v729, -inf
      %v732 = vsel %vm211, %v730, -inf
      %v733 = vmax.f32 %v731, %v732
      %v734 = vrot.slane %v733, 4
      %v735 = vmax.f32 %v733, %v734
      %v736 = vrot.slane %v735, 2
      %v737 = vmax.f32 %v735, %v736
      %v738 = vrot.slane %v737, 1
      %v739 = vmax.f32 %v737, %v738
      %p740 = scmp.le.s32.totalorder %s716, %s715
      %p741 = por %p522, %p740
      %s742 = scalar_select %p741, 1, 0
      %v743 = vstv %s742
      %vm744 = vcmp.eq.s32.totalorder %v743, 1
      %v745 = vsel %vm744, 0.0, %v739
      %746 = vst.msk [vmem:[#allocation2 + $0xd] sm:$0x1] %vm258, %v745
      %s747 = sld [smem:[#allocation5 + %s293]]
      %s748 = sld [smem:[#allocation6 + %s293]]
      %p749 = scmp.gt.s32.totalorder %s747, 0
      %s750 = scalar_select %p749, %s747, 0
      %p751 = scmp.lt.s32.totalorder %s750, 12
      %s752 = scalar_select %p751, %s750, 12
      %s753 = smul.u32 %s752, 16
      %s754 = scalar_lea.vmem %s150, %s753
      %v755 = vld [vmem:[%s754] sm:$0xff]
      %v756 = vld [vmem:[%s754 + $0x8] sm:$0xff]
      %v757 = vld [vmem:[%s754 + $0x10] sm:$0xff]
      %v758 = vld [vmem:[%s754 + $0x18] sm:$0xff]
      %v759 = vld [vmem:[%s754 + $0x20] sm:$0xff]
      %v760 = vld [vmem:[%s754 + $0x28] sm:$0xff]
      %v761 = vld [vmem:[%s754 + $0x30] sm:$0xff]
      %v762 = vld [vmem:[%s754 + $0x38] sm:$0xff]
      %v763 = vstv %s752
      %v764 = vadd.s32 %v763, 1
      %v765 = vadd.s32 %v763, 2
      %v766 = vadd.s32 %v763, 3
      %v767 = vstv %s747
      %vm768 = vcmp.ge.s32.totalorder %v763, %v767
      %vm769 = vcmp.ge.s32.totalorder %v764, %v767
      %vm770 = vcmp.ge.s32.totalorder %v765, %v767
      %vm771 = vcmp.ge.s32.totalorder %v766, %v767
      %v772 = vstv %s748
      %vm773 = vcmp.lt.s32.totalorder %v763, %v772
      %vm774 = vcmp.lt.s32.totalorder %v764, %v772
      %vm775 = vcmp.lt.s32.totalorder %v765, %v772
      %vm776 = vcmp.lt.s32.totalorder %v766, %v772
      %vm777 = vmand %vm768, %vm773
      %vm778 = vmand %vm769, %vm774
      %vm779 = vmand %vm770, %vm775
      %vm780 = vmand %vm771, %vm776
      %v781 = vsel %vm777, 1, 0
      %v782 = vsel %vm778, 1, 0
      %v783 = vsel %vm779, 1, 0
      %v784 = vsel %vm780, 1, 0
      %vm785 = vcmp.eq.s32.totalorder %v781, 1
      %vm786 = vcmp.eq.s32.totalorder %v782, 1
      %vm787 = vcmp.eq.s32.totalorder %v783, 1
      %vm788 = vcmp.eq.s32.totalorder %v784, 1
      %v789 = vsel %vm785, %v755, -inf
      %v790 = vsel %vm785, %v756, -inf
      %v791 = vsel %vm786, %v757, -inf
      %v792 = vsel %vm786, %v758, -inf
      %v793 = vsel %vm787, %v759, -inf
      %v794 = vsel %vm787, %v760, -inf
      %v795 = vsel %vm788, %v761, -inf
      %v796 = vsel %vm788, %v762, -inf
      %v797 = vsel %vm211, %v789, -inf
      %v798 = vsel %vm211, %v791, -inf
      %v799 = vsel %vm211, %v793, -inf
      %v800 = vmax.f32 %v797, %v799
      %v801 = vsel %vm211, %v795, -inf
      %v802 = vmax.f32 %v798, %v801
      %v803 = vmax.f32 %v800, %v802
      %v804 = vsel %vm211, %v790, -inf
      %v805 = vsel %vm211, %v792, -inf
      %v806 = vsel %vm211, %v794, -inf
      %v807 = vmax.f32 %v804, %v806
      %v808 = vsel %vm211, %v796, -inf
      %v809 = vmax.f32 %v805, %v808
      %v810 = vmax.f32 %v807, %v809
      %p811 = scmp.le.s32.totalorder %s748, %s747
      %s812 = sld [smem:[#allocation7 + %s157]]
      %s813 = sld [smem:[#allocation8 + %s157]]
      %v814 = vstv %s812
      %vm815 = vcmp.ge.s32.totalorder %v159, %v814
      %vm816 = vcmp.ge.s32.totalorder %v160, %v814
      %v817 = vstv %s813
      %vm818 = vcmp.lt.s32.totalorder %v159, %v817
      %vm819 = vcmp.lt.s32.totalorder %v160, %v817
      %vm820 = vmand %vm815, %vm818
      %vm821 = vmand %vm816, %vm819
      %v822 = vsel %vm820, 1, 0
      %v823 = vsel %vm821, 1, 0
      %vm824 = vcmp.eq.s32.totalorder %v822, 1
      %vm825 = vcmp.eq.s32.totalorder %v823, 1
      %v826 = vsel %vm824, %v803, -inf
      %v827 = vsel %vm825, %v810, -inf
      %v828 = vsel %vm211, %v826, -inf
      %v829 = vsel %vm211, %v827, -inf
      %v830 = vmax.f32 %v828, %v829
      %v831 = vrot.slane %v830, 4
      %v832 = vmax.f32 %v830, %v831
      %v833 = vrot.slane %v832, 2
      %v834 = vmax.f32 %v832, %v833
      %v835 = vrot.slane %v834, 1
      %v836 = vmax.f32 %v834, %v835
      %p837 = scmp.le.s32.totalorder %s813, %s812
      %p838 = por %p811, %p837
      %s839 = scalar_select %p838, 1, 0
      %v840 = vstv %s839
      %vm841 = vcmp.eq.s32.totalorder %v840, 1
      %v842 = vsel %vm841, 0.0, %v836
      %843 = vst.msk [vmem:[#allocation2 + $0xe] sm:$0x1] %vm258, %v842
      %s844 = sld [smem:[#allocation7 + %s260]]
      %s845 = sld [smem:[#allocation8 + %s260]]
      %v846 = vstv %s844
      %vm847 = vcmp.ge.s32.totalorder %v159, %v846
      %vm848 = vcmp.ge.s32.totalorder %v160, %v846
      %v849 = vstv %s845
      %vm850 = vcmp.lt.s32.totalorder %v159, %v849
      %vm851 = vcmp.lt.s32.totalorder %v160, %v849
      %vm852 = vmand %vm847, %vm850
      %vm853 = vmand %vm848, %vm851
      %v854 = vsel %vm852, 1, 0
      %v855 = vsel %vm853, 1, 0
      %vm856 = vcmp.eq.s32.totalorder %v854, 1
      %vm857 = vcmp.eq.s32.totalorder %v855, 1
      %v858 = vsel %vm856, %v803, -inf
      %v859 = vsel %vm857, %v810, -inf
      %v860 = vsel %vm211, %v858, -inf
      %v861 = vsel %vm211, %v859, -inf
      %v862 = vmax.f32 %v860, %v861
      %v863 = vrot.slane %v862, 4
      %v864 = vmax.f32 %v862, %v863
      %v865 = vrot.slane %v864, 2
      %v866 = vmax.f32 %v864, %v865
      %v867 = vrot.slane %v866, 1
      %v868 = vmax.f32 %v866, %v867
      %p869 = scmp.le.s32.totalorder %s845, %s844
      %p870 = por %p811, %p869
      %s871 = scalar_select %p870, 1, 0
      %v872 = vstv %s871
      %vm873 = vcmp.eq.s32.totalorder %v872, 1
      %v874 = vsel %vm873, 0.0, %v868
      %875 = vst.msk [vmem:[#allocation2 + $0xf] sm:$0x1] %vm258, %v874
      %s876 = sld [smem:[#allocation7 + %s293]]
      %s877 = sld [smem:[#allocation8 + %s293]]
      %v878 = vstv %s876
      %vm879 = vcmp.ge.s32.totalorder %v159, %v878
      %vm880 = vcmp.ge.s32.totalorder %v160, %v878
      %v881 = vstv %s877
      %vm882 = vcmp.lt.s32.totalorder %v159, %v881
      %vm883 = vcmp.lt.s32.totalorder %v160, %v881
      %vm884 = vmand %vm879, %vm882
      %vm885 = vmand %vm880, %vm883
      %v886 = vsel %vm884, 1, 0
      %v887 = vsel %vm885, 1, 0
      %vm888 = vcmp.eq.s32.totalorder %v886, 1
      %vm889 = vcmp.eq.s32.totalorder %v887, 1
      %v890 = vsel %vm888, %v803, -inf
      %v891 = vsel %vm889, %v810, -inf
      %v892 = vsel %vm211, %v890, -inf
      %v893 = vsel %vm211, %v891, -inf
      %v894 = vmax.f32 %v892, %v893
      %v895 = vrot.slane %v894, 4
      %v896 = vmax.f32 %v894, %v895
      %v897 = vrot.slane %v896, 2
      %v898 = vmax.f32 %v896, %v897
      %v899 = vrot.slane %v898, 1
      %v900 = vmax.f32 %v898, %v899
      %p901 = scmp.le.s32.totalorder %s877, %s876
      %p902 = por %p811, %p901
      %s903 = scalar_select %p902, 1, 0
      %v904 = vstv %s903
      %vm905 = vcmp.eq.s32.totalorder %v904, 1
      %v906 = vsel %vm905, 0.0, %v900
      %907 = vst.msk [vmem:[#allocation2 + $0x10] sm:$0x1] %vm258, %v906
      %s908 = sld [smem:[#allocation7 + %s326]]
      %s909 = sld [smem:[#allocation8 + %s326]]
      %v910 = vstv %s908
      %vm911 = vcmp.ge.s32.totalorder %v159, %v910
      %vm912 = vcmp.ge.s32.totalorder %v160, %v910
      %v913 = vstv %s909
      %vm914 = vcmp.lt.s32.totalorder %v159, %v913
      %vm915 = vcmp.lt.s32.totalorder %v160, %v913
      %vm916 = vmand %vm911, %vm914
      %vm917 = vmand %vm912, %vm915
      %v918 = vsel %vm916, 1, 0
      %v919 = vsel %vm917, 1, 0
      %vm920 = vcmp.eq.s32.totalorder %v918, 1
      %vm921 = vcmp.eq.s32.totalorder %v919, 1
      %v922 = vsel %vm920, %v803, -inf
      %v923 = vsel %vm921, %v810, -inf
      %v924 = vsel %vm211, %v922, -inf
      %v925 = vsel %vm211, %v923, -inf
      %v926 = vmax.f32 %v924, %v925
      %v927 = vrot.slane %v926, 4
      %v928 = vmax.f32 %v926, %v927
      %v929 = vrot.slane %v928, 2
      %v930 = vmax.f32 %v928, %v929
      %v931 = vrot.slane %v930, 1
      %v932 = vmax.f32 %v930, %v931
      %p933 = scmp.le.s32.totalorder %s909, %s908
      %p934 = por %p811, %p933
      %s935 = scalar_select %p934, 1, 0
      %v936 = vstv %s935
      %vm937 = vcmp.eq.s32.totalorder %v936, 1
      %v938 = vsel %vm937, 0.0, %v932
      %939 = vst.msk [vmem:[#allocation2 + $0x11] sm:$0x1] %vm258, %v938
      %s940 = sld [smem:[#allocation7 + %s359]]
      %s941 = sld [smem:[#allocation8 + %s359]]
      %v942 = vstv %s940
      %vm943 = vcmp.ge.s32.totalorder %v159, %v942
      %vm944 = vcmp.ge.s32.totalorder %v160, %v942
      %v945 = vstv %s941
      %vm946 = vcmp.lt.s32.totalorder %v159, %v945
      %vm947 = vcmp.lt.s32.totalorder %v160, %v945
      %vm948 = vmand %vm943, %vm946
      %vm949 = vmand %vm944, %vm947
      %v950 = vsel %vm948, 1, 0
      %v951 = vsel %vm949, 1, 0
      %vm952 = vcmp.eq.s32.totalorder %v950, 1
      %vm953 = vcmp.eq.s32.totalorder %v951, 1
      %v954 = vsel %vm952, %v803, -inf
      %v955 = vsel %vm953, %v810, -inf
      %v956 = vsel %vm211, %v954, -inf
      %v957 = vsel %vm211, %v955, -inf
      %v958 = vmax.f32 %v956, %v957
      %v959 = vrot.slane %v958, 4
      %v960 = vmax.f32 %v958, %v959
      %v961 = vrot.slane %v960, 2
      %v962 = vmax.f32 %v960, %v961
      %v963 = vrot.slane %v962, 1
      %v964 = vmax.f32 %v962, %v963
      %p965 = scmp.le.s32.totalorder %s941, %s940
      %p966 = por %p811, %p965
      %s967 = scalar_select %p966, 1, 0
      %v968 = vstv %s967
      %vm969 = vcmp.eq.s32.totalorder %v968, 1
      %v970 = vsel %vm969, 0.0, %v964
      %971 = vst.msk [vmem:[#allocation2 + $0x12] sm:$0x1] %vm258, %v970
      %s972 = sld [smem:[#allocation7 + %s392]]
      %s973 = sld [smem:[#allocation8 + %s392]]
      %v974 = vstv %s972
      %vm975 = vcmp.ge.s32.totalorder %v159, %v974
      %vm976 = vcmp.ge.s32.totalorder %v160, %v974
      %v977 = vstv %s973
      %vm978 = vcmp.lt.s32.totalorder %v159, %v977
      %vm979 = vcmp.lt.s32.totalorder %v160, %v977
      %vm980 = vmand %vm975, %vm978
      %vm981 = vmand %vm976, %vm979
      %v982 = vsel %vm980, 1, 0
      %v983 = vsel %vm981, 1, 0
      %vm984 = vcmp.eq.s32.totalorder %v982, 1
      %vm985 = vcmp.eq.s32.totalorder %v983, 1
      %v986 = vsel %vm984, %v803, -inf
      %v987 = vsel %vm985, %v810, -inf
      %v988 = vsel %vm211, %v986, -inf
      %v989 = vsel %vm211, %v987, -inf
      %v990 = vmax.f32 %v988, %v989
      %v991 = vrot.slane %v990, 4
      %v992 = vmax.f32 %v990, %v991
      %v993 = vrot.slane %v992, 2
      %v994 = vmax.f32 %v992, %v993
      %v995 = vrot.slane %v994, 1
      %v996 = vmax.f32 %v994, %v995
      %p997 = scmp.le.s32.totalorder %s973, %s972
      %p998 = por %p811, %p997
      %s999 = scalar_select %p998, 1, 0
      %v1000 = vstv %s999
      %vm1001 = vcmp.eq.s32.totalorder %v1000, 1
      %v1002 = vsel %vm1001, 0.0, %v996
      %1003 = vst.msk [vmem:[#allocation2 + $0x13] sm:$0x1] %vm258, %v1002
      %s1004 = sld [smem:[#allocation7 + %s425]]
      %s1005 = sld [smem:[#allocation8 + %s425]]
      %v1006 = vstv %s1004
      %vm1007 = vcmp.ge.s32.totalorder %v159, %v1006
      %vm1008 = vcmp.ge.s32.totalorder %v160, %v1006
      %v1009 = vstv %s1005
      %vm1010 = vcmp.lt.s32.totalorder %v159, %v1009
      %vm1011 = vcmp.lt.s32.totalorder %v160, %v1009
      %vm1012 = vmand %vm1007, %vm1010
      %vm1013 = vmand %vm1008, %vm1011
      %v1014 = vsel %vm1012, 1, 0
      %v1015 = vsel %vm1013, 1, 0
      %vm1016 = vcmp.eq.s32.totalorder %v1014, 1
      %vm1017 = vcmp.eq.s32.totalorder %v1015, 1
      %v1018 = vsel %vm1016, %v803, -inf
      %v1019 = vsel %vm1017, %v810, -inf
      %v1020 = vsel %vm211, %v1018, -inf
      %v1021 = vsel %vm211, %v1019, -inf
      %v1022 = vmax.f32 %v1020, %v1021
      %v1023 = vrot.slane %v1022, 4
      %v1024 = vmax.f32 %v1022, %v1023
      %v1025 = vrot.slane %v1024, 2
      %v1026 = vmax.f32 %v1024, %v1025
      %v1027 = vrot.slane %v1026, 1
      %v1028 = vmax.f32 %v1026, %v1027
      %p1029 = scmp.le.s32.totalorder %s1005, %s1004
      %p1030 = por %p811, %p1029
      %s1031 = scalar_select %p1030, 1, 0
      %v1032 = vstv %s1031
      %vm1033 = vcmp.eq.s32.totalorder %v1032, 1
      %v1034 = vsel %vm1033, 0.0, %v1028
      %1035 = vst.msk [vmem:[#allocation2 + $0x14] sm:$0x1] %vm258, %v1034
      %s1036 = sld [smem:[#allocation5 + %s326]]
      %s1037 = sld [smem:[#allocation6 + %s326]]
      %p1038 = scmp.gt.s32.totalorder %s1036, 0
      %s1039 = scalar_select %p1038, %s1036, 0
      %p1040 = scmp.lt.s32.totalorder %s1039, 12
      %s1041 = scalar_select %p1040, %s1039, 12
      %s1042 = smul.u32 %s1041, 16
      %s1043 = scalar_lea.vmem %s150, %s1042
      %v1044 = vld [vmem:[%s1043] sm:$0xff]
      %v1045 = vld [vmem:[%s1043 + $0x8] sm:$0xff]
      %v1046 = vld [vmem:[%s1043 + $0x10] sm:$0xff]
      %v1047 = vld [vmem:[%s1043 + $0x18] sm:$0xff]
      %v1048 = vld [vmem:[%s1043 + $0x20] sm:$0xff]
      %v1049 = vld [vmem:[%s1043 + $0x28] sm:$0xff]
      %v1050 = vld [vmem:[%s1043 + $0x30] sm:$0xff]
      %v1051 = vld [vmem:[%s1043 + $0x38] sm:$0xff]
      %v1052 = vstv %s1041
      %v1053 = vadd.s32 %v1052, 1
      %v1054 = vadd.s32 %v1052, 2
      %v1055 = vadd.s32 %v1052, 3
      %v1056 = vstv %s1036
      %vm1057 = vcmp.ge.s32.totalorder %v1052, %v1056
      %vm1058 = vcmp.ge.s32.totalorder %v1053, %v1056
      %vm1059 = vcmp.ge.s32.totalorder %v1054, %v1056
      %vm1060 = vcmp.ge.s32.totalorder %v1055, %v1056
      %v1061 = vstv %s1037
      %vm1062 = vcmp.lt.s32.totalorder %v1052, %v1061
      %vm1063 = vcmp.lt.s32.totalorder %v1053, %v1061
      %vm1064 = vcmp.lt.s32.totalorder %v1054, %v1061
      %vm1065 = vcmp.lt.s32.totalorder %v1055, %v1061
      %vm1066 = vmand %vm1057, %vm1062
      %vm1067 = vmand %vm1058, %vm1063
      %vm1068 = vmand %vm1059, %vm1064
      %vm1069 = vmand %vm1060, %vm1065
      %v1070 = vsel %vm1066, 1, 0
      %v1071 = vsel %vm1067, 1, 0
      %v1072 = vsel %vm1068, 1, 0
      %v1073 = vsel %vm1069, 1, 0
      %vm1074 = vcmp.eq.s32.totalorder %v1070, 1
      %vm1075 = vcmp.eq.s32.totalorder %v1071, 1
      %vm1076 = vcmp.eq.s32.totalorder %v1072, 1
      %vm1077 = vcmp.eq.s32.totalorder %v1073, 1
      %v1078 = vsel %vm1074, %v1044, -inf
      %v1079 = vsel %vm1074, %v1045, -inf
      %v1080 = vsel %vm1075, %v1046, -inf
      %v1081 = vsel %vm1075, %v1047, -inf
      %v1082 = vsel %vm1076, %v1048, -inf
      %v1083 = vsel %vm1076, %v1049, -inf
      %v1084 = vsel %vm1077, %v1050, -inf
      %v1085 = vsel %vm1077, %v1051, -inf
      %v1086 = vsel %vm211, %v1078, -inf
      %v1087 = vsel %vm211, %v1080, -inf
      %v1088 = vsel %vm211, %v1082, -inf
      %v1089 = vmax.f32 %v1086, %v1088
      %v1090 = vsel %vm211, %v1084, -inf
      %v1091 = vmax.f32 %v1087, %v1090
      %v1092 = vmax.f32 %v1089, %v1091
      %v1093 = vsel %vm211, %v1079, -inf
      %v1094 = vsel %vm211, %v1081, -inf
      %v1095 = vsel %vm211, %v1083, -inf
      %v1096 = vmax.f32 %v1093, %v1095
      %v1097 = vsel %vm211, %v1085, -inf
      %v1098 = vmax.f32 %v1094, %v1097
      %v1099 = vmax.f32 %v1096, %v1098
      %p1100 = scmp.le.s32.totalorder %s1037, %s1036
      %s1101 = sld [smem:[#allocation7 + %s157]]
      %s1102 = sld [smem:[#allocation8 + %s157]]
      %v1103 = vstv %s1101
      %vm1104 = vcmp.ge.s32.totalorder %v159, %v1103
      %vm1105 = vcmp.ge.s32.totalorder %v160, %v1103
      %v1106 = vstv %s1102
      %vm1107 = vcmp.lt.s32.totalorder %v159, %v1106
      %vm1108 = vcmp.lt.s32.totalorder %v160, %v1106
      %vm1109 = vmand %vm1104, %vm1107
      %vm1110 = vmand %vm1105, %vm1108
      %v1111 = vsel %vm1109, 1, 0
      %v1112 = vsel %vm1110, 1, 0
      %vm1113 = vcmp.eq.s32.totalorder %v1111, 1
      %vm1114 = vcmp.eq.s32.totalorder %v1112, 1
      %v1115 = vsel %vm1113, %v1092, -inf
      %v1116 = vsel %vm1114, %v1099, -inf
      %v1117 = vsel %vm211, %v1115, -inf
      %v1118 = vsel %vm211, %v1116, -inf
      %v1119 = vmax.f32 %v1117, %v1118
      %v1120 = vrot.slane %v1119, 4
      %v1121 = vmax.f32 %v1119, %v1120
      %v1122 = vrot.slane %v1121, 2
      %v1123 = vmax.f32 %v1121, %v1122
      %v1124 = vrot.slane %v1123, 1
      %v1125 = vmax.f32 %v1123, %v1124
      %p1126 = scmp.le.s32.totalorder %s1102, %s1101
      %p1127 = por %p1100, %p1126
      %s1128 = scalar_select %p1127, 1, 0
      %v1129 = vstv %s1128
      %vm1130 = vcmp.eq.s32.totalorder %v1129, 1
      %v1131 = vsel %vm1130, 0.0, %v1125
      %1132 = vst.msk [vmem:[#allocation2 + $0x15] sm:$0x1] %vm258, %v1131
      %s1133 = sld [smem:[#allocation7 + %s260]]
      %s1134 = sld [smem:[#allocation8 + %s260]]
      %v1135 = vstv %s1133
      %vm1136 = vcmp.ge.s32.totalorder %v159, %v1135
      %vm1137 = vcmp.ge.s32.totalorder %v160, %v1135
      %v1138 = vstv %s1134
      %vm1139 = vcmp.lt.s32.totalorder %v159, %v1138
      %vm1140 = vcmp.lt.s32.totalorder %v160, %v1138
      %vm1141 = vmand %vm1136, %vm1139
      %vm1142 = vmand %vm1137, %vm1140
      %v1143 = vsel %vm1141, 1, 0
      %v1144 = vsel %vm1142, 1, 0
      %vm1145 = vcmp.eq.s32.totalorder %v1143, 1
      %vm1146 = vcmp.eq.s32.totalorder %v1144, 1
      %v1147 = vsel %vm1145, %v1092, -inf
      %v1148 = vsel %vm1146, %v1099, -inf
      %v1149 = vsel %vm211, %v1147, -inf
      %v1150 = vsel %vm211, %v1148, -inf
      %v1151 = vmax.f32 %v1149, %v1150
      %v1152 = vrot.slane %v1151, 4
      %v1153 = vmax.f32 %v1151, %v1152
      %v1154 = vrot.slane %v1153, 2
      %v1155 = vmax.f32 %v1153, %v1154
      %v1156 = vrot.slane %v1155, 1
      %v1157 = vmax.f32 %v1155, %v1156
      %p1158 = scmp.le.s32.totalorder %s1134, %s1133
      %p1159 = por %p1100, %p1158
      %s1160 = scalar_select %p1159, 1, 0
      %v1161 = vstv %s1160
      %vm1162 = vcmp.eq.s32.totalorder %v1161, 1
      %v1163 = vsel %vm1162, 0.0, %v1157
      %1164 = vst.msk [vmem:[#allocation2 + $0x16] sm:$0x1] %vm258, %v1163
      %s1165 = sld [smem:[#allocation7 + %s293]]
      %s1166 = sld [smem:[#allocation8 + %s293]]
      %v1167 = vstv %s1165
      %vm1168 = vcmp.ge.s32.totalorder %v159, %v1167
      %vm1169 = vcmp.ge.s32.totalorder %v160, %v1167
      %v1170 = vstv %s1166
      %vm1171 = vcmp.lt.s32.totalorder %v159, %v1170
      %vm1172 = vcmp.lt.s32.totalorder %v160, %v1170
      %vm1173 = vmand %vm1168, %vm1171
      %vm1174 = vmand %vm1169, %vm1172
      %v1175 = vsel %vm1173, 1, 0
      %v1176 = vsel %vm1174, 1, 0
      %vm1177 = vcmp.eq.s32.totalorder %v1175, 1
      %vm1178 = vcmp.eq.s32.totalorder %v1176, 1
      %v1179 = vsel %vm1177, %v1092, -inf
      %v1180 = vsel %vm1178, %v1099, -inf
      %v1181 = vsel %vm211, %v1179, -inf
      %v1182 = vsel %vm211, %v1180, -inf
      %v1183 = vmax.f32 %v1181, %v1182
      %v1184 = vrot.slane %v1183, 4
      %v1185 = vmax.f32 %v1183, %v1184
      %v1186 = vrot.slane %v1185, 2
      %v1187 = vmax.f32 %v1185, %v1186
      %v1188 = vrot.slane %v1187, 1
      %v1189 = vmax.f32 %v1187, %v1188
      %p1190 = scmp.le.s32.totalorder %s1166, %s1165
      %p1191 = por %p1100, %p1190
      %s1192 = scalar_select %p1191, 1, 0
      %v1193 = vstv %s1192
      %vm1194 = vcmp.eq.s32.totalorder %v1193, 1
      %v1195 = vsel %vm1194, 0.0, %v1189
      %1196 = vst.msk [vmem:[#allocation2 + $0x17] sm:$0x1] %vm258, %v1195
      %s1197 = sld [smem:[#allocation7 + %s326]]
      %s1198 = sld [smem:[#allocation8 + %s326]]
      %v1199 = vstv %s1197
      %vm1200 = vcmp.ge.s32.totalorder %v159, %v1199
      %vm1201 = vcmp.ge.s32.totalorder %v160, %v1199
      %v1202 = vstv %s1198
      %vm1203 = vcmp.lt.s32.totalorder %v159, %v1202
      %vm1204 = vcmp.lt.s32.totalorder %v160, %v1202
      %vm1205 = vmand %vm1200, %vm1203
      %vm1206 = vmand %vm1201, %vm1204
      %v1207 = vsel %vm1205, 1, 0
      %v1208 = vsel %vm1206, 1, 0
      %vm1209 = vcmp.eq.s32.totalorder %v1207, 1
      %vm1210 = vcmp.eq.s32.totalorder %v1208, 1
      %v1211 = vsel %vm1209, %v1092, -inf
      %v1212 = vsel %vm1210, %v1099, -inf
      %v1213 = vsel %vm211, %v1211, -inf
      %v1214 = vsel %vm211, %v1212, -inf
      %v1215 = vmax.f32 %v1213, %v1214
      %v1216 = vrot.slane %v1215, 4
      %v1217 = vmax.f32 %v1215, %v1216
      %v1218 = vrot.slane %v1217, 2
      %v1219 = vmax.f32 %v1217, %v1218
      %v1220 = vrot.slane %v1219, 1
      %v1221 = vmax.f32 %v1219, %v1220
      %p1222 = scmp.le.s32.totalorder %s1198, %s1197
      %p1223 = por %p1100, %p1222
      %s1224 = scalar_select %p1223, 1, 0
      %v1225 = vstv %s1224
      %vm1226 = vcmp.eq.s32.totalorder %v1225, 1
      %v1227 = vsel %vm1226, 0.0, %v1221
      %1228 = vst.msk [vmem:[#allocation2 + $0x18] sm:$0x1] %vm258, %v1227
      %s1229 = sld [smem:[#allocation7 + %s359]]
      %s1230 = sld [smem:[#allocation8 + %s359]]
      %v1231 = vstv %s1229
      %vm1232 = vcmp.ge.s32.totalorder %v159, %v1231
      %vm1233 = vcmp.ge.s32.totalorder %v160, %v1231
      %v1234 = vstv %s1230
      %vm1235 = vcmp.lt.s32.totalorder %v159, %v1234
      %vm1236 = vcmp.lt.s32.totalorder %v160, %v1234
      %vm1237 = vmand %vm1232, %vm1235
      %vm1238 = vmand %vm1233, %vm1236
      %v1239 = vsel %vm1237, 1, 0
      %v1240 = vsel %vm1238, 1, 0
      %vm1241 = vcmp.eq.s32.totalorder %v1239, 1
      %vm1242 = vcmp.eq.s32.totalorder %v1240, 1
      %v1243 = vsel %vm1241, %v1092, -inf
      %v1244 = vsel %vm1242, %v1099, -inf
      %v1245 = vsel %vm211, %v1243, -inf
      %v1246 = vsel %vm211, %v1244, -inf
      %v1247 = vmax.f32 %v1245, %v1246
      %v1248 = vrot.slane %v1247, 4
      %v1249 = vmax.f32 %v1247, %v1248
      %v1250 = vrot.slane %v1249, 2
      %v1251 = vmax.f32 %v1249, %v1250
      %v1252 = vrot.slane %v1251, 1
      %v1253 = vmax.f32 %v1251, %v1252
      %p1254 = scmp.le.s32.totalorder %s1230, %s1229
      %p1255 = por %p1100, %p1254
      %s1256 = scalar_select %p1255, 1, 0
      %v1257 = vstv %s1256
      %vm1258 = vcmp.eq.s32.totalorder %v1257, 1
      %v1259 = vsel %vm1258, 0.0, %v1253
      %1260 = vst.msk [vmem:[#allocation2 + $0x19] sm:$0x1] %vm258, %v1259
      %s1261 = sld [smem:[#allocation7 + %s392]]
      %s1262 = sld [smem:[#allocation8 + %s392]]
      %v1263 = vstv %s1261
      %vm1264 = vcmp.ge.s32.totalorder %v159, %v1263
      %vm1265 = vcmp.ge.s32.totalorder %v160, %v1263
      %v1266 = vstv %s1262
      %vm1267 = vcmp.lt.s32.totalorder %v159, %v1266
      %vm1268 = vcmp.lt.s32.totalorder %v160, %v1266
      %vm1269 = vmand %vm1264, %vm1267
      %vm1270 = vmand %vm1265, %vm1268
      %v1271 = vsel %vm1269, 1, 0
      %v1272 = vsel %vm1270, 1, 0
      %vm1273 = vcmp.eq.s32.totalorder %v1271, 1
      %vm1274 = vcmp.eq.s32.totalorder %v1272, 1
      %v1275 = vsel %vm1273, %v1092, -inf
      %v1276 = vsel %vm1274, %v1099, -inf
      %v1277 = vsel %vm211, %v1275, -inf
      %v1278 = vsel %vm211, %v1276, -inf
      %v1279 = vmax.f32 %v1277, %v1278
      %v1280 = vrot.slane %v1279, 4
      %v1281 = vmax.f32 %v1279, %v1280
      %v1282 = vrot.slane %v1281, 2
      %v1283 = vmax.f32 %v1281, %v1282
      %v1284 = vrot.slane %v1283, 1
      %v1285 = vmax.f32 %v1283, %v1284
      %p1286 = scmp.le.s32.totalorder %s1262, %s1261
      %p1287 = por %p1100, %p1286
      %s1288 = scalar_select %p1287, 1, 0
      %v1289 = vstv %s1288
      %vm1290 = vcmp.eq.s32.totalorder %v1289, 1
      %v1291 = vsel %vm1290, 0.0, %v1285
      %1292 = vst.msk [vmem:[#allocation2 + $0x1a] sm:$0x1] %vm258, %v1291
      %s1293 = sld [smem:[#allocation7 + %s425]]
      %s1294 = sld [smem:[#allocation8 + %s425]]
      %v1295 = vstv %s1293
      %vm1296 = vcmp.ge.s32.totalorder %v159, %v1295
      %vm1297 = vcmp.ge.s32.totalorder %v160, %v1295
      %v1298 = vstv %s1294
      %vm1299 = vcmp.lt.s32.totalorder %v159, %v1298
      %vm1300 = vcmp.lt.s32.totalorder %v160, %v1298
      %vm1301 = vmand %vm1296, %vm1299
      %vm1302 = vmand %vm1297, %vm1300
      %v1303 = vsel %vm1301, 1, 0
      %v1304 = vsel %vm1302, 1, 0
      %vm1305 = vcmp.eq.s32.totalorder %v1303, 1
      %vm1306 = vcmp.eq.s32.totalorder %v1304, 1
      %v1307 = vsel %vm1305, %v1092, -inf
      %v1308 = vsel %vm1306, %v1099, -inf
      %v1309 = vsel %vm211, %v1307, -inf
      %v1310 = vsel %vm211, %v1308, -inf
      %v1311 = vmax.f32 %v1309, %v1310
      %v1312 = vrot.slane %v1311, 4
      %v1313 = vmax.f32 %v1311, %v1312
      %v1314 = vrot.slane %v1313, 2
      %v1315 = vmax.f32 %v1313, %v1314
      %v1316 = vrot.slane %v1315, 1
      %v1317 = vmax.f32 %v1315, %v1316
      %p1318 = scmp.le.s32.totalorder %s1294, %s1293
      %p1319 = por %p1100, %p1318
      %s1320 = scalar_select %p1319, 1, 0
      %v1321 = vstv %s1320
      %vm1322 = vcmp.eq.s32.totalorder %v1321, 1
      %v1323 = vsel %vm1322, 0.0, %v1317
      %1324 = vst.msk [vmem:[#allocation2 + $0x1b] sm:$0x1] %vm258, %v1323
      %s1325 = sld [smem:[#allocation5 + %s359]]
      %s1326 = sld [smem:[#allocation6 + %s359]]
      %p1327 = scmp.gt.s32.totalorder %s1325, 0
      %s1328 = scalar_select %p1327, %s1325, 0
      %p1329 = scmp.lt.s32.totalorder %s1328, 12
      %s1330 = scalar_select %p1329, %s1328, 12
      %s1331 = smul.u32 %s1330, 16
      %s1332 = scalar_lea.vmem %s150, %s1331
      %v1333 = vld [vmem:[%s1332] sm:$0xff]
      %v1334 = vld [vmem:[%s1332 + $0x8] sm:$0xff]
      %v1335 = vld [vmem:[%s1332 + $0x10] sm:$0xff]
      %v1336 = vld [vmem:[%s1332 + $0x18] sm:$0xff]
      %v1337 = vld [vmem:[%s1332 + $0x20] sm:$0xff]
      %v1338 = vld [vmem:[%s1332 + $0x28] sm:$0xff]
      %v1339 = vld [vmem:[%s1332 + $0x30] sm:$0xff]
      %v1340 = vld [vmem:[%s1332 + $0x38] sm:$0xff]
      %v1341 = vstv %s1330
      %v1342 = vadd.s32 %v1341, 1
      %v1343 = vadd.s32 %v1341, 2
      %v1344 = vadd.s32 %v1341, 3
      %v1345 = vstv %s1325
      %vm1346 = vcmp.ge.s32.totalorder %v1341, %v1345
      %vm1347 = vcmp.ge.s32.totalorder %v1342, %v1345
      %vm1348 = vcmp.ge.s32.totalorder %v1343, %v1345
      %vm1349 = vcmp.ge.s32.totalorder %v1344, %v1345
      %v1350 = vstv %s1326
      %vm1351 = vcmp.lt.s32.totalorder %v1341, %v1350
      %vm1352 = vcmp.lt.s32.totalorder %v1342, %v1350
      %vm1353 = vcmp.lt.s32.totalorder %v1343, %v1350
      %vm1354 = vcmp.lt.s32.totalorder %v1344, %v1350
      %vm1355 = vmand %vm1346, %vm1351
      %vm1356 = vmand %vm1347, %vm1352
      %vm1357 = vmand %vm1348, %vm1353
      %vm1358 = vmand %vm1349, %vm1354
      %v1359 = vsel %vm1355, 1, 0
      %v1360 = vsel %vm1356, 1, 0
      %v1361 = vsel %vm1357, 1, 0
      %v1362 = vsel %vm1358, 1, 0
      %vm1363 = vcmp.eq.s32.totalorder %v1359, 1
      %vm1364 = vcmp.eq.s32.totalorder %v1360, 1
      %vm1365 = vcmp.eq.s32.totalorder %v1361, 1
      %vm1366 = vcmp.eq.s32.totalorder %v1362, 1
      %v1367 = vsel %vm1363, %v1333, -inf
      %v1368 = vsel %vm1363, %v1334, -inf
      %v1369 = vsel %vm1364, %v1335, -inf
      %v1370 = vsel %vm1364, %v1336, -inf
      %v1371 = vsel %vm1365, %v1337, -inf
      %v1372 = vsel %vm1365, %v1338, -inf
      %v1373 = vsel %vm1366, %v1339, -inf
      %v1374 = vsel %vm1366, %v1340, -inf
      %v1375 = vsel %vm211, %v1367, -inf
      %v1376 = vsel %vm211, %v1369, -inf
      %v1377 = vsel %vm211, %v1371, -inf
      %v1378 = vmax.f32 %v1375, %v1377
      %v1379 = vsel %vm211, %v1373, -inf
      %v1380 = vmax.f32 %v1376, %v1379
      %v1381 = vmax.f32 %v1378, %v1380
      %v1382 = vsel %vm211, %v1368, -inf
      %v1383 = vsel %vm211, %v1370, -inf
      %v1384 = vsel %vm211, %v1372, -inf
      %v1385 = vmax.f32 %v1382, %v1384
      %v1386 = vsel %vm211, %v1374, -inf
      %v1387 = vmax.f32 %v1383, %v1386
      %v1388 = vmax.f32 %v1385, %v1387
      %p1389 = scmp.le.s32.totalorder %s1326, %s1325
      %s1390 = sld [smem:[#allocation7 + %s157]]
      %s1391 = sld [smem:[#allocation8 + %s157]]
      %v1392 = vstv %s1390
      %vm1393 = vcmp.ge.s32.totalorder %v159, %v1392
      %vm1394 = vcmp.ge.s32.totalorder %v160, %v1392
      %v1395 = vstv %s1391
      %vm1396 = vcmp.lt.s32.totalorder %v159, %v1395
      %vm1397 = vcmp.lt.s32.totalorder %v160, %v1395
      %vm1398 = vmand %vm1393, %vm1396
      %vm1399 = vmand %vm1394, %vm1397
      %v1400 = vsel %vm1398, 1, 0
      %v1401 = vsel %vm1399, 1, 0
      %vm1402 = vcmp.eq.s32.totalorder %v1400, 1
      %vm1403 = vcmp.eq.s32.totalorder %v1401, 1
      %v1404 = vsel %vm1402, %v1381, -inf
      %v1405 = vsel %vm1403, %v1388, -inf
      %v1406 = vsel %vm211, %v1404, -inf
      %v1407 = vsel %vm211, %v1405, -inf
      %v1408 = vmax.f32 %v1406, %v1407
      %v1409 = vrot.slane %v1408, 4
      %v1410 = vmax.f32 %v1408, %v1409
      %v1411 = vrot.slane %v1410, 2
      %v1412 = vmax.f32 %v1410, %v1411
      %v1413 = vrot.slane %v1412, 1
      %v1414 = vmax.f32 %v1412, %v1413
      %p1415 = scmp.le.s32.totalorder %s1391, %s1390
      %p1416 = por %p1389, %p1415
      %s1417 = scalar_select %p1416, 1, 0
      %v1418 = vstv %s1417
      %vm1419 = vcmp.eq.s32.totalorder %v1418, 1
      %v1420 = vsel %vm1419, 0.0, %v1414
      %1421 = vst.msk [vmem:[#allocation2 + $0x1c] sm:$0x1] %vm258, %v1420
      %s1422 = sld [smem:[#allocation7 + %s260]]
      %s1423 = sld [smem:[#allocation8 + %s260]]
      %v1424 = vstv %s1422
      %vm1425 = vcmp.ge.s32.totalorder %v159, %v1424
      %vm1426 = vcmp.ge.s32.totalorder %v160, %v1424
      %v1427 = vstv %s1423
      %vm1428 = vcmp.lt.s32.totalorder %v159, %v1427
      %vm1429 = vcmp.lt.s32.totalorder %v160, %v1427
      %vm1430 = vmand %vm1425, %vm1428
      %vm1431 = vmand %vm1426, %vm1429
      %v1432 = vsel %vm1430, 1, 0
      %v1433 = vsel %vm1431, 1, 0
      %vm1434 = vcmp.eq.s32.totalorder %v1432, 1
      %vm1435 = vcmp.eq.s32.totalorder %v1433, 1
      %v1436 = vsel %vm1434, %v1381, -inf
      %v1437 = vsel %vm1435, %v1388, -inf
      %v1438 = vsel %vm211, %v1436, -inf
      %v1439 = vsel %vm211, %v1437, -inf
      %v1440 = vmax.f32 %v1438, %v1439
      %v1441 = vrot.slane %v1440, 4
      %v1442 = vmax.f32 %v1440, %v1441
      %v1443 = vrot.slane %v1442, 2
      %v1444 = vmax.f32 %v1442, %v1443
      %v1445 = vrot.slane %v1444, 1
      %v1446 = vmax.f32 %v1444, %v1445
      %p1447 = scmp.le.s32.totalorder %s1423, %s1422
      %p1448 = por %p1389, %p1447
      %s1449 = scalar_select %p1448, 1, 0
      %v1450 = vstv %s1449
      %vm1451 = vcmp.eq.s32.totalorder %v1450, 1
      %v1452 = vsel %vm1451, 0.0, %v1446
      %1453 = vst.msk [vmem:[#allocation2 + $0x1d] sm:$0x1] %vm258, %v1452
      %s1454 = sld [smem:[#allocation7 + %s293]]
      %s1455 = sld [smem:[#allocation8 + %s293]]
      %v1456 = vstv %s1454
      %vm1457 = vcmp.ge.s32.totalorder %v159, %v1456
      %vm1458 = vcmp.ge.s32.totalorder %v160, %v1456
      %v1459 = vstv %s1455
      %vm1460 = vcmp.lt.s32.totalorder %v159, %v1459
      %vm1461 = vcmp.lt.s32.totalorder %v160, %v1459
      %vm1462 = vmand %vm1457, %vm1460
      %vm1463 = vmand %vm1458, %vm1461
      %v1464 = vsel %vm1462, 1, 0
      %v1465 = vsel %vm1463, 1, 0
      %vm1466 = vcmp.eq.s32.totalorder %v1464, 1
      %vm1467 = vcmp.eq.s32.totalorder %v1465, 1
      %v1468 = vsel %vm1466, %v1381, -inf
      %v1469 = vsel %vm1467, %v1388, -inf
      %v1470 = vsel %vm211, %v1468, -inf
      %v1471 = vsel %vm211, %v1469, -inf
      %v1472 = vmax.f32 %v1470, %v1471
      %v1473 = vrot.slane %v1472, 4
      %v1474 = vmax.f32 %v1472, %v1473
      %v1475 = vrot.slane %v1474, 2
      %v1476 = vmax.f32 %v1474, %v1475
      %v1477 = vrot.slane %v1476, 1
      %v1478 = vmax.f32 %v1476, %v1477
      %p1479 = scmp.le.s32.totalorder %s1455, %s1454
      %p1480 = por %p1389, %p1479
      %s1481 = scalar_select %p1480, 1, 0
      %v1482 = vstv %s1481
      %vm1483 = vcmp.eq.s32.totalorder %v1482, 1
      %v1484 = vsel %vm1483, 0.0, %v1478
      %1485 = vst.msk [vmem:[#allocation2 + $0x1e] sm:$0x1] %vm258, %v1484
      %s1486 = sld [smem:[#allocation7 + %s326]]
      %s1487 = sld [smem:[#allocation8 + %s326]]
      %v1488 = vstv %s1486
      %vm1489 = vcmp.ge.s32.totalorder %v159, %v1488
      %vm1490 = vcmp.ge.s32.totalorder %v160, %v1488
      %v1491 = vstv %s1487
      %vm1492 = vcmp.lt.s32.totalorder %v159, %v1491
      %vm1493 = vcmp.lt.s32.totalorder %v160, %v1491
      %vm1494 = vmand %vm1489, %vm1492
      %vm1495 = vmand %vm1490, %vm1493
      %v1496 = vsel %vm1494, 1, 0
      %v1497 = vsel %vm1495, 1, 0
      %vm1498 = vcmp.eq.s32.totalorder %v1496, 1
      %vm1499 = vcmp.eq.s32.totalorder %v1497, 1
      %v1500 = vsel %vm1498, %v1381, -inf
      %v1501 = vsel %vm1499, %v1388, -inf
      %v1502 = vsel %vm211, %v1500, -inf
      %v1503 = vsel %vm211, %v1501, -inf
      %v1504 = vmax.f32 %v1502, %v1503
      %v1505 = vrot.slane %v1504, 4
      %v1506 = vmax.f32 %v1504, %v1505
      %v1507 = vrot.slane %v1506, 2
      %v1508 = vmax.f32 %v1506, %v1507
      %v1509 = vrot.slane %v1508, 1
      %v1510 = vmax.f32 %v1508, %v1509
      %p1511 = scmp.le.s32.totalorder %s1487, %s1486
      %p1512 = por %p1389, %p1511
      %s1513 = scalar_select %p1512, 1, 0
      %v1514 = vstv %s1513
      %vm1515 = vcmp.eq.s32.totalorder %v1514, 1
      %v1516 = vsel %vm1515, 0.0, %v1510
      %1517 = vst.msk [vmem:[#allocation2 + $0x1f] sm:$0x1] %vm258, %v1516
      %s1518 = sld [smem:[#allocation7 + %s359]]
      %s1519 = sld [smem:[#allocation8 + %s359]]
      %v1520 = vstv %s1518
      %vm1521 = vcmp.ge.s32.totalorder %v159, %v1520
      %vm1522 = vcmp.ge.s32.totalorder %v160, %v1520
      %v1523 = vstv %s1519
      %vm1524 = vcmp.lt.s32.totalorder %v159, %v1523
      %vm1525 = vcmp.lt.s32.totalorder %v160, %v1523
      %vm1526 = vmand %vm1521, %vm1524
      %vm1527 = vmand %vm1522, %vm1525
      %v1528 = vsel %vm1526, 1, 0
      %v1529 = vsel %vm1527, 1, 0
      %vm1530 = vcmp.eq.s32.totalorder %v1528, 1
      %vm1531 = vcmp.eq.s32.totalorder %v1529, 1
      %v1532 = vsel %vm1530, %v1381, -inf
      %v1533 = vsel %vm1531, %v1388, -inf
      %v1534 = vsel %vm211, %v1532, -inf
      %v1535 = vsel %vm211, %v1533, -inf
      %v1536 = vmax.f32 %v1534, %v1535
      %v1537 = vrot.slane %v1536, 4
      %v1538 = vmax.f32 %v1536, %v1537
      %v1539 = vrot.slane %v1538, 2
      %v1540 = vmax.f32 %v1538, %v1539
      %v1541 = vrot.slane %v1540, 1
      %v1542 = vmax.f32 %v1540, %v1541
      %p1543 = scmp.le.s32.totalorder %s1519, %s1518
      %p1544 = por %p1389, %p1543
      %s1545 = scalar_select %p1544, 1, 0
      %v1546 = vstv %s1545
      %vm1547 = vcmp.eq.s32.totalorder %v1546, 1
      %v1548 = vsel %vm1547, 0.0, %v1542
      %1549 = vst.msk [vmem:[#allocation2 + $0x20] sm:$0x1] %vm258, %v1548
      %s1550 = sld [smem:[#allocation7 + %s392]]
      %s1551 = sld [smem:[#allocation8 + %s392]]
      %v1552 = vstv %s1550
      %vm1553 = vcmp.ge.s32.totalorder %v159, %v1552
      %vm1554 = vcmp.ge.s32.totalorder %v160, %v1552
      %v1555 = vstv %s1551
      %vm1556 = vcmp.lt.s32.totalorder %v159, %v1555
      %vm1557 = vcmp.lt.s32.totalorder %v160, %v1555
      %vm1558 = vmand %vm1553, %vm1556
      %vm1559 = vmand %vm1554, %vm1557
      %v1560 = vsel %vm1558, 1, 0
      %v1561 = vsel %vm1559, 1, 0
      %vm1562 = vcmp.eq.s32.totalorder %v1560, 1
      %vm1563 = vcmp.eq.s32.totalorder %v1561, 1
      %v1564 = vsel %vm1562, %v1381, -inf
      %v1565 = vsel %vm1563, %v1388, -inf
      %v1566 = vsel %vm211, %v1564, -inf
      %v1567 = vsel %vm211, %v1565, -inf
      %v1568 = vmax.f32 %v1566, %v1567
      %v1569 = vrot.slane %v1568, 4
      %v1570 = vmax.f32 %v1568, %v1569
      %v1571 = vrot.slane %v1570, 2
      %v1572 = vmax.f32 %v1570, %v1571
      %v1573 = vrot.slane %v1572, 1
      %v1574 = vmax.f32 %v1572, %v1573
      %p1575 = scmp.le.s32.totalorder %s1551, %s1550
      %p1576 = por %p1389, %p1575
      %s1577 = scalar_select %p1576, 1, 0
      %v1578 = vstv %s1577
      %vm1579 = vcmp.eq.s32.totalorder %v1578, 1
      %v1580 = vsel %vm1579, 0.0, %v1574
      %1581 = vst.msk [vmem:[#allocation2 + $0x21] sm:$0x1] %vm258, %v1580
      %s1582 = sld [smem:[#allocation7 + %s425]]
      %s1583 = sld [smem:[#allocation8 + %s425]]
      %v1584 = vstv %s1582
      %vm1585 = vcmp.ge.s32.totalorder %v159, %v1584
      %vm1586 = vcmp.ge.s32.totalorder %v160, %v1584
      %v1587 = vstv %s1583
      %vm1588 = vcmp.lt.s32.totalorder %v159, %v1587
      %vm1589 = vcmp.lt.s32.totalorder %v160, %v1587
      %vm1590 = vmand %vm1585, %vm1588
      %vm1591 = vmand %vm1586, %vm1589
      %v1592 = vsel %vm1590, 1, 0
      %v1593 = vsel %vm1591, 1, 0
      %vm1594 = vcmp.eq.s32.totalorder %v1592, 1
      %vm1595 = vcmp.eq.s32.totalorder %v1593, 1
      %v1596 = vsel %vm1594, %v1381, -inf
      %v1597 = vsel %vm1595, %v1388, -inf
      %v1598 = vsel %vm211, %v1596, -inf
      %v1599 = vsel %vm211, %v1597, -inf
      %v1600 = vmax.f32 %v1598, %v1599
      %v1601 = vrot.slane %v1600, 4
      %v1602 = vmax.f32 %v1600, %v1601
      %v1603 = vrot.slane %v1602, 2
      %v1604 = vmax.f32 %v1602, %v1603
      %v1605 = vrot.slane %v1604, 1
      %v1606 = vmax.f32 %v1604, %v1605
      %p1607 = scmp.le.s32.totalorder %s1583, %s1582
      %p1608 = por %p1389, %p1607
      %s1609 = scalar_select %p1608, 1, 0
      %v1610 = vstv %s1609
      %vm1611 = vcmp.eq.s32.totalorder %v1610, 1
      %v1612 = vsel %vm1611, 0.0, %v1606
      %1613 = vst.msk [vmem:[#allocation2 + $0x22] sm:$0x1] %vm258, %v1612
      %s1614 = sld [smem:[#allocation5 + %s392]]
      %s1615 = sld [smem:[#allocation6 + %s392]]
      %p1616 = scmp.gt.s32.totalorder %s1614, 0
      %s1617 = scalar_select %p1616, %s1614, 0
      %p1618 = scmp.lt.s32.totalorder %s1617, 12
      %s1619 = scalar_select %p1618, %s1617, 12
      %s1620 = smul.u32 %s1619, 16
      %s1621 = scalar_lea.vmem %s150, %s1620
      %v1622 = vld [vmem:[%s1621] sm:$0xff]
      %v1623 = vld [vmem:[%s1621 + $0x8] sm:$0xff]
      %v1624 = vld [vmem:[%s1621 + $0x10] sm:$0xff]
      %v1625 = vld [vmem:[%s1621 + $0x18] sm:$0xff]
      %v1626 = vld [vmem:[%s1621 + $0x20] sm:$0xff]
      %v1627 = vld [vmem:[%s1621 + $0x28] sm:$0xff]
      %v1628 = vld [vmem:[%s1621 + $0x30] sm:$0xff]
      %v1629 = vld [vmem:[%s1621 + $0x38] sm:$0xff]
      %v1630 = vstv %s1619
      %v1631 = vadd.s32 %v1630, 1
      %v1632 = vadd.s32 %v1630, 2
      %v1633 = vadd.s32 %v1630, 3
      %v1634 = vstv %s1614
      %vm1635 = vcmp.ge.s32.totalorder %v1630, %v1634
      %vm1636 = vcmp.ge.s32.totalorder %v1631, %v1634
      %vm1637 = vcmp.ge.s32.totalorder %v1632, %v1634
      %vm1638 = vcmp.ge.s32.totalorder %v1633, %v1634
      %v1639 = vstv %s1615
      %vm1640 = vcmp.lt.s32.totalorder %v1630, %v1639
      %vm1641 = vcmp.lt.s32.totalorder %v1631, %v1639
      %vm1642 = vcmp.lt.s32.totalorder %v1632, %v1639
      %vm1643 = vcmp.lt.s32.totalorder %v1633, %v1639
      %vm1644 = vmand %vm1635, %vm1640
      %vm1645 = vmand %vm1636, %vm1641
      %vm1646 = vmand %vm1637, %vm1642
      %vm1647 = vmand %vm1638, %vm1643
      %v1648 = vsel %vm1644, 1, 0
      %v1649 = vsel %vm1645, 1, 0
      %v1650 = vsel %vm1646, 1, 0
      %v1651 = vsel %vm1647, 1, 0
      %vm1652 = vcmp.eq.s32.totalorder %v1648, 1
      %vm1653 = vcmp.eq.s32.totalorder %v1649, 1
      %vm1654 = vcmp.eq.s32.totalorder %v1650, 1
      %vm1655 = vcmp.eq.s32.totalorder %v1651, 1
      %v1656 = vsel %vm1652, %v1622, -inf
      %v1657 = vsel %vm1652, %v1623, -inf
      %v1658 = vsel %vm1653, %v1624, -inf
      %v1659 = vsel %vm1653, %v1625, -inf
      %v1660 = vsel %vm1654, %v1626, -inf
      %v1661 = vsel %vm1654, %v1627, -inf
      %v1662 = vsel %vm1655, %v1628, -inf
      %v1663 = vsel %vm1655, %v1629, -inf
      %v1664 = vsel %vm211, %v1656, -inf
      %v1665 = vsel %vm211, %v1658, -inf
      %v1666 = vsel %vm211, %v1660, -inf
      %v1667 = vmax.f32 %v1664, %v1666
      %v1668 = vsel %vm211, %v1662, -inf
      %v1669 = vmax.f32 %v1665, %v1668
      %v1670 = vmax.f32 %v1667, %v1669
      %v1671 = vsel %vm211, %v1657, -inf
      %v1672 = vsel %vm211, %v1659, -inf
      %v1673 = vsel %vm211, %v1661, -inf
      %v1674 = vmax.f32 %v1671, %v1673
      %v1675 = vsel %vm211, %v1663, -inf
      %v1676 = vmax.f32 %v1672, %v1675
      %v1677 = vmax.f32 %v1674, %v1676
      %p1678 = scmp.le.s32.totalorder %s1615, %s1614
      %s1679 = sld [smem:[#allocation7 + %s157]]
      %s1680 = sld [smem:[#allocation8 + %s157]]
      %v1681 = vstv %s1679
      %vm1682 = vcmp.ge.s32.totalorder %v159, %v1681
      %vm1683 = vcmp.ge.s32.totalorder %v160, %v1681
      %v1684 = vstv %s1680
      %vm1685 = vcmp.lt.s32.totalorder %v159, %v1684
      %vm1686 = vcmp.lt.s32.totalorder %v160, %v1684
      %vm1687 = vmand %vm1682, %vm1685
      %vm1688 = vmand %vm1683, %vm1686
      %v1689 = vsel %vm1687, 1, 0
      %v1690 = vsel %vm1688, 1, 0
      %vm1691 = vcmp.eq.s32.totalorder %v1689, 1
      %vm1692 = vcmp.eq.s32.totalorder %v1690, 1
      %v1693 = vsel %vm1691, %v1670, -inf
      %v1694 = vsel %vm1692, %v1677, -inf
      %v1695 = vsel %vm211, %v1693, -inf
      %v1696 = vsel %vm211, %v1694, -inf
      %v1697 = vmax.f32 %v1695, %v1696
      %v1698 = vrot.slane %v1697, 4
      %v1699 = vmax.f32 %v1697, %v1698
      %v1700 = vrot.slane %v1699, 2
      %v1701 = vmax.f32 %v1699, %v1700
      %v1702 = vrot.slane %v1701, 1
      %v1703 = vmax.f32 %v1701, %v1702
      %p1704 = scmp.le.s32.totalorder %s1680, %s1679
      %p1705 = por %p1678, %p1704
      %s1706 = scalar_select %p1705, 1, 0
      %v1707 = vstv %s1706
      %vm1708 = vcmp.eq.s32.totalorder %v1707, 1
      %v1709 = vsel %vm1708, 0.0, %v1703
      %1710 = vst.msk [vmem:[#allocation2 + $0x23] sm:$0x1] %vm258, %v1709
      %s1711 = sld [smem:[#allocation7 + %s260]]
      %s1712 = sld [smem:[#allocation8 + %s260]]
      %v1713 = vstv %s1711
      %vm1714 = vcmp.ge.s32.totalorder %v159, %v1713
      %vm1715 = vcmp.ge.s32.totalorder %v160, %v1713
      %v1716 = vstv %s1712
      %vm1717 = vcmp.lt.s32.totalorder %v159, %v1716
      %vm1718 = vcmp.lt.s32.totalorder %v160, %v1716
      %vm1719 = vmand %vm1714, %vm1717
      %vm1720 = vmand %vm1715, %vm1718
      %v1721 = vsel %vm1719, 1, 0
      %v1722 = vsel %vm1720, 1, 0
      %vm1723 = vcmp.eq.s32.totalorder %v1721, 1
      %vm1724 = vcmp.eq.s32.totalorder %v1722, 1
      %v1725 = vsel %vm1723, %v1670, -inf
      %v1726 = vsel %vm1724, %v1677, -inf
      %v1727 = vsel %vm211, %v1725, -inf
      %v1728 = vsel %vm211, %v1726, -inf
      %v1729 = vmax.f32 %v1727, %v1728
      %v1730 = vrot.slane %v1729, 4
      %v1731 = vmax.f32 %v1729, %v1730
      %v1732 = vrot.slane %v1731, 2
      %v1733 = vmax.f32 %v1731, %v1732
      %v1734 = vrot.slane %v1733, 1
      %v1735 = vmax.f32 %v1733, %v1734
      %p1736 = scmp.le.s32.totalorder %s1712, %s1711
      %p1737 = por %p1678, %p1736
      %s1738 = scalar_select %p1737, 1, 0
      %v1739 = vstv %s1738
      %vm1740 = vcmp.eq.s32.totalorder %v1739, 1
      %v1741 = vsel %vm1740, 0.0, %v1735
      %1742 = vst.msk [vmem:[#allocation2 + $0x24] sm:$0x1] %vm258, %v1741
      %s1743 = sld [smem:[#allocation7 + %s293]]
      %s1744 = sld [smem:[#allocation8 + %s293]]
      %v1745 = vstv %s1743
      %vm1746 = vcmp.ge.s32.totalorder %v159, %v1745
      %vm1747 = vcmp.ge.s32.totalorder %v160, %v1745
      %v1748 = vstv %s1744
      %vm1749 = vcmp.lt.s32.totalorder %v159, %v1748
      %vm1750 = vcmp.lt.s32.totalorder %v160, %v1748
      %vm1751 = vmand %vm1746, %vm1749
      %vm1752 = vmand %vm1747, %vm1750
      %v1753 = vsel %vm1751, 1, 0
      %v1754 = vsel %vm1752, 1, 0
      %vm1755 = vcmp.eq.s32.totalorder %v1753, 1
      %vm1756 = vcmp.eq.s32.totalorder %v1754, 1
      %v1757 = vsel %vm1755, %v1670, -inf
      %v1758 = vsel %vm1756, %v1677, -inf
      %v1759 = vsel %vm211, %v1757, -inf
      %v1760 = vsel %vm211, %v1758, -inf
      %v1761 = vmax.f32 %v1759, %v1760
      %v1762 = vrot.slane %v1761, 4
      %v1763 = vmax.f32 %v1761, %v1762
      %v1764 = vrot.slane %v1763, 2
      %v1765 = vmax.f32 %v1763, %v1764
      %v1766 = vrot.slane %v1765, 1
      %v1767 = vmax.f32 %v1765, %v1766
      %p1768 = scmp.le.s32.totalorder %s1744, %s1743
      %p1769 = por %p1678, %p1768
      %s1770 = scalar_select %p1769, 1, 0
      %v1771 = vstv %s1770
      %vm1772 = vcmp.eq.s32.totalorder %v1771, 1
      %v1773 = vsel %vm1772, 0.0, %v1767
      %1774 = vst.msk [vmem:[#allocation2 + $0x25] sm:$0x1] %vm258, %v1773
      %s1775 = sld [smem:[#allocation7 + %s326]]
      %s1776 = sld [smem:[#allocation8 + %s326]]
      %v1777 = vstv %s1775
      %vm1778 = vcmp.ge.s32.totalorder %v159, %v1777
      %vm1779 = vcmp.ge.s32.totalorder %v160, %v1777
      %v1780 = vstv %s1776
      %vm1781 = vcmp.lt.s32.totalorder %v159, %v1780
      %vm1782 = vcmp.lt.s32.totalorder %v160, %v1780
      %vm1783 = vmand %vm1778, %vm1781
      %vm1784 = vmand %vm1779, %vm1782
      %v1785 = vsel %vm1783, 1, 0
      %v1786 = vsel %vm1784, 1, 0
      %vm1787 = vcmp.eq.s32.totalorder %v1785, 1
      %vm1788 = vcmp.eq.s32.totalorder %v1786, 1
      %v1789 = vsel %vm1787, %v1670, -inf
      %v1790 = vsel %vm1788, %v1677, -inf
      %v1791 = vsel %vm211, %v1789, -inf
      %v1792 = vsel %vm211, %v1790, -inf
      %v1793 = vmax.f32 %v1791, %v1792
      %v1794 = vrot.slane %v1793, 4
      %v1795 = vmax.f32 %v1793, %v1794
      %v1796 = vrot.slane %v1795, 2
      %v1797 = vmax.f32 %v1795, %v1796
      %v1798 = vrot.slane %v1797, 1
      %v1799 = vmax.f32 %v1797, %v1798
      %p1800 = scmp.le.s32.totalorder %s1776, %s1775
      %p1801 = por %p1678, %p1800
      %s1802 = scalar_select %p1801, 1, 0
      %v1803 = vstv %s1802
      %vm1804 = vcmp.eq.s32.totalorder %v1803, 1
      %v1805 = vsel %vm1804, 0.0, %v1799
      %1806 = vst.msk [vmem:[#allocation2 + $0x26] sm:$0x1] %vm258, %v1805
      %s1807 = sld [smem:[#allocation7 + %s359]]
      %s1808 = sld [smem:[#allocation8 + %s359]]
      %v1809 = vstv %s1807
      %vm1810 = vcmp.ge.s32.totalorder %v159, %v1809
      %vm1811 = vcmp.ge.s32.totalorder %v160, %v1809
      %v1812 = vstv %s1808
      %vm1813 = vcmp.lt.s32.totalorder %v159, %v1812
      %vm1814 = vcmp.lt.s32.totalorder %v160, %v1812
      %vm1815 = vmand %vm1810, %vm1813
      %vm1816 = vmand %vm1811, %vm1814
      %v1817 = vsel %vm1815, 1, 0
      %v1818 = vsel %vm1816, 1, 0
      %vm1819 = vcmp.eq.s32.totalorder %v1817, 1
      %vm1820 = vcmp.eq.s32.totalorder %v1818, 1
      %v1821 = vsel %vm1819, %v1670, -inf
      %v1822 = vsel %vm1820, %v1677, -inf
      %v1823 = vsel %vm211, %v1821, -inf
      %v1824 = vsel %vm211, %v1822, -inf
      %v1825 = vmax.f32 %v1823, %v1824
      %v1826 = vrot.slane %v1825, 4
      %v1827 = vmax.f32 %v1825, %v1826
      %v1828 = vrot.slane %v1827, 2
      %v1829 = vmax.f32 %v1827, %v1828
      %v1830 = vrot.slane %v1829, 1
      %v1831 = vmax.f32 %v1829, %v1830
      %p1832 = scmp.le.s32.totalorder %s1808, %s1807
      %p1833 = por %p1678, %p1832
      %s1834 = scalar_select %p1833, 1, 0
      %v1835 = vstv %s1834
      %vm1836 = vcmp.eq.s32.totalorder %v1835, 1
      %v1837 = vsel %vm1836, 0.0, %v1831
      %1838 = vst.msk [vmem:[#allocation2 + $0x27] sm:$0x1] %vm258, %v1837
      %s1839 = sld [smem:[#allocation7 + %s392]]
      %s1840 = sld [smem:[#allocation8 + %s392]]
      %v1841 = vstv %s1839
      %vm1842 = vcmp.ge.s32.totalorder %v159, %v1841
      %vm1843 = vcmp.ge.s32.totalorder %v160, %v1841
      %v1844 = vstv %s1840
      %vm1845 = vcmp.lt.s32.totalorder %v159, %v1844
      %vm1846 = vcmp.lt.s32.totalorder %v160, %v1844
      %vm1847 = vmand %vm1842, %vm1845
      %vm1848 = vmand %vm1843, %vm1846
      %v1849 = vsel %vm1847, 1, 0
      %v1850 = vsel %vm1848, 1, 0
      %vm1851 = vcmp.eq.s32.totalorder %v1849, 1
      %vm1852 = vcmp.eq.s32.totalorder %v1850, 1
      %v1853 = vsel %vm1851, %v1670, -inf
      %v1854 = vsel %vm1852, %v1677, -inf
      %v1855 = vsel %vm211, %v1853, -inf
      %v1856 = vsel %vm211, %v1854, -inf
      %v1857 = vmax.f32 %v1855, %v1856
      %v1858 = vrot.slane %v1857, 4
      %v1859 = vmax.f32 %v1857, %v1858
      %v1860 = vrot.slane %v1859, 2
      %v1861 = vmax.f32 %v1859, %v1860
      %v1862 = vrot.slane %v1861, 1
      %v1863 = vmax.f32 %v1861, %v1862
      %p1864 = scmp.le.s32.totalorder %s1840, %s1839
      %p1865 = por %p1678, %p1864
      %s1866 = scalar_select %p1865, 1, 0
      %v1867 = vstv %s1866
      %vm1868 = vcmp.eq.s32.totalorder %v1867, 1
      %v1869 = vsel %vm1868, 0.0, %v1863
      %1870 = vst.msk [vmem:[#allocation2 + $0x28] sm:$0x1] %vm258, %v1869
      %s1871 = sld [smem:[#allocation7 + %s425]]
      %s1872 = sld [smem:[#allocation8 + %s425]]
      %v1873 = vstv %s1871
      %vm1874 = vcmp.ge.s32.totalorder %v159, %v1873
      %vm1875 = vcmp.ge.s32.totalorder %v160, %v1873
      %v1876 = vstv %s1872
      %vm1877 = vcmp.lt.s32.totalorder %v159, %v1876
      %vm1878 = vcmp.lt.s32.totalorder %v160, %v1876
      %vm1879 = vmand %vm1874, %vm1877
      %vm1880 = vmand %vm1875, %vm1878
      %v1881 = vsel %vm1879, 1, 0
      %v1882 = vsel %vm1880, 1, 0
      %vm1883 = vcmp.eq.s32.totalorder %v1881, 1
      %vm1884 = vcmp.eq.s32.totalorder %v1882, 1
      %v1885 = vsel %vm1883, %v1670, -inf
      %v1886 = vsel %vm1884, %v1677, -inf
      %v1887 = vsel %vm211, %v1885, -inf
      %v1888 = vsel %vm211, %v1886, -inf
      %v1889 = vmax.f32 %v1887, %v1888
      %v1890 = vrot.slane %v1889, 4
      %v1891 = vmax.f32 %v1889, %v1890
      %v1892 = vrot.slane %v1891, 2
      %v1893 = vmax.f32 %v1891, %v1892
      %v1894 = vrot.slane %v1893, 1
      %v1895 = vmax.f32 %v1893, %v1894
      %p1896 = scmp.le.s32.totalorder %s1872, %s1871
      %p1897 = por %p1678, %p1896
      %s1898 = scalar_select %p1897, 1, 0
      %v1899 = vstv %s1898
      %vm1900 = vcmp.eq.s32.totalorder %v1899, 1
      %v1901 = vsel %vm1900, 0.0, %v1895
      %1902 = vst.msk [vmem:[#allocation2 + $0x29] sm:$0x1] %vm258, %v1901
      %s1903 = sld [smem:[#allocation5 + %s425]]
      %s1904 = sld [smem:[#allocation6 + %s425]]
      %p1905 = scmp.gt.s32.totalorder %s1903, 0
      %s1906 = scalar_select %p1905, %s1903, 0
      %p1907 = scmp.lt.s32.totalorder %s1906, 12
      %s1908 = scalar_select %p1907, %s1906, 12
      %s1909 = smul.u32 %s1908, 16
      %s1910 = scalar_lea.vmem %s150, %s1909
      %v1911 = vld [vmem:[%s1910] sm:$0xff]
      %v1912 = vld [vmem:[%s1910 + $0x8] sm:$0xff]
      %v1913 = vld [vmem:[%s1910 + $0x10] sm:$0xff]
      %v1914 = vld [vmem:[%s1910 + $0x18] sm:$0xff]
      %v1915 = vld [vmem:[%s1910 + $0x20] sm:$0xff]
      %v1916 = vld [vmem:[%s1910 + $0x28] sm:$0xff]
      %v1917 = vld [vmem:[%s1910 + $0x30] sm:$0xff]
      %v1918 = vld [vmem:[%s1910 + $0x38] sm:$0xff]
      %v1919 = vstv %s1908
      %v1920 = vadd.s32 %v1919, 1
      %v1921 = vadd.s32 %v1919, 2
      %v1922 = vadd.s32 %v1919, 3
      %v1923 = vstv %s1903
      %vm1924 = vcmp.ge.s32.totalorder %v1919, %v1923
      %vm1925 = vcmp.ge.s32.totalorder %v1920, %v1923
      %vm1926 = vcmp.ge.s32.totalorder %v1921, %v1923
      %vm1927 = vcmp.ge.s32.totalorder %v1922, %v1923
      %v1928 = vstv %s1904
      %vm1929 = vcmp.lt.s32.totalorder %v1919, %v1928
      %vm1930 = vcmp.lt.s32.totalorder %v1920, %v1928
      %vm1931 = vcmp.lt.s32.totalorder %v1921, %v1928
      %vm1932 = vcmp.lt.s32.totalorder %v1922, %v1928
      %vm1933 = vmand %vm1924, %vm1929
      %vm1934 = vmand %vm1925, %vm1930
      %vm1935 = vmand %vm1926, %vm1931
      %vm1936 = vmand %vm1927, %vm1932
      %v1937 = vsel %vm1933, 1, 0
      %v1938 = vsel %vm1934, 1, 0
      %v1939 = vsel %vm1935, 1, 0
      %v1940 = vsel %vm1936, 1, 0
      %vm1941 = vcmp.eq.s32.totalorder %v1937, 1
      %vm1942 = vcmp.eq.s32.totalorder %v1938, 1
      %vm1943 = vcmp.eq.s32.totalorder %v1939, 1
      %vm1944 = vcmp.eq.s32.totalorder %v1940, 1
      %v1945 = vsel %vm1941, %v1911, -inf
      %v1946 = vsel %vm1941, %v1912, -inf
      %v1947 = vsel %vm1942, %v1913, -inf
      %v1948 = vsel %vm1942, %v1914, -inf
      %v1949 = vsel %vm1943, %v1915, -inf
      %v1950 = vsel %vm1943, %v1916, -inf
      %v1951 = vsel %vm1944, %v1917, -inf
      %v1952 = vsel %vm1944, %v1918, -inf
      %v1953 = vsel %vm211, %v1945, -inf
      %v1954 = vsel %vm211, %v1947, -inf
      %v1955 = vsel %vm211, %v1949, -inf
      %v1956 = vmax.f32 %v1953, %v1955
      %v1957 = vsel %vm211, %v1951, -inf
      %v1958 = vmax.f32 %v1954, %v1957
      %v1959 = vmax.f32 %v1956, %v1958
      %v1960 = vsel %vm211, %v1946, -inf
      %v1961 = vsel %vm211, %v1948, -inf
      %v1962 = vsel %vm211, %v1950, -inf
      %v1963 = vmax.f32 %v1960, %v1962
      %v1964 = vsel %vm211, %v1952, -inf
      %v1965 = vmax.f32 %v1961, %v1964
      %v1966 = vmax.f32 %v1963, %v1965
      %p1967 = scmp.le.s32.totalorder %s1904, %s1903
      %s1968 = sld [smem:[#allocation7 + %s157]]
      %s1969 = sld [smem:[#allocation8 + %s157]]
      %v1970 = vstv %s1968
      %vm1971 = vcmp.ge.s32.totalorder %v159, %v1970
      %vm1972 = vcmp.ge.s32.totalorder %v160, %v1970
      %v1973 = vstv %s1969
      %vm1974 = vcmp.lt.s32.totalorder %v159, %v1973
      %vm1975 = vcmp.lt.s32.totalorder %v160, %v1973
      %vm1976 = vmand %vm1971, %vm1974
      %vm1977 = vmand %vm1972, %vm1975
      %v1978 = vsel %vm1976, 1, 0
      %v1979 = vsel %vm1977, 1, 0
      %vm1980 = vcmp.eq.s32.totalorder %v1978, 1
      %vm1981 = vcmp.eq.s32.totalorder %v1979, 1
      %v1982 = vsel %vm1980, %v1959, -inf
      %v1983 = vsel %vm1981, %v1966, -inf
      %v1984 = vsel %vm211, %v1982, -inf
      %v1985 = vsel %vm211, %v1983, -inf
      %v1986 = vmax.f32 %v1984, %v1985
      %v1987 = vrot.slane %v1986, 4
      %v1988 = vmax.f32 %v1986, %v1987
      %v1989 = vrot.slane %v1988, 2
      %v1990 = vmax.f32 %v1988, %v1989
      %v1991 = vrot.slane %v1990, 1
      %v1992 = vmax.f32 %v1990, %v1991
      %p1993 = scmp.le.s32.totalorder %s1969, %s1968
      %p1994 = por %p1967, %p1993
      %s1995 = scalar_select %p1994, 1, 0
      %v1996 = vstv %s1995
      %vm1997 = vcmp.eq.s32.totalorder %v1996, 1
      %v1998 = vsel %vm1997, 0.0, %v1992
      %1999 = vst.msk [vmem:[#allocation2 + $0x2a] sm:$0x1] %vm258, %v1998
      %s2000 = sld [smem:[#allocation7 + %s260]]
      %s2001 = sld [smem:[#allocation8 + %s260]]
      %v2002 = vstv %s2000
      %vm2003 = vcmp.ge.s32.totalorder %v159, %v2002
      %vm2004 = vcmp.ge.s32.totalorder %v160, %v2002
      %v2005 = vstv %s2001
      %vm2006 = vcmp.lt.s32.totalorder %v159, %v2005
      %vm2007 = vcmp.lt.s32.totalorder %v160, %v2005
      %vm2008 = vmand %vm2003, %vm2006
      %vm2009 = vmand %vm2004, %vm2007
      %v2010 = vsel %vm2008, 1, 0
      %v2011 = vsel %vm2009, 1, 0
      %vm2012 = vcmp.eq.s32.totalorder %v2010, 1
      %vm2013 = vcmp.eq.s32.totalorder %v2011, 1
      %v2014 = vsel %vm2012, %v1959, -inf
      %v2015 = vsel %vm2013, %v1966, -inf
      %v2016 = vsel %vm211, %v2014, -inf
      %v2017 = vsel %vm211, %v2015, -inf
      %v2018 = vmax.f32 %v2016, %v2017
      %v2019 = vrot.slane %v2018, 4
      %v2020 = vmax.f32 %v2018, %v2019
      %v2021 = vrot.slane %v2020, 2
      %v2022 = vmax.f32 %v2020, %v2021
      %v2023 = vrot.slane %v2022, 1
      %v2024 = vmax.f32 %v2022, %v2023
      %p2025 = scmp.le.s32.totalorder %s2001, %s2000
      %p2026 = por %p1967, %p2025
      %s2027 = scalar_select %p2026, 1, 0
      %v2028 = vstv %s2027
      %vm2029 = vcmp.eq.s32.totalorder %v2028, 1
      %v2030 = vsel %vm2029, 0.0, %v2024
      %2031 = vst.msk [vmem:[#allocation2 + $0x2b] sm:$0x1] %vm258, %v2030
      %s2032 = sld [smem:[#allocation7 + %s293]]
      %s2033 = sld [smem:[#allocation8 + %s293]]
      %v2034 = vstv %s2032
      %vm2035 = vcmp.ge.s32.totalorder %v159, %v2034
      %vm2036 = vcmp.ge.s32.totalorder %v160, %v2034
      %v2037 = vstv %s2033
      %vm2038 = vcmp.lt.s32.totalorder %v159, %v2037
      %vm2039 = vcmp.lt.s32.totalorder %v160, %v2037
      %vm2040 = vmand %vm2035, %vm2038
      %vm2041 = vmand %vm2036, %vm2039
      %v2042 = vsel %vm2040, 1, 0
      %v2043 = vsel %vm2041, 1, 0
      %vm2044 = vcmp.eq.s32.totalorder %v2042, 1
      %vm2045 = vcmp.eq.s32.totalorder %v2043, 1
      %v2046 = vsel %vm2044, %v1959, -inf
      %v2047 = vsel %vm2045, %v1966, -inf
      %v2048 = vsel %vm211, %v2046, -inf
      %v2049 = vsel %vm211, %v2047, -inf
      %v2050 = vmax.f32 %v2048, %v2049
      %v2051 = vrot.slane %v2050, 4
      %v2052 = vmax.f32 %v2050, %v2051
      %v2053 = vrot.slane %v2052, 2
      %v2054 = vmax.f32 %v2052, %v2053
      %v2055 = vrot.slane %v2054, 1
      %v2056 = vmax.f32 %v2054, %v2055
      %p2057 = scmp.le.s32.totalorder %s2033, %s2032
      %p2058 = por %p1967, %p2057
      %s2059 = scalar_select %p2058, 1, 0
      %v2060 = vstv %s2059
      %vm2061 = vcmp.eq.s32.totalorder %v2060, 1
      %v2062 = vsel %vm2061, 0.0, %v2056
      %2063 = vst.msk [vmem:[#allocation2 + $0x2c] sm:$0x1] %vm258, %v2062
      %s2064 = sld [smem:[#allocation7 + %s326]]
      %s2065 = sld [smem:[#allocation8 + %s326]]
      %v2066 = vstv %s2064
      %vm2067 = vcmp.ge.s32.totalorder %v159, %v2066
      %vm2068 = vcmp.ge.s32.totalorder %v160, %v2066
      %v2069 = vstv %s2065
      %vm2070 = vcmp.lt.s32.totalorder %v159, %v2069
      %vm2071 = vcmp.lt.s32.totalorder %v160, %v2069
      %vm2072 = vmand %vm2067, %vm2070
      %vm2073 = vmand %vm2068, %vm2071
      %v2074 = vsel %vm2072, 1, 0
      %v2075 = vsel %vm2073, 1, 0
      %vm2076 = vcmp.eq.s32.totalorder %v2074, 1
      %vm2077 = vcmp.eq.s32.totalorder %v2075, 1
      %v2078 = vsel %vm2076, %v1959, -inf
      %v2079 = vsel %vm2077, %v1966, -inf
      %v2080 = vsel %vm211, %v2078, -inf
      %v2081 = vsel %vm211, %v2079, -inf
      %v2082 = vmax.f32 %v2080, %v2081
      %v2083 = vrot.slane %v2082, 4
      %v2084 = vmax.f32 %v2082, %v2083
      %v2085 = vrot.slane %v2084, 2
      %v2086 = vmax.f32 %v2084, %v2085
      %v2087 = vrot.slane %v2086, 1
      %v2088 = vmax.f32 %v2086, %v2087
      %p2089 = scmp.le.s32.totalorder %s2065, %s2064
      %p2090 = por %p1967, %p2089
      %s2091 = scalar_select %p2090, 1, 0
      %v2092 = vstv %s2091
      %vm2093 = vcmp.eq.s32.totalorder %v2092, 1
      %v2094 = vsel %vm2093, 0.0, %v2088
      %2095 = vst.msk [vmem:[#allocation2 + $0x2d] sm:$0x1] %vm258, %v2094
      %s2096 = sld [smem:[#allocation7 + %s359]]
      %s2097 = sld [smem:[#allocation8 + %s359]]
      %v2098 = vstv %s2096
      %vm2099 = vcmp.ge.s32.totalorder %v159, %v2098
      %vm2100 = vcmp.ge.s32.totalorder %v160, %v2098
      %v2101 = vstv %s2097
      %vm2102 = vcmp.lt.s32.totalorder %v159, %v2101
      %vm2103 = vcmp.lt.s32.totalorder %v160, %v2101
      %vm2104 = vmand %vm2099, %vm2102
      %vm2105 = vmand %vm2100, %vm2103
      %v2106 = vsel %vm2104, 1, 0
      %v2107 = vsel %vm2105, 1, 0
      %vm2108 = vcmp.eq.s32.totalorder %v2106, 1
      %vm2109 = vcmp.eq.s32.totalorder %v2107, 1
      %v2110 = vsel %vm2108, %v1959, -inf
      %v2111 = vsel %vm2109, %v1966, -inf
      %v2112 = vsel %vm211, %v2110, -inf
      %v2113 = vsel %vm211, %v2111, -inf
      %v2114 = vmax.f32 %v2112, %v2113
      %v2115 = vrot.slane %v2114, 4
      %v2116 = vmax.f32 %v2114, %v2115
      %v2117 = vrot.slane %v2116, 2
      %v2118 = vmax.f32 %v2116, %v2117
      %v2119 = vrot.slane %v2118, 1
      %v2120 = vmax.f32 %v2118, %v2119
      %p2121 = scmp.le.s32.totalorder %s2097, %s2096
      %p2122 = por %p1967, %p2121
      %s2123 = scalar_select %p2122, 1, 0
      %v2124 = vstv %s2123
      %vm2125 = vcmp.eq.s32.totalorder %v2124, 1
      %v2126 = vsel %vm2125, 0.0, %v2120
      %2127 = vst.msk [vmem:[#allocation2 + $0x2e] sm:$0x1] %vm258, %v2126
      %s2128 = sld [smem:[#allocation7 + %s392]]
      %s2129 = sld [smem:[#allocation8 + %s392]]
      %v2130 = vstv %s2128
      %vm2131 = vcmp.ge.s32.totalorder %v159, %v2130
      %vm2132 = vcmp.ge.s32.totalorder %v160, %v2130
      %v2133 = vstv %s2129
      %vm2134 = vcmp.lt.s32.totalorder %v159, %v2133
      %vm2135 = vcmp.lt.s32.totalorder %v160, %v2133
      %vm2136 = vmand %vm2131, %vm2134
      %vm2137 = vmand %vm2132, %vm2135
      %v2138 = vsel %vm2136, 1, 0
      %v2139 = vsel %vm2137, 1, 0
      %vm2140 = vcmp.eq.s32.totalorder %v2138, 1
      %vm2141 = vcmp.eq.s32.totalorder %v2139, 1
      %v2142 = vsel %vm2140, %v1959, -inf
      %v2143 = vsel %vm2141, %v1966, -inf
      %v2144 = vsel %vm211, %v2142, -inf
      %v2145 = vsel %vm211, %v2143, -inf
      %v2146 = vmax.f32 %v2144, %v2145
      %v2147 = vrot.slane %v2146, 4
      %v2148 = vmax.f32 %v2146, %v2147
      %v2149 = vrot.slane %v2148, 2
      %v2150 = vmax.f32 %v2148, %v2149
      %v2151 = vrot.slane %v2150, 1
      %v2152 = vmax.f32 %v2150, %v2151
      %p2153 = scmp.le.s32.totalorder %s2129, %s2128
      %p2154 = por %p1967, %p2153
      %s2155 = scalar_select %p2154, 1, 0
      %v2156 = vstv %s2155
      %vm2157 = vcmp.eq.s32.totalorder %v2156, 1
      %v2158 = vsel %vm2157, 0.0, %v2152
      %2159 = vst.msk [vmem:[#allocation2 + $0x2f] sm:$0x1] %vm258, %v2158
      %s2160 = sld [smem:[#allocation7 + %s425]]
      %s2161 = sld [smem:[#allocation8 + %s425]]
      %v2162 = vstv %s2160
      %vm2163 = vcmp.ge.s32.totalorder %v159, %v2162
      %vm2164 = vcmp.ge.s32.totalorder %v160, %v2162
      %v2165 = vstv %s2161
      %vm2166 = vcmp.lt.s32.totalorder %v159, %v2165
      %vm2167 = vcmp.lt.s32.totalorder %v160, %v2165
      %vm2168 = vmand %vm2163, %vm2166
      %vm2169 = vmand %vm2164, %vm2167
      %v2170 = vsel %vm2168, 1, 0
      %v2171 = vsel %vm2169, 1, 0
      %vm2172 = vcmp.eq.s32.totalorder %v2170, 1
      %vm2173 = vcmp.eq.s32.totalorder %v2171, 1
      %v2174 = vsel %vm2172, %v1959, -inf
      %v2175 = vsel %vm2173, %v1966, -inf
      %v2176 = vsel %vm211, %v2174, -inf
      %v2177 = vsel %vm211, %v2175, -inf
      %v2178 = vmax.f32 %v2176, %v2177
      %v2179 = vrot.slane %v2178, 4
      %v2180 = vmax.f32 %v2178, %v2179
      %v2181 = vrot.slane %v2180, 2
      %v2182 = vmax.f32 %v2180, %v2181
      %v2183 = vrot.slane %v2182, 1
      %v2184 = vmax.f32 %v2182, %v2183
      %p2185 = scmp.le.s32.totalorder %s2161, %s2160
      %p2186 = por %p1967, %p2185
      %s2187 = scalar_select %p2186, 1, 0
      %v2188 = vstv %s2187
      %vm2189 = vcmp.eq.s32.totalorder %v2188, 1
      %v2190 = vsel %vm2189, 0.0, %v2184
      %2191 = vst.msk [vmem:[#allocation2 + $0x30] sm:$0x1] %vm258, %v2190
      %vm2192 = vcmask 63488
      %2193 = vst.msk [vmem:[#allocation2 + $0x31] sm:$0x7f] %vm2192, 0.0
      %v2194 = vld [vmem:[#allocation2] sm:$0xff]
      %v2195 = vld [vmem:[#allocation2 + $0x8] sm:$0xff]
      %v2196 = vld [vmem:[#allocation2 + $0x10] sm:$0xff]
      %v2197 = vld [vmem:[#allocation2 + $0x18] sm:$0xff]
      %v2198 = vld [vmem:[#allocation2 + $0x20] sm:$0xff]
      %v2199 = vld [vmem:[#allocation2 + $0x28] sm:$0xff]
      %v2200 = vld [vmem:[#allocation2 + $0x30] sm:$0xff]
      %v2201 = vpack.c.bf16 %v2194, %v2194
      %v2202 = vpack.c.bf16 %v2195, %v2195
      %v2203 = vpack.c.bf16 %v2196, %v2196
      %v2204 = vpack.c.bf16 %v2197, %v2197
      %v2205 = vpack.c.bf16 %v2198, %v2198
      %v2206 = vpack.c.bf16 %v2199, %v2199
      %v2207 = vpack.c.bf16 %v2200, %v2200
      %vm2208 = vcmask 60416
      %2209 = vst.msk [vmem:[%s156] sm:$0xf] %vm2208, %v2201
      %2210 = vst.msk [vmem:[%s156 + $0x4] sm:$0xf] %vm2208, %v2202
      %2211 = vst.msk [vmem:[%s156 + $0x8] sm:$0xf] %vm2208, %v2203
      %2212 = vst.msk [vmem:[%s156 + $0xc] sm:$0xf] %vm2208, %v2204
      %2213 = vst.msk [vmem:[%s156 + $0x10] sm:$0xf] %vm2208, %v2205
      %2214 = vst.msk [vmem:[%s156 + $0x14] sm:$0xf] %vm2208, %v2206
      %2215 = vst.msk [vmem:[%s156 + $0x18] sm:$0xf] %vm2208, %v2207
      %p2216 = scmp.lt.s32.totalorder %s45, 7
      %s2217 = scalar_select %p2216, %s45, 7
      %s2218 = smul.addr %s2217, 7
      %s2219 = smul.addr %s2218, 4
      %s2220 = scalar_lea.vmem %s6, %s2219
      // Predicated region
      $region25: #{tpu_custom_call.1} parent=23 // pred_check
        %p2221 = pneg %p91
      $region26: #{tpu_custom_call.1} parent=23 // pred_check_branch
        %2223 = sbr.rel (%p2221) target = $region28
      $region27: #{tpu_custom_call.1} parent=23 // pred_region
        _
      $region28: #{tpu_custom_call.1} parent=23 // pred_fallthru
        _
    $region24: #{tpu_custom_call.1} parent=5 // pred_fallthru
      _
    %p2224 = scmp.le.s32.totalorder 2, %s40
    // Predicated region
    $region29: #{tpu_custom_call.1} parent=5 // pred_check
      %p2225 = pneg %p2224
    $region30: #{tpu_custom_call.1} parent=5 // pred_check_branch
      %2227 = sbr.rel (%p2225) target = $region32
    $region31: #{tpu_custom_call.1} parent=5 // pred_region
      %s2228 = ssub.s32 %s40, 2
      // Predicated region
      $region33: #{tpu_custom_call.1} parent=31 // pred_check
        %p2229 = pneg %p97
      $region34: #{tpu_custom_call.1} parent=31 // pred_check_branch
        %2231 = sbr.rel (%p2229) target = $region36
      $region35: #{tpu_custom_call.1} parent=31 // pred_region
        %p2232 = scmp.lt.s32.totalorder %s46, 7
        %s2233 = scalar_select %p2232, %s46, 7
        %s2234 = smul.addr %s2233, 7
        %s2235 = smul.addr %s2234, 4
        %s2236 = scalar_lea.vmem %s6, %s2235
      $region36: #{tpu_custom_call.1} parent=31 // pred_fallthru
        _
    $region32: #{tpu_custom_call.1} parent=5 // pred_fallthru
      _
  $region6: #{tpu_custom_call.1} parent=0 // loop_footer
    %s44 = sadd.s32 1, %s40
  $region7: #{tpu_custom_call.1} parent=0 // loop_footer_branch
    %39 = sbr.rel target = $region3
  $region8: #{tpu_custom_call.1} parent=0 // loop_exit
    _

</llo_original>
